<compile_context>
chip_gen: v7x
topology: tpu7x:2x2x1
jax: 0.10.0
libtpu: 0.0.40
codegen_flags: <defaults>
</compile_context>

<pallas_src>
import numpy as np
import jax
import jax.numpy as jnp
from jax import lax
from jax.experimental import pallas as pl
from jax.experimental.pallas import tpu as pltpu

_TB = 8  # batch tile processed per grid step


# ----------------------------------------------------------------------------
# Fused kernel: conv1 -> pool/relu -> conv2 -> pool/relu -> fc1 -> fc2 -> log_softmax
# ----------------------------------------------------------------------------
def _net_fused_kernel(xl_ref, w1b_ref, b1_ref, w2b_ref, b2_ref,
                      sel2_ref, selfc_ref, wfc1_ref, bfc1_ref,
                      wfc2_ref, bfc2_ref, out_ref):
    # ---- conv1 (1->10, k=5) as 5 banded MXU matmuls per output-row phase ----
    # xl_ref[t] rows are (b*6 + m) -> image row 4*m + t ; 28 lanes (image width).
    lhs1 = [xl_ref[t].astype(jnp.bfloat16) for t in range(8)]      # (TB*6, 28)
    w1b = [w1b_ref[kh] for kh in range(5)]                         # (28, 240) bf16

    # conv1_ph[s][b*6+m, pw*120 + ow*10 + oc] = conv1(x)[b, 4m+s, 2*ow+pw, oc]
    conv1_ph = []
    for s in range(4):
        acc = jnp.dot(lhs1[s], w1b[0], preferred_element_type=jnp.float32)
        for kh in range(1, 5):
            acc = acc + jnp.dot(lhs1[s + kh], w1b[kh],
                                preferred_element_type=jnp.float32)
        conv1_ph.append(acc)                                       # (TB*6, 240)

    # ---- 2x2 max-pool + bias + ReLU (pool phases are just elementwise max) --
    # h1q[qi][b*6+m, col*10 + ic] = relu(maxpool(conv1)+b1)[b, 2m+qi, col, ic]
    b1v = b1_ref[...]
    h1q = []
    for qi in range(2):
        a, c = conv1_ph[2 * qi], conv1_ph[2 * qi + 1]
        m = jnp.maximum(jnp.maximum(a[:, :120], a[:, 120:]),
                        jnp.maximum(c[:, :120], c[:, 120:]))
        h1q.append(jnp.maximum(m + b1v, 0.0))                      # (TB*6, 120)

    # ---- conv2 (10->20, k=5) as banded matmuls over the (col, ic) lane axis -
    # 4-row windows of h1 are gathered with tiny 0/1 selection matmuls.
    lhs2 = []
    for t in range(6):                                             # t = py + kh
        g = jnp.dot(sel2_ref[t // 2], h1q[t % 2],
                    preferred_element_type=jnp.float32)            # (TB*4, 120)
        lhs2.append(g.astype(jnp.bfloat16))
    w2b = [w2b_ref[kh] for kh in range(5)]                         # (120, 160) bf16

    # conv2_ph[py][b*4+oh, px*80 + ow*20 + oc] = conv2(h1)[b, 2oh+py, 2ow+px, oc]
    conv2_ph = []
    for py in range(2):
        acc = jnp.dot(lhs2[py], w2b[0], preferred_element_type=jnp.float32)
        for kh in range(1, 5):
            acc = acc + jnp.dot(lhs2[py + kh], w2b[kh],
                                preferred_element_type=jnp.float32)
        conv2_ph.append(acc)                                       # (TB*4, 160)

    # TODO(synk): Dropout2d between conv2 and the pool is identity at inference.

    # ---- 2x2 max-pool + bias + ReLU -> (TB*4, 80) NHWC-packed (b, oh) rows --
    p0, p1 = conv2_ph
    pm = jnp.maximum(jnp.maximum(p0[:, :80], p0[:, 80:]),
                     jnp.maximum(p1[:, :80], p1[:, 80:]))
    pm = jnp.maximum(pm + b2_ref[...], 0.0)                        # (TB*4, 80)

    # ---- flatten to (TB, 320) in (h, w, c) order via selection matmuls ------
    rows = [jnp.dot(selfc_ref[oh], pm, preferred_element_type=jnp.float32)
            for oh in range(4)]                                    # 4 x (TB, 80)
    xflat = jnp.concatenate(rows, axis=-1)                         # (TB, 320)

    # ---- fc1 + ReLU (wfc1 pre-permuted to the NHWC packing) -----------------
    z1 = jnp.dot(xflat.astype(jnp.bfloat16), wfc1_ref[...],
                 preferred_element_type=jnp.float32) + bfc1_ref[...]
    z1 = jnp.maximum(z1, 0.0)                                      # (TB, 50)
    # TODO(synk): F.dropout(training=False) is identity at inference.

    # ---- fc2 + log_softmax --------------------------------------------------
    z2 = jnp.dot(z1.astype(jnp.bfloat16), wfc2_ref[...],
                 preferred_element_type=jnp.float32) + bfc2_ref[...]  # (TB, 10)
    mx = jnp.max(z2, axis=-1, keepdims=True)
    shifted = z2 - mx
    lse = jnp.log(jnp.sum(jnp.exp(shifted), axis=-1, keepdims=True))
    out_ref[...] = (shifted - lse).astype(out_ref.dtype)


# ----------------------------------------------------------------------------
# One-time parameter repacking (band matrices, permuted fc1, selection matrices)
# ----------------------------------------------------------------------------
def prepare_params(params):
    w1, b1 = params["w1"], params["b1"]
    w2, b2 = params["w2"], params["b2"]
    wfc1, bfc1 = params["wfc1"], params["bfc1"]
    wfc2, bfc2 = params["wfc2"], params["bfc2"]

    kw = np.arange(5)[None, None, None, :]
    ph = np.arange(2)[None, :, None, None]

    # conv1 band: w1b[kh, w_in, pw*120 + ow*10 + oc] = w1[oc, 0, kh, w_in - 2*ow - pw]
    win = np.arange(28)[:, None, None, None]
    ow = np.arange(12)[None, None, :, None]
    s1 = (win == 2 * ow + ph + kw).astype(np.float32)              # (28, 2, 12, 5)
    w1b = jnp.einsum("xpok,chk->hxpoc", s1, w1[:, 0]).reshape(5, 28, 240)

    # conv2 band: w2b[kh, w_in*10 + ic, px*80 + ow*20 + oc] = w2[oc, ic, kh, w_in - 2*ow - px]
    win2 = np.arange(12)[:, None, None, None]
    ow2 = np.arange(4)[None, None, :, None]
    s2 = (win2 == 2 * ow2 + ph + kw).astype(np.float32)            # (12, 2, 4, 5)
    w2b = jnp.einsum("wpok,cihk->hwipoc", s2, w2).reshape(5, 120, 160)

    # 0/1 selection matrices (gather conv2 row windows / per-(b,oh) rows).
    sel2 = np.zeros((3, _TB * 4, _TB * 6), np.float32)
    selfc = np.zeros((4, _TB, _TB * 4), np.float32)
    for b in range(_TB):
        for oh in range(4):
            for shift in range(3):
                sel2[shift, b * 4 + oh, b * 6 + oh + shift] = 1.0
            selfc[oh, b, b * 4 + oh] = 1.0

    # fc1 inputs permuted from PyTorch NCHW flatten to the kernel's (h, w, c) packing.
    wfc1p = jnp.transpose(wfc1.reshape(50, 20, 4, 4), (2, 3, 1, 0)).reshape(320, 50)

    return {
        "w1b": w1b.astype(jnp.bfloat16),
        "b1": jnp.tile(b1, 12).reshape(1, 120).astype(jnp.float32),
        "w2b": w2b.astype(jnp.bfloat16),
        "b2": jnp.tile(b2, 4).reshape(1, 80).astype(jnp.float32),
        "sel2": jnp.asarray(sel2),
        "selfc": jnp.asarray(selfc),
        "wfc1": wfc1p.astype(jnp.bfloat16),
        "bfc1": bfc1.reshape(1, 50).astype(jnp.float32),
        "wfc2": wfc2.T.astype(jnp.bfloat16),
        "bfc2": bfc2.reshape(1, 10).astype(jnp.float32),
    }


# ----------------------------------------------------------------------------
# Forward wrapper (single fused pallas_call, grid over batch tiles)
# ----------------------------------------------------------------------------
def net_forward(x_nchw, prepped):
    n = x_nchw.shape[0]
    x = x_nchw[:, 0].astype(jnp.float32)                           # (n, 28, 28)
    pad = (-n) % _TB
    if pad:
        x = jnp.pad(x, ((0, pad), (0, 0), (0, 0)))
    npad = x.shape[0]

    # Row slabs for the banded conv1 matmuls: xl[t, b*6 + m, :] = x[b, 4*m + t, :].
    xl = jnp.stack([x[:, t:t + 21:4, :] for t in range(8)], axis=0)
    xl = xl.reshape(8, npad * 6, 28)

    out = pl.pallas_call(
        _net_fused_kernel,
        out_shape=jax.ShapeDtypeStruct((npad, 10), jnp.float32),
        grid=(npad // _TB,),
        in_specs=[
            pl.BlockSpec((8, _TB * 6, 28), lambda i: (0, i, 0)),        # xl
            pl.BlockSpec((5, 28, 240), lambda i: (0, 0, 0)),            # w1 band
            pl.BlockSpec((1, 120), lambda i: (0, 0)),                   # b1 (tiled)
            pl.BlockSpec((5, 120, 160), lambda i: (0, 0, 0)),           # w2 band
            pl.BlockSpec((1, 80), lambda i: (0, 0)),                    # b2 (tiled)
            pl.BlockSpec((3, _TB * 4, _TB * 6), lambda i: (0, 0, 0)),   # sel2
            pl.BlockSpec((4, _TB, _TB * 4), lambda i: (0, 0, 0)),       # selfc
            pl.BlockSpec((320, 50), lambda i: (0, 0)),                  # wfc1 (perm)
            pl.BlockSpec((1, 50), lambda i: (0, 0)),                    # bfc1
            pl.BlockSpec((50, 10), lambda i: (0, 0)),                   # wfc2^T
            pl.BlockSpec((1, 10), lambda i: (0, 0)),                    # bfc2
        ],
        out_specs=pl.BlockSpec((_TB, 10), lambda i: (i, 0)),
        compiler_params=pltpu.CompilerParams(
            dimension_semantics=("parallel",)),
    )(xl, prepped["w1b"], prepped["b1"], prepped["w2b"], prepped["b2"],
      prepped["sel2"], prepped["selfc"], prepped["wfc1"], prepped["bfc1"],
      prepped["wfc2"], prepped["bfc2"])
    return out[:n]


# ----------------------------------------------------------------------------
# Pure-JAX reference (for correctness checking only)
# ----------------------------------------------------------------------------
def net_forward_ref(x_nchw, params):
    x = x_nchw.astype(jnp.float32)
    dn = ("NCHW", "OIHW", "NCHW")
    y = lax.conv_general_dilated(x, params["w1"], (1, 1), "VALID",
                                 dimension_numbers=dn,
                                 precision=lax.Precision.HIGHEST)
    y = y + params["b1"][None, :, None, None]
    y = lax.reduce_window(y, -jnp.inf, lax.max, (1, 1, 2, 2), (1, 1, 2, 2), "VALID")
    y = jnp.maximum(y, 0.0)
    y = lax.conv_general_dilated(y, params["w2"], (1, 1), "VALID",
                                 dimension_numbers=dn,
                                 precision=lax.Precision.HIGHEST)
    y = y + params["b2"][None, :, None, None]
    y = lax.reduce_window(y, -jnp.inf, lax.max, (1, 1, 2, 2), (1, 1, 2, 2), "VALID")
    y = jnp.maximum(y, 0.0)
    y = y.reshape(y.shape[0], 320)
    y = jnp.maximum(y @ params["wfc1"].T + params["bfc1"], 0.0)
    y = y @ params["wfc2"].T + params["bfc2"]
    return jax.nn.log_softmax(y, axis=-1)


def init_params():
    key = jax.random.PRNGKey(42)
    k1, k2, k3, k4 = jax.random.split(key, 4)
    return {
        "w1": 0.1 * jax.random.normal(k1, (10, 1, 5, 5), jnp.float32),
        "b1": jnp.linspace(-0.05, 0.05, 10, dtype=jnp.float32),
        "w2": 0.05 * jax.random.normal(k2, (20, 10, 5, 5), jnp.float32),
        "b2": jnp.linspace(-0.05, 0.05, 20, dtype=jnp.float32),
        "wfc1": 0.05 * jax.random.normal(k3, (50, 320), jnp.float32),
        "bfc1": jnp.linspace(-0.05, 0.05, 50, dtype=jnp.float32),
        "wfc2": 0.1 * jax.random.normal(k4, (10, 50), jnp.float32),
        "bfc2": jnp.linspace(-0.05, 0.05, 10, dtype=jnp.float32),
    }


if __name__ == "__main__":
    params = init_params()
    prepped = prepare_params(params)

    x = jax.random.normal(jax.random.PRNGKey(0), (2, 1, 28, 28), jnp.float32)

    fwd = jax.jit(net_forward)
    out = jax.block_until_ready(fwd(x, prepped))

    assert out.shape == (2, 10)
    # log_softmax rows must sum to ~1 in probability space
    assert bool(jnp.all(jnp.abs(jnp.sum(jnp.exp(out), axis=1) - 1.0) < 1e-4))
    # match a plain-JAX reference (bf16 MXU operands -> loose tolerance)
    ref = net_forward_ref(x, params)
    assert float(jnp.max(jnp.abs(out - ref))) < 5e-2
    print("KERNEL_OK")
</pallas_src>

<mosaic_0001>
module attributes {stable_mosaic.version = 11 : i64} {
  func.func @_net_fused_kernel(%arg0: i32, %arg1: memref<8x48x28xf32, #tpu.memory_space<vmem>>, %arg2: memref<5x28x240xbf16, #tpu.memory_space<vmem>>, %arg3: memref<1x120xf32, #tpu.memory_space<vmem>>, %arg4: memref<5x120x160xbf16, #tpu.memory_space<vmem>>, %arg5: memref<1x80xf32, #tpu.memory_space<vmem>>, %arg6: memref<3x32x48xf32, #tpu.memory_space<vmem>>, %arg7: memref<4x8x32xf32, #tpu.memory_space<vmem>>, %arg8: memref<320x50xbf16, #tpu.memory_space<vmem>>, %arg9: memref<1x50xf32, #tpu.memory_space<vmem>>, %arg10: memref<50x10xbf16, #tpu.memory_space<vmem>>, %arg11: memref<1x10xf32, #tpu.memory_space<vmem>>, %arg12: memref<8x10xf32, #tpu.memory_space<vmem>>) attributes {dimension_semantics = [#tpu.dimension_semantics<parallel>], iteration_bounds = array<i64: 1>, scalar_prefetch = 0 : i64, scratch_operands = 0 : i64, tpu.core_type = #tpu.core_type<tc>, window_params = [{transform_indices = @transform_0, window_bounds = array<i64: 8, 48, 28>}, {pipeline_mode = #tpu.pipeline_mode<synchronous>, transform_indices = @transform_1, window_bounds = array<i64: 5, 28, 240>}, {pipeline_mode = #tpu.pipeline_mode<synchronous>, transform_indices = @transform_2, window_bounds = array<i64: 1, 120>}, {pipeline_mode = #tpu.pipeline_mode<synchronous>, transform_indices = @transform_3, window_bounds = array<i64: 5, 120, 160>}, {pipeline_mode = #tpu.pipeline_mode<synchronous>, transform_indices = @transform_4, window_bounds = array<i64: 1, 80>}, {pipeline_mode = #tpu.pipeline_mode<synchronous>, transform_indices = @transform_5, window_bounds = array<i64: 3, 32, 48>}, {pipeline_mode = #tpu.pipeline_mode<synchronous>, transform_indices = @transform_6, window_bounds = array<i64: 4, 8, 32>}, {pipeline_mode = #tpu.pipeline_mode<synchronous>, transform_indices = @transform_7, window_bounds = array<i64: 320, 50>}, {pipeline_mode = #tpu.pipeline_mode<synchronous>, transform_indices = @transform_8, window_bounds = array<i64: 1, 50>}, {pipeline_mode = #tpu.pipeline_mode<synchronous>, transform_indices = @transform_9, window_bounds = array<i64: 50, 10>}, {pipeline_mode = #tpu.pipeline_mode<synchronous>, transform_indices = @transform_10, window_bounds = array<i64: 1, 10>}, {transform_indices = @transform_11, window_bounds = array<i64: 8, 10>}]} {
    %c0 = arith.constant 0 : index
    %c0_0 = arith.constant 0 : index
    %c0_1 = arith.constant 0 : index
    %0 = vector.load %arg1[%c0, %c0_0, %c0_1] : memref<8x48x28xf32, #tpu.memory_space<vmem>>, vector<1x48x28xf32>
    %1 = vector.shape_cast %0 : vector<1x48x28xf32> to vector<48x28xf32>
    %2 = arith.truncf %1 : vector<48x28xf32> to vector<48x28xbf16>
    %c1 = arith.constant 1 : index
    %c0_2 = arith.constant 0 : index
    %c0_3 = arith.constant 0 : index
    %3 = vector.load %arg1[%c1, %c0_2, %c0_3] : memref<8x48x28xf32, #tpu.memory_space<vmem>>, vector<1x48x28xf32>
    %4 = vector.shape_cast %3 : vector<1x48x28xf32> to vector<48x28xf32>
    %5 = arith.truncf %4 : vector<48x28xf32> to vector<48x28xbf16>
    %c2 = arith.constant 2 : index
    %c0_4 = arith.constant 0 : index
    %c0_5 = arith.constant 0 : index
    %6 = vector.load %arg1[%c2, %c0_4, %c0_5] : memref<8x48x28xf32, #tpu.memory_space<vmem>>, vector<1x48x28xf32>
    %7 = vector.shape_cast %6 : vector<1x48x28xf32> to vector<48x28xf32>
    %8 = arith.truncf %7 : vector<48x28xf32> to vector<48x28xbf16>
    %c3 = arith.constant 3 : index
    %c0_6 = arith.constant 0 : index
    %c0_7 = arith.constant 0 : index
    %9 = vector.load %arg1[%c3, %c0_6, %c0_7] : memref<8x48x28xf32, #tpu.memory_space<vmem>>, vector<1x48x28xf32>
    %10 = vector.shape_cast %9 : vector<1x48x28xf32> to vector<48x28xf32>
    %11 = arith.truncf %10 : vector<48x28xf32> to vector<48x28xbf16>
    %c4 = arith.constant 4 : index
    %c0_8 = arith.constant 0 : index
    %c0_9 = arith.constant 0 : index
    %12 = vector.load %arg1[%c4, %c0_8, %c0_9] : memref<8x48x28xf32, #tpu.memory_space<vmem>>, vector<1x48x28xf32>
    %13 = vector.shape_cast %12 : vector<1x48x28xf32> to vector<48x28xf32>
    %14 = arith.truncf %13 : vector<48x28xf32> to vector<48x28xbf16>
    %c5 = arith.constant 5 : index
    %c0_10 = arith.constant 0 : index
    %c0_11 = arith.constant 0 : index
    %15 = vector.load %arg1[%c5, %c0_10, %c0_11] : memref<8x48x28xf32, #tpu.memory_space<vmem>>, vector<1x48x28xf32>
    %16 = vector.shape_cast %15 : vector<1x48x28xf32> to vector<48x28xf32>
    %17 = arith.truncf %16 : vector<48x28xf32> to vector<48x28xbf16>
    %c6 = arith.constant 6 : index
    %c0_12 = arith.constant 0 : index
    %c0_13 = arith.constant 0 : index
    %18 = vector.load %arg1[%c6, %c0_12, %c0_13] : memref<8x48x28xf32, #tpu.memory_space<vmem>>, vector<1x48x28xf32>
    %19 = vector.shape_cast %18 : vector<1x48x28xf32> to vector<48x28xf32>
    %20 = arith.truncf %19 : vector<48x28xf32> to vector<48x28xbf16>
    %c7 = arith.constant 7 : index
    %c0_14 = arith.constant 0 : index
    %c0_15 = arith.constant 0 : index
    %21 = vector.load %arg1[%c7, %c0_14, %c0_15] : memref<8x48x28xf32, #tpu.memory_space<vmem>>, vector<1x48x28xf32>
    %22 = vector.shape_cast %21 : vector<1x48x28xf32> to vector<48x28xf32>
    %23 = arith.truncf %22 : vector<48x28xf32> to vector<48x28xbf16>
    %c0_16 = arith.constant 0 : index
    %c0_17 = arith.constant 0 : index
    %c0_18 = arith.constant 0 : index
    %24 = vector.load %arg2[%c0_16, %c0_17, %c0_18] : memref<5x28x240xbf16, #tpu.memory_space<vmem>>, vector<1x28x240xbf16>
    %25 = vector.shape_cast %24 : vector<1x28x240xbf16> to vector<28x240xbf16>
    %c1_19 = arith.constant 1 : index
    %c0_20 = arith.constant 0 : index
    %c0_21 = arith.constant 0 : index
    %26 = vector.load %arg2[%c1_19, %c0_20, %c0_21] : memref<5x28x240xbf16, #tpu.memory_space<vmem>>, vector<1x28x240xbf16>
    %27 = vector.shape_cast %26 : vector<1x28x240xbf16> to vector<28x240xbf16>
    %c2_22 = arith.constant 2 : index
    %c0_23 = arith.constant 0 : index
    %c0_24 = arith.constant 0 : index
    %28 = vector.load %arg2[%c2_22, %c0_23, %c0_24] : memref<5x28x240xbf16, #tpu.memory_space<vmem>>, vector<1x28x240xbf16>
    %29 = vector.shape_cast %28 : vector<1x28x240xbf16> to vector<28x240xbf16>
    %c3_25 = arith.constant 3 : index
    %c0_26 = arith.constant 0 : index
    %c0_27 = arith.constant 0 : index
    %30 = vector.load %arg2[%c3_25, %c0_26, %c0_27] : memref<5x28x240xbf16, #tpu.memory_space<vmem>>, vector<1x28x240xbf16>
    %31 = vector.shape_cast %30 : vector<1x28x240xbf16> to vector<28x240xbf16>
    %c4_28 = arith.constant 4 : index
    %c0_29 = arith.constant 0 : index
    %c0_30 = arith.constant 0 : index
    %32 = vector.load %arg2[%c4_28, %c0_29, %c0_30] : memref<5x28x240xbf16, #tpu.memory_space<vmem>>, vector<1x28x240xbf16>
    %33 = vector.shape_cast %32 : vector<1x28x240xbf16> to vector<28x240xbf16>
    %cst = arith.constant dense<0.000000e+00> : vector<48x240xf32>
    %34 = tpu.matmul %2, %25, %cst {dimension_numbers = #tpu.dot_dimension_numbers<[1], [0], [0], [1], [0, 0, 1, 1], [], []>} : vector<48x28xbf16>, vector<28x240xbf16>, vector<48x240xf32> -> vector<48x240xf32>
    %cst_31 = arith.constant dense<0.000000e+00> : vector<48x240xf32>
    %35 = tpu.matmul %5, %27, %cst_31 {dimension_numbers = #tpu.dot_dimension_numbers<[1], [0], [0], [1], [0, 0, 1, 1], [], []>} : vector<48x28xbf16>, vector<28x240xbf16>, vector<48x240xf32> -> vector<48x240xf32>
    %36 = arith.addf %34, %35 : vector<48x240xf32>
    %cst_32 = arith.constant dense<0.000000e+00> : vector<48x240xf32>
    %37 = tpu.matmul %8, %29, %cst_32 {dimension_numbers = #tpu.dot_dimension_numbers<[1], [0], [0], [1], [0, 0, 1, 1], [], []>} : vector<48x28xbf16>, vector<28x240xbf16>, vector<48x240xf32> -> vector<48x240xf32>
    %38 = arith.addf %36, %37 : vector<48x240xf32>
    %cst_33 = arith.constant dense<0.000000e+00> : vector<48x240xf32>
    %39 = tpu.matmul %11, %31, %cst_33 {dimension_numbers = #tpu.dot_dimension_numbers<[1], [0], [0], [1], [0, 0, 1, 1], [], []>} : vector<48x28xbf16>, vector<28x240xbf16>, vector<48x240xf32> -> vector<48x240xf32>
    %40 = arith.addf %38, %39 : vector<48x240xf32>
    %cst_34 = arith.constant dense<0.000000e+00> : vector<48x240xf32>
    %41 = tpu.matmul %14, %33, %cst_34 {dimension_numbers = #tpu.dot_dimension_numbers<[1], [0], [0], [1], [0, 0, 1, 1], [], []>} : vector<48x28xbf16>, vector<28x240xbf16>, vector<48x240xf32> -> vector<48x240xf32>
    %42 = arith.addf %40, %41 : vector<48x240xf32>
    %cst_35 = arith.constant dense<0.000000e+00> : vector<48x240xf32>
    %43 = tpu.matmul %5, %25, %cst_35 {dimension_numbers = #tpu.dot_dimension_numbers<[1], [0], [0], [1], [0, 0, 1, 1], [], []>} : vector<48x28xbf16>, vector<28x240xbf16>, vector<48x240xf32> -> vector<48x240xf32>
    %cst_36 = arith.constant dense<0.000000e+00> : vector<48x240xf32>
    %44 = tpu.matmul %8, %27, %cst_36 {dimension_numbers = #tpu.dot_dimension_numbers<[1], [0], [0], [1], [0, 0, 1, 1], [], []>} : vector<48x28xbf16>, vector<28x240xbf16>, vector<48x240xf32> -> vector<48x240xf32>
    %45 = arith.addf %43, %44 : vector<48x240xf32>
    %cst_37 = arith.constant dense<0.000000e+00> : vector<48x240xf32>
    %46 = tpu.matmul %11, %29, %cst_37 {dimension_numbers = #tpu.dot_dimension_numbers<[1], [0], [0], [1], [0, 0, 1, 1], [], []>} : vector<48x28xbf16>, vector<28x240xbf16>, vector<48x240xf32> -> vector<48x240xf32>
    %47 = arith.addf %45, %46 : vector<48x240xf32>
    %cst_38 = arith.constant dense<0.000000e+00> : vector<48x240xf32>
    %48 = tpu.matmul %14, %31, %cst_38 {dimension_numbers = #tpu.dot_dimension_numbers<[1], [0], [0], [1], [0, 0, 1, 1], [], []>} : vector<48x28xbf16>, vector<28x240xbf16>, vector<48x240xf32> -> vector<48x240xf32>
    %49 = arith.addf %47, %48 : vector<48x240xf32>
    %cst_39 = arith.constant dense<0.000000e+00> : vector<48x240xf32>
    %50 = tpu.matmul %17, %33, %cst_39 {dimension_numbers = #tpu.dot_dimension_numbers<[1], [0], [0], [1], [0, 0, 1, 1], [], []>} : vector<48x28xbf16>, vector<28x240xbf16>, vector<48x240xf32> -> vector<48x240xf32>
    %51 = arith.addf %49, %50 : vector<48x240xf32>
    %cst_40 = arith.constant dense<0.000000e+00> : vector<48x240xf32>
    %52 = tpu.matmul %8, %25, %cst_40 {dimension_numbers = #tpu.dot_dimension_numbers<[1], [0], [0], [1], [0, 0, 1, 1], [], []>} : vector<48x28xbf16>, vector<28x240xbf16>, vector<48x240xf32> -> vector<48x240xf32>
    %cst_41 = arith.constant dense<0.000000e+00> : vector<48x240xf32>
    %53 = tpu.matmul %11, %27, %cst_41 {dimension_numbers = #tpu.dot_dimension_numbers<[1], [0], [0], [1], [0, 0, 1, 1], [], []>} : vector<48x28xbf16>, vector<28x240xbf16>, vector<48x240xf32> -> vector<48x240xf32>
    %54 = arith.addf %52, %53 : vector<48x240xf32>
    %cst_42 = arith.constant dense<0.000000e+00> : vector<48x240xf32>
    %55 = tpu.matmul %14, %29, %cst_42 {dimension_numbers = #tpu.dot_dimension_numbers<[1], [0], [0], [1], [0, 0, 1, 1], [], []>} : vector<48x28xbf16>, vector<28x240xbf16>, vector<48x240xf32> -> vector<48x240xf32>
    %56 = arith.addf %54, %55 : vector<48x240xf32>
    %cst_43 = arith.constant dense<0.000000e+00> : vector<48x240xf32>
    %57 = tpu.matmul %17, %31, %cst_43 {dimension_numbers = #tpu.dot_dimension_numbers<[1], [0], [0], [1], [0, 0, 1, 1], [], []>} : vector<48x28xbf16>, vector<28x240xbf16>, vector<48x240xf32> -> vector<48x240xf32>
    %58 = arith.addf %56, %57 : vector<48x240xf32>
    %cst_44 = arith.constant dense<0.000000e+00> : vector<48x240xf32>
    %59 = tpu.matmul %20, %33, %cst_44 {dimension_numbers = #tpu.dot_dimension_numbers<[1], [0], [0], [1], [0, 0, 1, 1], [], []>} : vector<48x28xbf16>, vector<28x240xbf16>, vector<48x240xf32> -> vector<48x240xf32>
    %60 = arith.addf %58, %59 : vector<48x240xf32>
    %cst_45 = arith.constant dense<0.000000e+00> : vector<48x240xf32>
    %61 = tpu.matmul %11, %25, %cst_45 {dimension_numbers = #tpu.dot_dimension_numbers<[1], [0], [0], [1], [0, 0, 1, 1], [], []>} : vector<48x28xbf16>, vector<28x240xbf16>, vector<48x240xf32> -> vector<48x240xf32>
    %cst_46 = arith.constant dense<0.000000e+00> : vector<48x240xf32>
    %62 = tpu.matmul %14, %27, %cst_46 {dimension_numbers = #tpu.dot_dimension_numbers<[1], [0], [0], [1], [0, 0, 1, 1], [], []>} : vector<48x28xbf16>, vector<28x240xbf16>, vector<48x240xf32> -> vector<48x240xf32>
    %63 = arith.addf %61, %62 : vector<48x240xf32>
    %cst_47 = arith.constant dense<0.000000e+00> : vector<48x240xf32>
    %64 = tpu.matmul %17, %29, %cst_47 {dimension_numbers = #tpu.dot_dimension_numbers<[1], [0], [0], [1], [0, 0, 1, 1], [], []>} : vector<48x28xbf16>, vector<28x240xbf16>, vector<48x240xf32> -> vector<48x240xf32>
    %65 = arith.addf %63, %64 : vector<48x240xf32>
    %cst_48 = arith.constant dense<0.000000e+00> : vector<48x240xf32>
    %66 = tpu.matmul %20, %31, %cst_48 {dimension_numbers = #tpu.dot_dimension_numbers<[1], [0], [0], [1], [0, 0, 1, 1], [], []>} : vector<48x28xbf16>, vector<28x240xbf16>, vector<48x240xf32> -> vector<48x240xf32>
    %67 = arith.addf %65, %66 : vector<48x240xf32>
    %cst_49 = arith.constant dense<0.000000e+00> : vector<48x240xf32>
    %68 = tpu.matmul %23, %33, %cst_49 {dimension_numbers = #tpu.dot_dimension_numbers<[1], [0], [0], [1], [0, 0, 1, 1], [], []>} : vector<48x28xbf16>, vector<28x240xbf16>, vector<48x240xf32> -> vector<48x240xf32>
    %69 = arith.addf %67, %68 : vector<48x240xf32>
    %c0_50 = arith.constant 0 : index
    %c0_51 = arith.constant 0 : index
    %70 = vector.load %arg3[%c0_50, %c0_51] : memref<1x120xf32, #tpu.memory_space<vmem>>, vector<1x120xf32>
    %71 = vector.extract_strided_slice %42 {offsets = [0, 0], sizes = [48, 120], strides = [1, 1]} : vector<48x240xf32> to vector<48x120xf32>
    %72 = vector.extract_strided_slice %42 {offsets = [0, 120], sizes = [48, 120], strides = [1, 1]} : vector<48x240xf32> to vector<48x120xf32>
    %73 = arith.maximumf %71, %72 : vector<48x120xf32>
    %74 = vector.extract_strided_slice %51 {offsets = [0, 0], sizes = [48, 120], strides = [1, 1]} : vector<48x240xf32> to vector<48x120xf32>
    %75 = vector.extract_strided_slice %51 {offsets = [0, 120], sizes = [48, 120], strides = [1, 1]} : vector<48x240xf32> to vector<48x120xf32>
    %76 = arith.maximumf %74, %75 : vector<48x120xf32>
    %77 = arith.maximumf %73, %76 : vector<48x120xf32>
    %78 = vector.broadcast %70 : vector<1x120xf32> to vector<48x120xf32>
    %79 = arith.addf %77, %78 : vector<48x120xf32>
    %cst_52 = arith.constant 0.000000e+00 : f32
    %80 = vector.broadcast %cst_52 : f32 to vector<48x120xf32>
    %81 = arith.maximumf %79, %80 : vector<48x120xf32>
    %82 = vector.extract_strided_slice %60 {offsets = [0, 0], sizes = [48, 120], strides = [1, 1]} : vector<48x240xf32> to vector<48x120xf32>
    %83 = vector.extract_strided_slice %60 {offsets = [0, 120], sizes = [48, 120], strides = [1, 1]} : vector<48x240xf32> to vector<48x120xf32>
    %84 = arith.maximumf %82, %83 : vector<48x120xf32>
    %85 = vector.extract_strided_slice %69 {offsets = [0, 0], sizes = [48, 120], strides = [1, 1]} : vector<48x240xf32> to vector<48x120xf32>
    %86 = vector.extract_strided_slice %69 {offsets = [0, 120], sizes = [48, 120], strides = [1, 1]} : vector<48x240xf32> to vector<48x120xf32>
    %87 = arith.maximumf %85, %86 : vector<48x120xf32>
    %88 = arith.maximumf %84, %87 : vector<48x120xf32>
    %89 = vector.broadcast %70 : vector<1x120xf32> to vector<48x120xf32>
    %90 = arith.addf %88, %89 : vector<48x120xf32>
    %cst_53 = arith.constant 0.000000e+00 : f32
    %91 = vector.broadcast %cst_53 : f32 to vector<48x120xf32>
    %92 = arith.maximumf %90, %91 : vector<48x120xf32>
    %c0_54 = arith.constant 0 : index
    %c0_55 = arith.constant 0 : index
    %c0_56 = arith.constant 0 : index
    %93 = vector.load %arg6[%c0_54, %c0_55, %c0_56] : memref<3x32x48xf32, #tpu.memory_space<vmem>>, vector<1x32x48xf32>
    %94 = vector.shape_cast %93 : vector<1x32x48xf32> to vector<32x48xf32>
    %cst_57 = arith.constant dense<0.000000e+00> : vector<32x120xf32>
    %95 = tpu.matmul %94, %81, %cst_57 {dimension_numbers = #tpu.dot_dimension_numbers<[1], [0], [0], [1], [0, 0, 1, 1], [], []>} : vector<32x48xf32>, vector<48x120xf32>, vector<32x120xf32> -> vector<32x120xf32>
    %96 = arith.truncf %95 : vector<32x120xf32> to vector<32x120xbf16>
    %c0_58 = arith.constant 0 : index
    %c0_59 = arith.constant 0 : index
    %c0_60 = arith.constant 0 : index
    %97 = vector.load %arg6[%c0_58, %c0_59, %c0_60] : memref<3x32x48xf32, #tpu.memory_space<vmem>>, vector<1x32x48xf32>
    %98 = vector.shape_cast %97 : vector<1x32x48xf32> to vector<32x48xf32>
    %cst_61 = arith.constant dense<0.000000e+00> : vector<32x120xf32>
    %99 = tpu.matmul %98, %92, %cst_61 {dimension_numbers = #tpu.dot_dimension_numbers<[1], [0], [0], [1], [0, 0, 1, 1], [], []>} : vector<32x48xf32>, vector<48x120xf32>, vector<32x120xf32> -> vector<32x120xf32>
    %100 = arith.truncf %99 : vector<32x120xf32> to vector<32x120xbf16>
    %c1_62 = arith.constant 1 : index
    %c0_63 = arith.constant 0 : index
    %c0_64 = arith.constant 0 : index
    %101 = vector.load %arg6[%c1_62, %c0_63, %c0_64] : memref<3x32x48xf32, #tpu.memory_space<vmem>>, vector<1x32x48xf32>
    %102 = vector.shape_cast %101 : vector<1x32x48xf32> to vector<32x48xf32>
    %cst_65 = arith.constant dense<0.000000e+00> : vector<32x120xf32>
    %103 = tpu.matmul %102, %81, %cst_65 {dimension_numbers = #tpu.dot_dimension_numbers<[1], [0], [0], [1], [0, 0, 1, 1], [], []>} : vector<32x48xf32>, vector<48x120xf32>, vector<32x120xf32> -> vector<32x120xf32>
    %104 = arith.truncf %103 : vector<32x120xf32> to vector<32x120xbf16>
    %c1_66 = arith.constant 1 : index
    %c0_67 = arith.constant 0 : index
    %c0_68 = arith.constant 0 : index
    %105 = vector.load %arg6[%c1_66, %c0_67, %c0_68] : memref<3x32x48xf32, #tpu.memory_space<vmem>>, vector<1x32x48xf32>
    %106 = vector.shape_cast %105 : vector<1x32x48xf32> to vector<32x48xf32>
    %cst_69 = arith.constant dense<0.000000e+00> : vector<32x120xf32>
    %107 = tpu.matmul %106, %92, %cst_69 {dimension_numbers = #tpu.dot_dimension_numbers<[1], [0], [0], [1], [0, 0, 1, 1], [], []>} : vector<32x48xf32>, vector<48x120xf32>, vector<32x120xf32> -> vector<32x120xf32>
    %108 = arith.truncf %107 : vector<32x120xf32> to vector<32x120xbf16>
    %c2_70 = arith.constant 2 : index
    %c0_71 = arith.constant 0 : index
    %c0_72 = arith.constant 0 : index
    %109 = vector.load %arg6[%c2_70, %c0_71, %c0_72] : memref<3x32x48xf32, #tpu.memory_space<vmem>>, vector<1x32x48xf32>
    %110 = vector.shape_cast %109 : vector<1x32x48xf32> to vector<32x48xf32>
    %cst_73 = arith.constant dense<0.000000e+00> : vector<32x120xf32>
    %111 = tpu.matmul %110, %81, %cst_73 {dimension_numbers = #tpu.dot_dimension_numbers<[1], [0], [0], [1], [0, 0, 1, 1], [], []>} : vector<32x48xf32>, vector<48x120xf32>, vector<32x120xf32> -> vector<32x120xf32>
    %112 = arith.truncf %111 : vector<32x120xf32> to vector<32x120xbf16>
    %c2_74 = arith.constant 2 : index
    %c0_75 = arith.constant 0 : index
    %c0_76 = arith.constant 0 : index
    %113 = vector.load %arg6[%c2_74, %c0_75, %c0_76] : memref<3x32x48xf32, #tpu.memory_space<vmem>>, vector<1x32x48xf32>
    %114 = vector.shape_cast %113 : vector<1x32x48xf32> to vector<32x48xf32>
    %cst_77 = arith.constant dense<0.000000e+00> : vector<32x120xf32>
    %115 = tpu.matmul %114, %92, %cst_77 {dimension_numbers = #tpu.dot_dimension_numbers<[1], [0], [0], [1], [0, 0, 1, 1], [], []>} : vector<32x48xf32>, vector<48x120xf32>, vector<32x120xf32> -> vector<32x120xf32>
    %116 = arith.truncf %115 : vector<32x120xf32> to vector<32x120xbf16>
    %c0_78 = arith.constant 0 : index
    %c0_79 = arith.constant 0 : index
    %c0_80 = arith.constant 0 : index
    %117 = vector.load %arg4[%c0_78, %c0_79, %c0_80] : memref<5x120x160xbf16, #tpu.memory_space<vmem>>, vector<1x120x160xbf16>
    %118 = vector.shape_cast %117 : vector<1x120x160xbf16> to vector<120x160xbf16>
    %c1_81 = arith.constant 1 : index
    %c0_82 = arith.constant 0 : index
    %c0_83 = arith.constant 0 : index
    %119 = vector.load %arg4[%c1_81, %c0_82, %c0_83] : memref<5x120x160xbf16, #tpu.memory_space<vmem>>, vector<1x120x160xbf16>
    %120 = vector.shape_cast %119 : vector<1x120x160xbf16> to vector<120x160xbf16>
    %c2_84 = arith.constant 2 : index
    %c0_85 = arith.constant 0 : index
    %c0_86 = arith.constant 0 : index
    %121 = vector.load %arg4[%c2_84, %c0_85, %c0_86] : memref<5x120x160xbf16, #tpu.memory_space<vmem>>, vector<1x120x160xbf16>
    %122 = vector.shape_cast %121 : vector<1x120x160xbf16> to vector<120x160xbf16>
    %c3_87 = arith.constant 3 : index
    %c0_88 = arith.constant 0 : index
    %c0_89 = arith.constant 0 : index
    %123 = vector.load %arg4[%c3_87, %c0_88, %c0_89] : memref<5x120x160xbf16, #tpu.memory_space<vmem>>, vector<1x120x160xbf16>
    %124 = vector.shape_cast %123 : vector<1x120x160xbf16> to vector<120x160xbf16>
    %c4_90 = arith.constant 4 : index
    %c0_91 = arith.constant 0 : index
    %c0_92 = arith.constant 0 : index
    %125 = vector.load %arg4[%c4_90, %c0_91, %c0_92] : memref<5x120x160xbf16, #tpu.memory_space<vmem>>, vector<1x120x160xbf16>
    %126 = vector.shape_cast %125 : vector<1x120x160xbf16> to vector<120x160xbf16>
    %cst_93 = arith.constant dense<0.000000e+00> : vector<32x160xf32>
    %127 = tpu.matmul %96, %118, %cst_93 {dimension_numbers = #tpu.dot_dimension_numbers<[1], [0], [0], [1], [0, 0, 1, 1], [], []>} : vector<32x120xbf16>, vector<120x160xbf16>, vector<32x160xf32> -> vector<32x160xf32>
    %cst_94 = arith.constant dense<0.000000e+00> : vector<32x160xf32>
    %128 = tpu.matmul %100, %120, %cst_94 {dimension_numbers = #tpu.dot_dimension_numbers<[1], [0], [0], [1], [0, 0, 1, 1], [], []>} : vector<32x120xbf16>, vector<120x160xbf16>, vector<32x160xf32> -> vector<32x160xf32>
    %129 = arith.addf %127, %128 : vector<32x160xf32>
    %cst_95 = arith.constant dense<0.000000e+00> : vector<32x160xf32>
    %130 = tpu.matmul %104, %122, %cst_95 {dimension_numbers = #tpu.dot_dimension_numbers<[1], [0], [0], [1], [0, 0, 1, 1], [], []>} : vector<32x120xbf16>, vector<120x160xbf16>, vector<32x160xf32> -> vector<32x160xf32>
    %131 = arith.addf %129, %130 : vector<32x160xf32>
    %cst_96 = arith.constant dense<0.000000e+00> : vector<32x160xf32>
    %132 = tpu.matmul %108, %124, %cst_96 {dimension_numbers = #tpu.dot_dimension_numbers<[1], [0], [0], [1], [0, 0, 1, 1], [], []>} : vector<32x120xbf16>, vector<120x160xbf16>, vector<32x160xf32> -> vector<32x160xf32>
    %133 = arith.addf %131, %132 : vector<32x160xf32>
    %cst_97 = arith.constant dense<0.000000e+00> : vector<32x160xf32>
    %134 = tpu.matmul %112, %126, %cst_97 {dimension_numbers = #tpu.dot_dimension_numbers<[1], [0], [0], [1], [0, 0, 1, 1], [], []>} : vector<32x120xbf16>, vector<120x160xbf16>, vector<32x160xf32> -> vector<32x160xf32>
    %135 = arith.addf %133, %134 : vector<32x160xf32>
    %cst_98 = arith.constant dense<0.000000e+00> : vector<32x160xf32>
    %136 = tpu.matmul %100, %118, %cst_98 {dimension_numbers = #tpu.dot_dimension_numbers<[1], [0], [0], [1], [0, 0, 1, 1], [], []>} : vector<32x120xbf16>, vector<120x160xbf16>, vector<32x160xf32> -> vector<32x160xf32>
    %cst_99 = arith.constant dense<0.000000e+00> : vector<32x160xf32>
    %137 = tpu.matmul %104, %120, %cst_99 {dimension_numbers = #tpu.dot_dimension_numbers<[1], [0], [0], [1], [0, 0, 1, 1], [], []>} : vector<32x120xbf16>, vector<120x160xbf16>, vector<32x160xf32> -> vector<32x160xf32>
    %138 = arith.addf %136, %137 : vector<32x160xf32>
    %cst_100 = arith.constant dense<0.000000e+00> : vector<32x160xf32>
    %139 = tpu.matmul %108, %122, %cst_100 {dimension_numbers = #tpu.dot_dimension_numbers<[1], [0], [0], [1], [0, 0, 1, 1], [], []>} : vector<32x120xbf16>, vector<120x160xbf16>, vector<32x160xf32> -> vector<32x160xf32>
    %140 = arith.addf %138, %139 : vector<32x160xf32>
    %cst_101 = arith.constant dense<0.000000e+00> : vector<32x160xf32>
    %141 = tpu.matmul %112, %124, %cst_101 {dimension_numbers = #tpu.dot_dimension_numbers<[1], [0], [0], [1], [0, 0, 1, 1], [], []>} : vector<32x120xbf16>, vector<120x160xbf16>, vector<32x160xf32> -> vector<32x160xf32>
    %142 = arith.addf %140, %141 : vector<32x160xf32>
    %cst_102 = arith.constant dense<0.000000e+00> : vector<32x160xf32>
    %143 = tpu.matmul %116, %126, %cst_102 {dimension_numbers = #tpu.dot_dimension_numbers<[1], [0], [0], [1], [0, 0, 1, 1], [], []>} : vector<32x120xbf16>, vector<120x160xbf16>, vector<32x160xf32> -> vector<32x160xf32>
    %144 = arith.addf %142, %143 : vector<32x160xf32>
    %145 = vector.extract_strided_slice %135 {offsets = [0, 0], sizes = [32, 80], strides = [1, 1]} : vector<32x160xf32> to vector<32x80xf32>
    %146 = vector.extract_strided_slice %135 {offsets = [0, 80], sizes = [32, 80], strides = [1, 1]} : vector<32x160xf32> to vector<32x80xf32>
    %147 = arith.maximumf %145, %146 : vector<32x80xf32>
    %148 = vector.extract_strided_slice %144 {offsets = [0, 0], sizes = [32, 80], strides = [1, 1]} : vector<32x160xf32> to vector<32x80xf32>
    %149 = vector.extract_strided_slice %144 {offsets = [0, 80], sizes = [32, 80], strides = [1, 1]} : vector<32x160xf32> to vector<32x80xf32>
    %150 = arith.maximumf %148, %149 : vector<32x80xf32>
    %151 = arith.maximumf %147, %150 : vector<32x80xf32>
    %c0_103 = arith.constant 0 : index
    %c0_104 = arith.constant 0 : index
    %152 = vector.load %arg5[%c0_103, %c0_104] : memref<1x80xf32, #tpu.memory_space<vmem>>, vector<1x80xf32>
    %153 = vector.broadcast %152 : vector<1x80xf32> to vector<32x80xf32>
    %154 = arith.addf %151, %153 : vector<32x80xf32>
    %cst_105 = arith.constant 0.000000e+00 : f32
    %155 = vector.broadcast %cst_105 : f32 to vector<32x80xf32>
    %156 = arith.maximumf %154, %155 : vector<32x80xf32>
    %c0_106 = arith.constant 0 : index
    %c0_107 = arith.constant 0 : index
    %c0_108 = arith.constant 0 : index
    %157 = vector.load %arg7[%c0_106, %c0_107, %c0_108] : memref<4x8x32xf32, #tpu.memory_space<vmem>>, vector<1x8x32xf32>
    %158 = vector.shape_cast %157 : vector<1x8x32xf32> to vector<8x32xf32>
    %cst_109 = arith.constant dense<0.000000e+00> : vector<8x80xf32>
    %159 = tpu.matmul %158, %156, %cst_109 {dimension_numbers = #tpu.dot_dimension_numbers<[1], [0], [0], [1], [0, 0, 1, 1], [], []>} : vector<8x32xf32>, vector<32x80xf32>, vector<8x80xf32> -> vector<8x80xf32>
    %c1_110 = arith.constant 1 : index
    %c0_111 = arith.constant 0 : index
    %c0_112 = arith.constant 0 : index
    %160 = vector.load %arg7[%c1_110, %c0_111, %c0_112] : memref<4x8x32xf32, #tpu.memory_space<vmem>>, vector<1x8x32xf32>
    %161 = vector.shape_cast %160 : vector<1x8x32xf32> to vector<8x32xf32>
    %cst_113 = arith.constant dense<0.000000e+00> : vector<8x80xf32>
    %162 = tpu.matmul %161, %156, %cst_113 {dimension_numbers = #tpu.dot_dimension_numbers<[1], [0], [0], [1], [0, 0, 1, 1], [], []>} : vector<8x32xf32>, vector<32x80xf32>, vector<8x80xf32> -> vector<8x80xf32>
    %c2_114 = arith.constant 2 : index
    %c0_115 = arith.constant 0 : index
    %c0_116 = arith.constant 0 : index
    %163 = vector.load %arg7[%c2_114, %c0_115, %c0_116] : memref<4x8x32xf32, #tpu.memory_space<vmem>>, vector<1x8x32xf32>
    %164 = vector.shape_cast %163 : vector<1x8x32xf32> to vector<8x32xf32>
    %cst_117 = arith.constant dense<0.000000e+00> : vector<8x80xf32>
    %165 = tpu.matmul %164, %156, %cst_117 {dimension_numbers = #tpu.dot_dimension_numbers<[1], [0], [0], [1], [0, 0, 1, 1], [], []>} : vector<8x32xf32>, vector<32x80xf32>, vector<8x80xf32> -> vector<8x80xf32>
    %c3_118 = arith.constant 3 : index
    %c0_119 = arith.constant 0 : index
    %c0_120 = arith.constant 0 : index
    %166 = vector.load %arg7[%c3_118, %c0_119, %c0_120] : memref<4x8x32xf32, #tpu.memory_space<vmem>>, vector<1x8x32xf32>
    %167 = vector.shape_cast %166 : vector<1x8x32xf32> to vector<8x32xf32>
    %cst_121 = arith.constant dense<0.000000e+00> : vector<8x80xf32>
    %168 = tpu.matmul %167, %156, %cst_121 {dimension_numbers = #tpu.dot_dimension_numbers<[1], [0], [0], [1], [0, 0, 1, 1], [], []>} : vector<8x32xf32>, vector<32x80xf32>, vector<8x80xf32> -> vector<8x80xf32>
    %169 = tpu.concatenate %159, %162, %165, %168 in 1 : vector<8x80xf32>, vector<8x80xf32>, vector<8x80xf32>, vector<8x80xf32> -> vector<8x320xf32>
    %170 = arith.truncf %169 : vector<8x320xf32> to vector<8x320xbf16>
    %c0_122 = arith.constant 0 : index
    %c0_123 = arith.constant 0 : index
    %171 = vector.load %arg8[%c0_122, %c0_123] : memref<320x50xbf16, #tpu.memory_space<vmem>>, vector<320x50xbf16>
    %cst_124 = arith.constant dense<0.000000e+00> : vector<8x50xf32>
    %172 = tpu.matmul %170, %171, %cst_124 {dimension_numbers = #tpu.dot_dimension_numbers<[1], [0], [0], [1], [0, 0, 1, 1], [], []>} : vector<8x320xbf16>, vector<320x50xbf16>, vector<8x50xf32> -> vector<8x50xf32>
    %c0_125 = arith.constant 0 : index
    %c0_126 = arith.constant 0 : index
    %173 = vector.load %arg9[%c0_125, %c0_126] : memref<1x50xf32, #tpu.memory_space<vmem>>, vector<1x50xf32>
    %174 = vector.broadcast %173 : vector<1x50xf32> to vector<8x50xf32>
    %175 = arith.addf %172, %174 : vector<8x50xf32>
    %cst_127 = arith.constant 0.000000e+00 : f32
    %176 = vector.broadcast %cst_127 : f32 to vector<8x50xf32>
    %177 = arith.maximumf %175, %176 : vector<8x50xf32>
    %178 = arith.truncf %177 : vector<8x50xf32> to vector<8x50xbf16>
    %c0_128 = arith.constant 0 : index
    %c0_129 = arith.constant 0 : index
    %179 = vector.load %arg10[%c0_128, %c0_129] : memref<50x10xbf16, #tpu.memory_space<vmem>>, vector<50x10xbf16>
    %cst_130 = arith.constant dense<0.000000e+00> : vector<8x10xf32>
    %180 = tpu.matmul %178, %179, %cst_130 {dimension_numbers = #tpu.dot_dimension_numbers<[1], [0], [0], [1], [0, 0, 1, 1], [], []>} : vector<8x50xbf16>, vector<50x10xbf16>, vector<8x10xf32> -> vector<8x10xf32>
    %c0_131 = arith.constant 0 : index
    %c0_132 = arith.constant 0 : index
    %181 = vector.load %arg11[%c0_131, %c0_132] : memref<1x10xf32, #tpu.memory_space<vmem>>, vector<1x10xf32>
    %182 = vector.broadcast %181 : vector<1x10xf32> to vector<8x10xf32>
    %183 = arith.addf %180, %182 : vector<8x10xf32>
    %cst_133 = arith.constant dense<0xFF800000> : vector<8xf32>
    %184 = vector.multi_reduction <maximumf>, %183, %cst_133 [1] : vector<8x10xf32> to vector<8xf32>
    %185 = vector.shape_cast %184 : vector<8xf32> to vector<8x1xf32>
    %186 = vector.broadcast %185 : vector<8x1xf32> to vector<8x10xf32>
    %187 = arith.subf %183, %186 : vector<8x10xf32>
    %188 = math.exp %187 : vector<8x10xf32>
    %cst_134 = arith.constant dense<0.000000e+00> : vector<8xf32>
    %189 = vector.multi_reduction <add>, %188, %cst_134 [1] : vector<8x10xf32> to vector<8xf32>
    %190 = vector.shape_cast %189 : vector<8xf32> to vector<8x1xf32>
    %191 = math.log %190 : vector<8x1xf32>
    %192 = vector.broadcast %191 : vector<8x1xf32> to vector<8x10xf32>
    %193 = arith.subf %187, %192 : vector<8x10xf32>
    %c0_135 = arith.constant 0 : index
    %c0_136 = arith.constant 0 : index
    %194 = vector.load %arg12[%c0_135, %c0_136] : memref<8x10xf32, #tpu.memory_space<vmem>>, vector<8x10xf32>
    tpu.vector_store %arg12[%c0_135, %c0_136], %193 {strides = array<i32>} : memref<8x10xf32, #tpu.memory_space<vmem>>, vector<8x10xf32>,
    return
  }
  func.func @transform_0(%arg0: i32) -> (i32, i32, i32) {
    %c0_i32 = arith.constant 0 : i32
    %c0_i32_0 = arith.constant 0 : i32
    %c0_i32_1 = arith.constant 0 : i32
    return %c0_i32, %arg0, %c0_i32_0 : i32, i32, i32
  }
  func.func @transform_1(%arg0: i32) -> (i32, i32, i32) {
    %c0_i32 = arith.constant 0 : i32
    %c0_i32_0 = arith.constant 0 : i32
    %c0_i32_1 = arith.constant 0 : i32
    %c0_i32_2 = arith.constant 0 : i32
    return %c0_i32, %c0_i32_0, %c0_i32_1 : i32, i32, i32
  }
  func.func @transform_2(%arg0: i32) -> (i32, i32) {
    %c0_i32 = arith.constant 0 : i32
    %c0_i32_0 = arith.constant 0 : i32
    %c0_i32_1 = arith.constant 0 : i32
    return %c0_i32, %c0_i32_0 : i32, i32
  }
  func.func @transform_3(%arg0: i32) -> (i32, i32, i32) {
    %c0_i32 = arith.constant 0 : i32
    %c0_i32_0 = arith.constant 0 : i32
    %c0_i32_1 = arith.constant 0 : i32
    %c0_i32_2 = arith.constant 0 : i32
    return %c0_i32, %c0_i32_0, %c0_i32_1 : i32, i32, i32
  }
  func.func @transform_4(%arg0: i32) -> (i32, i32) {
    %c0_i32 = arith.constant 0 : i32
    %c0_i32_0 = arith.constant 0 : i32
    %c0_i32_1 = arith.constant 0 : i32
    return %c0_i32, %c0_i32_0 : i32, i32
  }
  func.func @transform_5(%arg0: i32) -> (i32, i32, i32) {
    %c0_i32 = arith.constant 0 : i32
    %c0_i32_0 = arith.constant 0 : i32
    %c0_i32_1 = arith.constant 0 : i32
    %c0_i32_2 = arith.constant 0 : i32
    return %c0_i32, %c0_i32_0, %c0_i32_1 : i32, i32, i32
  }
  func.func @transform_6(%arg0: i32) -> (i32, i32, i32) {
    %c0_i32 = arith.constant 0 : i32
    %c0_i32_0 = arith.constant 0 : i32
    %c0_i32_1 = arith.constant 0 : i32
    %c0_i32_2 = arith.constant 0 : i32
    return %c0_i32, %c0_i32_0, %c0_i32_1 : i32, i32, i32
  }
  func.func @transform_7(%arg0: i32) -> (i32, i32) {
    %c0_i32 = arith.constant 0 : i32
    %c0_i32_0 = arith.constant 0 : i32
    %c0_i32_1 = arith.constant 0 : i32
    return %c0_i32, %c0_i32_0 : i32, i32
  }
  func.func @transform_8(%arg0: i32) -> (i32, i32) {
    %c0_i32 = arith.constant 0 : i32
    %c0_i32_0 = arith.constant 0 : i32
    %c0_i32_1 = arith.constant 0 : i32
    return %c0_i32, %c0_i32_0 : i32, i32
  }
  func.func @transform_9(%arg0: i32) -> (i32, i32) {
    %c0_i32 = arith.constant 0 : i32
    %c0_i32_0 = arith.constant 0 : i32
    %c0_i32_1 = arith.constant 0 : i32
    return %c0_i32, %c0_i32_0 : i32, i32
  }
  func.func @transform_10(%arg0: i32) -> (i32, i32) {
    %c0_i32 = arith.constant 0 : i32
    %c0_i32_0 = arith.constant 0 : i32
    %c0_i32_1 = arith.constant 0 : i32
    return %c0_i32, %c0_i32_0 : i32, i32
  }
  func.func @transform_11(%arg0: i32) -> (i32, i32) {
    %c0_i32 = arith.constant 0 : i32
    %c0_i32_0 = arith.constant 0 : i32
    return %arg0, %c0_i32 : i32, i32
  }
}

</mosaic_0001>

<llo_original>
// kernel: net_forward.1
$region0: #{net_forward.1}
  #allocation0 [shape = 'u32[]', space=smem, size = 0x4, offset = 0x4, fixed_abs, tag = 'smem constant byte address 0x4 - core index']
  #allocation1 [shape = 'u32[144,128]{1,0:T(1,128)}', space=vmem, size = 0x12000, scoped, tag = 'internal scratch']
  %s0 = inlined_call_operand.vmem [shape: f32[8,48,28], index: 0, kind: input, shape index: {}]
  %s1 = inlined_call_operand.vmem [shape: bf16[5,28,240], index: 1, kind: input, shape index: {}]
  %s2 = inlined_call_operand.vmem [shape: f32[1,120], index: 2, kind: input, shape index: {}]
  %s3 = inlined_call_operand.vmem [shape: bf16[5,120,160], index: 3, kind: input, shape index: {}]
  %s4 = inlined_call_operand.vmem [shape: f32[1,80], index: 4, kind: input, shape index: {}]
  %s5 = inlined_call_operand.vmem [shape: f32[3,32,48], index: 5, kind: input, shape index: {}]
  %s6 = inlined_call_operand.vmem [shape: f32[4,8,32], index: 6, kind: input, shape index: {}]
  %s7 = inlined_call_operand.vmem [shape: bf16[320,50], index: 7, kind: input, shape index: {}]
  %s8 = inlined_call_operand.vmem [shape: f32[1,50], index: 8, kind: input, shape index: {}]
  %s9 = inlined_call_operand.vmem [shape: bf16[50,10], index: 9, kind: input, shape index: {}]
  %s10 = inlined_call_operand.vmem [shape: f32[1,10], index: 10, kind: input, shape index: {}]
  %s11 = inlined_call_operand.vmem [shape: f32[8,10], index: 11, kind: output, shape index: {}]
  %s12 = sld [smem:[#allocation0]]
  $region54: #{net_forward.1} parent=0
    _
  %s14 = ssub.s32 1, %s12
  %s15 = scalar_select 0, %s14, %s12
  // Predicated region
  $region2: #{net_forward.1} parent=0 // pred_check
    _
  $region3: #{net_forward.1} parent=0 // pred_check_branch
    %17 = sbr.rel (0) target = $region5
  $region4: #{net_forward.1} parent=0 // pred_region
    _
  $region5: #{net_forward.1} parent=0 // pred_fallthru
    _
  // Predicated region
  $region6: #{net_forward.1} parent=0 // pred_check
    _
  $region7: #{net_forward.1} parent=0 // pred_check_branch
    %19 = sbr.rel (0) target = $region9
  $region8: #{net_forward.1} parent=0 // pred_region
    _
  $region9: #{net_forward.1} parent=0 // pred_fallthru
    _
  // Predicated region
  $region10: #{net_forward.1} parent=0 // pred_check
    _
  $region11: #{net_forward.1} parent=0 // pred_check_branch
    %21 = sbr.rel (0) target = $region13
  $region12: #{net_forward.1} parent=0 // pred_region
    _
  $region13: #{net_forward.1} parent=0 // pred_fallthru
    _
  // Predicated region
  $region14: #{net_forward.1} parent=0 // pred_check
    _
  $region15: #{net_forward.1} parent=0 // pred_check_branch
    %23 = sbr.rel (0) target = $region17
  $region16: #{net_forward.1} parent=0 // pred_region
    _
  $region17: #{net_forward.1} parent=0 // pred_fallthru
    _
  // Predicated region
  $region18: #{net_forward.1} parent=0 // pred_check
    _
  $region19: #{net_forward.1} parent=0 // pred_check_branch
    %25 = sbr.rel (0) target = $region21
  $region20: #{net_forward.1} parent=0 // pred_region
    _
  $region21: #{net_forward.1} parent=0 // pred_fallthru
    _
  // Predicated region
  $region22: #{net_forward.1} parent=0 // pred_check
    _
  $region23: #{net_forward.1} parent=0 // pred_check_branch
    %27 = sbr.rel (0) target = $region25
  $region24: #{net_forward.1} parent=0 // pred_region
    _
  $region25: #{net_forward.1} parent=0 // pred_fallthru
    _
  // Predicated region
  $region26: #{net_forward.1} parent=0 // pred_check
    _
  $region27: #{net_forward.1} parent=0 // pred_check_branch
    %29 = sbr.rel (0) target = $region29
  $region28: #{net_forward.1} parent=0 // pred_region
    _
  $region29: #{net_forward.1} parent=0 // pred_fallthru
    _
  // Predicated region
  $region30: #{net_forward.1} parent=0 // pred_check
    _
  $region31: #{net_forward.1} parent=0 // pred_check_branch
    %31 = sbr.rel (0) target = $region33
  $region32: #{net_forward.1} parent=0 // pred_region
    _
  $region33: #{net_forward.1} parent=0 // pred_fallthru
    _
  // Predicated region
  $region34: #{net_forward.1} parent=0 // pred_check
    _
  $region35: #{net_forward.1} parent=0 // pred_check_branch
    %33 = sbr.rel (0) target = $region37
  $region36: #{net_forward.1} parent=0 // pred_region
    _
  $region37: #{net_forward.1} parent=0 // pred_fallthru
    _
  // Predicated region
  $region38: #{net_forward.1} parent=0 // pred_check
    _
  $region39: #{net_forward.1} parent=0 // pred_check_branch
    %35 = sbr.rel (0) target = $region41
  $region40: #{net_forward.1} parent=0 // pred_region
    _
  $region41: #{net_forward.1} parent=0 // pred_fallthru
    _
  // Predicated region
  $region42: #{net_forward.1} parent=0 // pred_check
    _
  $region43: #{net_forward.1} parent=0 // pred_check_branch
    %37 = sbr.rel (0) target = $region45
  $region44: #{net_forward.1} parent=0 // pred_region
    _
  $region45: #{net_forward.1} parent=0 // pred_fallthru
    _
  %v39 = vld [vmem:[%s0] sm:$0xff]
  %v40 = vld [vmem:[%s0 + $0x8] sm:$0xff]
  %v41 = vld [vmem:[%s0 + $0x10] sm:$0xff]
  %v42 = vld [vmem:[%s0 + $0x18] sm:$0xff]
  %v43 = vld [vmem:[%s0 + $0x20] sm:$0xff]
  %v44 = vld [vmem:[%s0 + $0x28] sm:$0xff]
  %v45 = vpack.c.bf16 %v40, %v39
  %v46 = vpack.c.bf16 %v42, %v41
  %v47 = vpack.c.bf16 %v44, %v43
  %s48 = scalar_lea.vmem %s0, 48
  %v49 = vld [vmem:[%s48] sm:$0xff]
  %v50 = vld [vmem:[%s48 + $0x8] sm:$0xff]
  %v51 = vld [vmem:[%s48 + $0x10] sm:$0xff]
  %v52 = vld [vmem:[%s48 + $0x18] sm:$0xff]
  %v53 = vld [vmem:[%s48 + $0x20] sm:$0xff]
  %v54 = vld [vmem:[%s48 + $0x28] sm:$0xff]
  %v55 = vpack.c.bf16 %v50, %v49
  %v56 = vpack.c.bf16 %v52, %v51
  %v57 = vpack.c.bf16 %v54, %v53
  %s58 = scalar_lea.vmem %s0, 96
  %v59 = vld [vmem:[%s58] sm:$0xff]
  %v60 = vld [vmem:[%s58 + $0x8] sm:$0xff]
  %v61 = vld [vmem:[%s58 + $0x10] sm:$0xff]
  %v62 = vld [vmem:[%s58 + $0x18] sm:$0xff]
  %v63 = vld [vmem:[%s58 + $0x20] sm:$0xff]
  %v64 = vld [vmem:[%s58 + $0x28] sm:$0xff]
  %v65 = vpack.c.bf16 %v60, %v59
  %v66 = vpack.c.bf16 %v62, %v61
  %v67 = vpack.c.bf16 %v64, %v63
  %s68 = scalar_lea.vmem %s0, 144
  %v69 = vld [vmem:[%s68] sm:$0xff]
  %v70 = vld [vmem:[%s68 + $0x8] sm:$0xff]
  %v71 = vld [vmem:[%s68 + $0x10] sm:$0xff]
  %v72 = vld [vmem:[%s68 + $0x18] sm:$0xff]
  %v73 = vld [vmem:[%s68 + $0x20] sm:$0xff]
  %v74 = vld [vmem:[%s68 + $0x28] sm:$0xff]
  %v75 = vpack.c.bf16 %v70, %v69
  %v76 = vpack.c.bf16 %v72, %v71
  %v77 = vpack.c.bf16 %v74, %v73
  %s78 = scalar_lea.vmem %s0, 192
  %v79 = vld [vmem:[%s78] sm:$0xff]
  %v80 = vld [vmem:[%s78 + $0x8] sm:$0xff]
  %v81 = vld [vmem:[%s78 + $0x10] sm:$0xff]
  %v82 = vld [vmem:[%s78 + $0x18] sm:$0xff]
  %v83 = vld [vmem:[%s78 + $0x20] sm:$0xff]
  %v84 = vld [vmem:[%s78 + $0x28] sm:$0xff]
  %v85 = vpack.c.bf16 %v80, %v79
  %v86 = vpack.c.bf16 %v82, %v81
  %v87 = vpack.c.bf16 %v84, %v83
  %s88 = scalar_lea.vmem %s0, 240
  %v89 = vld [vmem:[%s88] sm:$0xff]
  %v90 = vld [vmem:[%s88 + $0x8] sm:$0xff]
  %v91 = vld [vmem:[%s88 + $0x10] sm:$0xff]
  %v92 = vld [vmem:[%s88 + $0x18] sm:$0xff]
  %v93 = vld [vmem:[%s88 + $0x20] sm:$0xff]
  %v94 = vld [vmem:[%s88 + $0x28] sm:$0xff]
  %v95 = vpack.c.bf16 %v90, %v89
  %v96 = vpack.c.bf16 %v92, %v91
  %v97 = vpack.c.bf16 %v94, %v93
  %s98 = scalar_lea.vmem %s0, 288
  %v99 = vld [vmem:[%s98] sm:$0xff]
  %v100 = vld [vmem:[%s98 + $0x8] sm:$0xff]
  %v101 = vld [vmem:[%s98 + $0x10] sm:$0xff]
  %v102 = vld [vmem:[%s98 + $0x18] sm:$0xff]
  %v103 = vld [vmem:[%s98 + $0x20] sm:$0xff]
  %v104 = vld [vmem:[%s98 + $0x28] sm:$0xff]
  %v105 = vpack.c.bf16 %v100, %v99
  %v106 = vpack.c.bf16 %v102, %v101
  %v107 = vpack.c.bf16 %v104, %v103
  %s108 = scalar_lea.vmem %s0, 336
  %v109 = vld [vmem:[%s108] sm:$0xff]
  %v110 = vld [vmem:[%s108 + $0x8] sm:$0xff]
  %v111 = vld [vmem:[%s108 + $0x10] sm:$0xff]
  %v112 = vld [vmem:[%s108 + $0x18] sm:$0xff]
  %v113 = vld [vmem:[%s108 + $0x20] sm:$0xff]
  %v114 = vld [vmem:[%s108 + $0x28] sm:$0xff]
  %v115 = vpack.c.bf16 %v110, %v109
  %v116 = vpack.c.bf16 %v112, %v111
  %v117 = vpack.c.bf16 %v114, %v113
  %v118 = vld [vmem:[%s1] sm:$0xff]
  %v119 = vld [vmem:[%s1 + $0x8] sm:$0xff]
  %v120 = vld [vmem:[%s1 + $0x10] sm:$0xff]
  %v121 = vld [vmem:[%s1 + $0x18] sm:$0x33]
  %s122 = scalar_lea.vmem %s1, 32
  %v123 = vld [vmem:[%s122] sm:$0xff]
  %v124 = vld [vmem:[%s122 + $0x8] sm:$0xff]
  %v125 = vld [vmem:[%s122 + $0x10] sm:$0xff]
  %v126 = vld [vmem:[%s122 + $0x18] sm:$0x33]
  %s127 = scalar_lea.vmem %s1, 64
  %v128 = vld [vmem:[%s127] sm:$0xff]
  %v129 = vld [vmem:[%s127 + $0x8] sm:$0xff]
  %v130 = vld [vmem:[%s127 + $0x10] sm:$0xff]
  %v131 = vld [vmem:[%s127 + $0x18] sm:$0x33]
  %s132 = scalar_lea.vmem %s1, 96
  %v133 = vld [vmem:[%s132] sm:$0xff]
  %v134 = vld [vmem:[%s132 + $0x8] sm:$0xff]
  %v135 = vld [vmem:[%s132 + $0x10] sm:$0xff]
  %v136 = vld [vmem:[%s132 + $0x18] sm:$0x33]
  %s137 = scalar_lea.vmem %s1, 128
  %v138 = vld [vmem:[%s137] sm:$0xff]
  %v139 = vld [vmem:[%s137 + $0x8] sm:$0xff]
  %v140 = vld [vmem:[%s137 + $0x10] sm:$0xff]
  %v141 = vld [vmem:[%s137 + $0x18] sm:$0x33]
  %v146 = vunpack.c.l.b16 %v123
  %v147 = vunpack.c.h.b16 %v123
  %v148 = vunpack.c.l.b16 %v124
  %v149 = vunpack.c.h.b16 %v124
  %v150 = vunpack.c.l.b16 %v125
  %v151 = vunpack.c.h.b16 %v125
  %v152 = vunpack.c.l.b16 %v126
  %v153 = vunpack.c.h.b16 %v126
  %v154 = vpack.c.b16 %v148, %v146
  %v155 = vpack.c.b16 %v149, %v147
  %v156 = vpack.c.b16 %v152, %v150
  %v157 = vpack.c.b16 %v153, %v151
  %vm160 = vcmask 228352
  %v162 = vsel %vm160, %v55, 0
  %v165 = vsel %vm160, %v56, 0
  %v168 = vsel %vm160, %v57, 0
  %vm170 = vcmask 1045504
  %v172 = vsel %vm170, %v156, 0
  %v175 = vsel %vm170, %v157, 0
  %177 = vmatprep.subr.bf16.mxu0 %v155
  %178 = vmatpush1.bf16.msra.mxu0 %v154
  %179 = vmatprep.subr.bf16.mxu0 %v175
  %180 = vmatpush1.bf16.msra.mxu0 %v172
  %181 = vmatprep.subr.bf16.mxu0 0
  %182 = vmatpush1.bf16.msra.mxu0 0
  %183 = vmatprep.subr.bf16.mxu0 0
  %184 = vmatpush1.bf16.msra.mxu0 0
  %185 = vmatprep.subr.bf16.mxu0 0
  %186 = vmatpush1.bf16.msra.mxu0 0
  %187 = vmatprep.subr.bf16.mxu0 0
  %188 = vmatpush1.bf16.msra.mxu0 0
  %189 = vmatprep.subr.bf16.mxu0 0
  %190 = vmatpush1.bf16.msra.mxu0 0
  %191 = vmatprep.subr.bf16.mxu0 0
  %192 = vmatpush1.bf16.msra.mxu0 0
  %193 = vmatprep.subr.bf16.mxu0 0
  %194 = vmatpush1.bf16.msra.mxu0 0
  %195 = vmatprep.subr.bf16.mxu0 0
  %196 = vmatpush1.bf16.msra.mxu0 0
  %197 = vmatprep.subr.bf16.mxu0 0
  %198 = vmatpush1.bf16.msra.mxu0 0
  %199 = vmatprep.subr.bf16.mxu0 0
  %200 = vmatpush1.bf16.msra.mxu0 0
  %201 = vmatprep.subr.bf16.mxu0 0
  %202 = vmatpush1.bf16.msra.mxu0 0
  %203 = vmatprep.subr.bf16.mxu0 0
  %204 = vmatpush1.bf16.msra.mxu0 0
  %205 = vmatprep.subr.bf16.mxu0 0
  %206 = vmatpush1.bf16.msra.mxu0 0
  %207 = vmatprep.subr.bf16.mxu0 0
  %208 = vmatpush1.bf16.msra.mxu0 0
  %209 = vmatprep.mubr.bf16.mxu0 0
  %210 = vmatmul.mubr.bf16.gmra.mrb[0].mxu0 %v162
  %v211 = vpop.f32.mrb[0].mxu0
  %v212 = vadd.f32 0.0, %v211
  %v213 = vpop.f32.mrb[0].mxu0
  %v214 = vadd.f32 0.0, %v213
  %v215 = vpop.f32.mrb[0].mxu0
  %v216 = vadd.f32 0.0, %v215
  %v217 = vpop.f32.mrb[0].mxu0
  %v218 = vadd.f32 0.0, %v217
  %219 = vmatprep.mubr.bf16.mxu0 0
  %220 = vmatmul.mubr.bf16.gmra.mrb[0].mxu0 %v165
  %v221 = vpop.f32.mrb[0].mxu0
  %v222 = vadd.f32 0.0, %v221
  %v223 = vpop.f32.mrb[0].mxu0
  %v224 = vadd.f32 0.0, %v223
  %v225 = vpop.f32.mrb[0].mxu0
  %v226 = vadd.f32 0.0, %v225
  %v227 = vpop.f32.mrb[0].mxu0
  %v228 = vadd.f32 0.0, %v227
  %229 = vmatprep.mubr.bf16.mxu0 0
  %230 = vmatmul.mubr.bf16.gmra.mrb[0].mxu0 %v168
  %v231 = vpop.f32.mrb[0].mxu0
  %v232 = vadd.f32 0.0, %v231
  %v233 = vpop.f32.mrb[0].mxu0
  %v234 = vadd.f32 0.0, %v233
  %v235 = vpop.f32.mrb[0].mxu0
  %v236 = vadd.f32 0.0, %v235
  %v237 = vpop.f32.mrb[0].mxu0
  %v238 = vadd.f32 0.0, %v237
  %239 = vdwg.mxu0
  %v244 = vunpack.c.l.b16 %v118
  %v245 = vunpack.c.h.b16 %v118
  %v246 = vunpack.c.l.b16 %v119
  %v247 = vunpack.c.h.b16 %v119
  %v248 = vunpack.c.l.b16 %v120
  %v249 = vunpack.c.h.b16 %v120
  %v250 = vunpack.c.l.b16 %v121
  %v251 = vunpack.c.h.b16 %v121
  %v252 = vpack.c.b16 %v246, %v244
  %v253 = vpack.c.b16 %v247, %v245
  %v254 = vpack.c.b16 %v250, %v248
  %v255 = vpack.c.b16 %v251, %v249
  %v259 = vsel %vm160, %v45, 0
  %v262 = vsel %vm160, %v46, 0
  %v265 = vsel %vm160, %v47, 0
  %v268 = vsel %vm170, %v254, 0
  %v271 = vsel %vm170, %v255, 0
  %273 = vmatprep.subr.bf16.mxu0 %v253
  %274 = vmatpush1.bf16.msra.mxu0 %v252
  %275 = vmatprep.subr.bf16.mxu0 %v271
  %276 = vmatpush1.bf16.msra.mxu0 %v268
  %277 = vmatprep.subr.bf16.mxu0 0
  %278 = vmatpush1.bf16.msra.mxu0 0
  %279 = vmatprep.subr.bf16.mxu0 0
  %280 = vmatpush1.bf16.msra.mxu0 0
  %281 = vmatprep.subr.bf16.mxu0 0
  %282 = vmatpush1.bf16.msra.mxu0 0
  %283 = vmatprep.subr.bf16.mxu0 0
  %284 = vmatpush1.bf16.msra.mxu0 0
  %285 = vmatprep.subr.bf16.mxu0 0
  %286 = vmatpush1.bf16.msra.mxu0 0
  %287 = vmatprep.subr.bf16.mxu0 0
  %288 = vmatpush1.bf16.msra.mxu0 0
  %289 = vmatprep.subr.bf16.mxu0 0
  %290 = vmatpush1.bf16.msra.mxu0 0
  %291 = vmatprep.subr.bf16.mxu0 0
  %292 = vmatpush1.bf16.msra.mxu0 0
  %293 = vmatprep.subr.bf16.mxu0 0
  %294 = vmatpush1.bf16.msra.mxu0 0
  %295 = vmatprep.subr.bf16.mxu0 0
  %296 = vmatpush1.bf16.msra.mxu0 0
  %297 = vmatprep.subr.bf16.mxu0 0
  %298 = vmatpush1.bf16.msra.mxu0 0
  %299 = vmatprep.subr.bf16.mxu0 0
  %300 = vmatpush1.bf16.msra.mxu0 0
  %301 = vmatprep.subr.bf16.mxu0 0
  %302 = vmatpush1.bf16.msra.mxu0 0
  %303 = vmatprep.subr.bf16.mxu0 0
  %304 = vmatpush1.bf16.msra.mxu0 0
  %305 = vmatprep.mubr.bf16.mxu0 0
  %306 = vmatmul.mubr.bf16.gmra.mrb[0].mxu0 %v259
  %v307 = vpop.f32.mrb[0].mxu0
  %v308 = vadd.f32 %v212, %v307
  %v309 = vpop.f32.mrb[0].mxu0
  %v310 = vadd.f32 %v214, %v309
  %v311 = vpop.f32.mrb[0].mxu0
  %v312 = vadd.f32 %v216, %v311
  %v313 = vpop.f32.mrb[0].mxu0
  %v314 = vadd.f32 %v218, %v313
  %315 = vmatprep.mubr.bf16.mxu0 0
  %316 = vmatmul.mubr.bf16.gmra.mrb[0].mxu0 %v262
  %v317 = vpop.f32.mrb[0].mxu0
  %v318 = vadd.f32 %v222, %v317
  %v319 = vpop.f32.mrb[0].mxu0
  %v320 = vadd.f32 %v224, %v319
  %v321 = vpop.f32.mrb[0].mxu0
  %v322 = vadd.f32 %v226, %v321
  %v323 = vpop.f32.mrb[0].mxu0
  %v324 = vadd.f32 %v228, %v323
  %325 = vmatprep.mubr.bf16.mxu0 0
  %326 = vmatmul.mubr.bf16.gmra.mrb[0].mxu0 %v265
  %v327 = vpop.f32.mrb[0].mxu0
  %v328 = vadd.f32 %v232, %v327
  %v329 = vpop.f32.mrb[0].mxu0
  %v330 = vadd.f32 %v234, %v329
  %v331 = vpop.f32.mrb[0].mxu0
  %v332 = vadd.f32 %v236, %v331
  %v333 = vpop.f32.mrb[0].mxu0
  %v334 = vadd.f32 %v238, %v333
  %335 = vdwg.mxu0
  %v340 = vunpack.c.l.b16 %v128
  %v341 = vunpack.c.h.b16 %v128
  %v342 = vunpack.c.l.b16 %v129
  %v343 = vunpack.c.h.b16 %v129
  %v344 = vunpack.c.l.b16 %v130
  %v345 = vunpack.c.h.b16 %v130
  %v346 = vunpack.c.l.b16 %v131
  %v347 = vunpack.c.h.b16 %v131
  %v348 = vpack.c.b16 %v342, %v340
  %v349 = vpack.c.b16 %v343, %v341
  %v350 = vpack.c.b16 %v346, %v344
  %v351 = vpack.c.b16 %v347, %v345
  %v355 = vsel %vm160, %v65, 0
  %v358 = vsel %vm160, %v66, 0
  %v361 = vsel %vm160, %v67, 0
  %v364 = vsel %vm170, %v350, 0
  %v367 = vsel %vm170, %v351, 0
  %369 = vmatprep.subr.bf16.mxu0 %v349
  %370 = vmatpush1.bf16.msra.mxu0 %v348
  %371 = vmatprep.subr.bf16.mxu0 %v367
  %372 = vmatpush1.bf16.msra.mxu0 %v364
  %373 = vmatprep.subr.bf16.mxu0 0
  %374 = vmatpush1.bf16.msra.mxu0 0
  %375 = vmatprep.subr.bf16.mxu0 0
  %376 = vmatpush1.bf16.msra.mxu0 0
  %377 = vmatprep.subr.bf16.mxu0 0
  %378 = vmatpush1.bf16.msra.mxu0 0
  %379 = vmatprep.subr.bf16.mxu0 0
  %380 = vmatpush1.bf16.msra.mxu0 0
  %381 = vmatprep.subr.bf16.mxu0 0
  %382 = vmatpush1.bf16.msra.mxu0 0
  %383 = vmatprep.subr.bf16.mxu0 0
  %384 = vmatpush1.bf16.msra.mxu0 0
  %385 = vmatprep.subr.bf16.mxu0 0
  %386 = vmatpush1.bf16.msra.mxu0 0
  %387 = vmatprep.subr.bf16.mxu0 0
  %388 = vmatpush1.bf16.msra.mxu0 0
  %389 = vmatprep.subr.bf16.mxu0 0
  %390 = vmatpush1.bf16.msra.mxu0 0
  %391 = vmatprep.subr.bf16.mxu0 0
  %392 = vmatpush1.bf16.msra.mxu0 0
  %393 = vmatprep.subr.bf16.mxu0 0
  %394 = vmatpush1.bf16.msra.mxu0 0
  %395 = vmatprep.subr.bf16.mxu0 0
  %396 = vmatpush1.bf16.msra.mxu0 0
  %397 = vmatprep.subr.bf16.mxu0 0
  %398 = vmatpush1.bf16.msra.mxu0 0
  %399 = vmatprep.subr.bf16.mxu0 0
  %400 = vmatpush1.bf16.msra.mxu0 0
  %401 = vmatprep.mubr.bf16.mxu0 0
  %402 = vmatmul.mubr.bf16.gmra.mrb[0].mxu0 %v355
  %v403 = vpop.f32.mrb[0].mxu0
  %v404 = vadd.f32 0.0, %v403
  %v405 = vpop.f32.mrb[0].mxu0
  %v406 = vadd.f32 0.0, %v405
  %v407 = vpop.f32.mrb[0].mxu0
  %v408 = vadd.f32 0.0, %v407
  %v409 = vpop.f32.mrb[0].mxu0
  %v410 = vadd.f32 0.0, %v409
  %411 = vmatprep.mubr.bf16.mxu0 0
  %412 = vmatmul.mubr.bf16.gmra.mrb[0].mxu0 %v358
  %v413 = vpop.f32.mrb[0].mxu0
  %v414 = vadd.f32 0.0, %v413
  %v415 = vpop.f32.mrb[0].mxu0
  %v416 = vadd.f32 0.0, %v415
  %v417 = vpop.f32.mrb[0].mxu0
  %v418 = vadd.f32 0.0, %v417
  %v419 = vpop.f32.mrb[0].mxu0
  %v420 = vadd.f32 0.0, %v419
  %421 = vmatprep.mubr.bf16.mxu0 0
  %422 = vmatmul.mubr.bf16.gmra.mrb[0].mxu0 %v361
  %v423 = vpop.f32.mrb[0].mxu0
  %v424 = vadd.f32 0.0, %v423
  %v425 = vpop.f32.mrb[0].mxu0
  %v426 = vadd.f32 0.0, %v425
  %v427 = vpop.f32.mrb[0].mxu0
  %v428 = vadd.f32 0.0, %v427
  %v429 = vpop.f32.mrb[0].mxu0
  %v430 = vadd.f32 0.0, %v429
  %431 = vdwg.mxu0
  %v432 = vadd.f32 %v308, %v404
  %v433 = vadd.f32 %v310, %v406
  %v434 = vadd.f32 %v312, %v408
  %v435 = vadd.f32 %v314, %v410
  %v436 = vadd.f32 %v318, %v414
  %v437 = vadd.f32 %v320, %v416
  %v438 = vadd.f32 %v322, %v418
  %v439 = vadd.f32 %v324, %v420
  %v440 = vadd.f32 %v328, %v424
  %v441 = vadd.f32 %v330, %v426
  %v442 = vadd.f32 %v332, %v428
  %v443 = vadd.f32 %v334, %v430
  %v448 = vunpack.c.l.b16 %v133
  %v449 = vunpack.c.h.b16 %v133
  %v450 = vunpack.c.l.b16 %v134
  %v451 = vunpack.c.h.b16 %v134
  %v452 = vunpack.c.l.b16 %v135
  %v453 = vunpack.c.h.b16 %v135
  %v454 = vunpack.c.l.b16 %v136
  %v455 = vunpack.c.h.b16 %v136
  %v456 = vpack.c.b16 %v450, %v448
  %v457 = vpack.c.b16 %v451, %v449
  %v458 = vpack.c.b16 %v454, %v452
  %v459 = vpack.c.b16 %v455, %v453
  %v463 = vsel %vm160, %v75, 0
  %v466 = vsel %vm160, %v76, 0
  %v469 = vsel %vm160, %v77, 0
  %v472 = vsel %vm170, %v458, 0
  %v475 = vsel %vm170, %v459, 0
  %477 = vmatprep.subr.bf16.mxu0 %v457
  %478 = vmatpush1.bf16.msra.mxu0 %v456
  %479 = vmatprep.subr.bf16.mxu0 %v475
  %480 = vmatpush1.bf16.msra.mxu0 %v472
  %481 = vmatprep.subr.bf16.mxu0 0
  %482 = vmatpush1.bf16.msra.mxu0 0
  %483 = vmatprep.subr.bf16.mxu0 0
  %484 = vmatpush1.bf16.msra.mxu0 0
  %485 = vmatprep.subr.bf16.mxu0 0
  %486 = vmatpush1.bf16.msra.mxu0 0
  %487 = vmatprep.subr.bf16.mxu0 0
  %488 = vmatpush1.bf16.msra.mxu0 0
  %489 = vmatprep.subr.bf16.mxu0 0
  %490 = vmatpush1.bf16.msra.mxu0 0
  %491 = vmatprep.subr.bf16.mxu0 0
  %492 = vmatpush1.bf16.msra.mxu0 0
  %493 = vmatprep.subr.bf16.mxu0 0
  %494 = vmatpush1.bf16.msra.mxu0 0
  %495 = vmatprep.subr.bf16.mxu0 0
  %496 = vmatpush1.bf16.msra.mxu0 0
  %497 = vmatprep.subr.bf16.mxu0 0
  %498 = vmatpush1.bf16.msra.mxu0 0
  %499 = vmatprep.subr.bf16.mxu0 0
  %500 = vmatpush1.bf16.msra.mxu0 0
  %501 = vmatprep.subr.bf16.mxu0 0
  %502 = vmatpush1.bf16.msra.mxu0 0
  %503 = vmatprep.subr.bf16.mxu0 0
  %504 = vmatpush1.bf16.msra.mxu0 0
  %505 = vmatprep.subr.bf16.mxu0 0
  %506 = vmatpush1.bf16.msra.mxu0 0
  %507 = vmatprep.subr.bf16.mxu0 0
  %508 = vmatpush1.bf16.msra.mxu0 0
  %509 = vmatprep.mubr.bf16.mxu0 0
  %510 = vmatmul.mubr.bf16.gmra.mrb[0].mxu0 %v463
  %v511 = vpop.f32.mrb[0].mxu0
  %v512 = vadd.f32 0.0, %v511
  %v513 = vpop.f32.mrb[0].mxu0
  %v514 = vadd.f32 0.0, %v513
  %v515 = vpop.f32.mrb[0].mxu0
  %v516 = vadd.f32 0.0, %v515
  %v517 = vpop.f32.mrb[0].mxu0
  %v518 = vadd.f32 0.0, %v517
  %519 = vmatprep.mubr.bf16.mxu0 0
  %520 = vmatmul.mubr.bf16.gmra.mrb[0].mxu0 %v466
  %v521 = vpop.f32.mrb[0].mxu0
  %v522 = vadd.f32 0.0, %v521
  %v523 = vpop.f32.mrb[0].mxu0
  %v524 = vadd.f32 0.0, %v523
  %v525 = vpop.f32.mrb[0].mxu0
  %v526 = vadd.f32 0.0, %v525
  %v527 = vpop.f32.mrb[0].mxu0
  %v528 = vadd.f32 0.0, %v527
  %529 = vmatprep.mubr.bf16.mxu0 0
  %530 = vmatmul.mubr.bf16.gmra.mrb[0].mxu0 %v469
  %v531 = vpop.f32.mrb[0].mxu0
  %v532 = vadd.f32 0.0, %v531
  %v533 = vpop.f32.mrb[0].mxu0
  %v534 = vadd.f32 0.0, %v533
  %v535 = vpop.f32.mrb[0].mxu0
  %v536 = vadd.f32 0.0, %v535
  %v537 = vpop.f32.mrb[0].mxu0
  %v538 = vadd.f32 0.0, %v537
  %539 = vdwg.mxu0
  %v540 = vadd.f32 %v432, %v512
  %v541 = vadd.f32 %v433, %v514
  %v542 = vadd.f32 %v434, %v516
  %v543 = vadd.f32 %v435, %v518
  %v544 = vadd.f32 %v436, %v522
  %v545 = vadd.f32 %v437, %v524
  %v546 = vadd.f32 %v438, %v526
  %v547 = vadd.f32 %v439, %v528
  %v548 = vadd.f32 %v440, %v532
  %v549 = vadd.f32 %v441, %v534
  %v550 = vadd.f32 %v442, %v536
  %v551 = vadd.f32 %v443, %v538
  %v556 = vunpack.c.l.b16 %v138
  %v557 = vunpack.c.h.b16 %v138
  %v558 = vunpack.c.l.b16 %v139
  %v559 = vunpack.c.h.b16 %v139
  %v560 = vunpack.c.l.b16 %v140
  %v561 = vunpack.c.h.b16 %v140
  %v562 = vunpack.c.l.b16 %v141
  %v563 = vunpack.c.h.b16 %v141
  %v564 = vpack.c.b16 %v558, %v556
  %v565 = vpack.c.b16 %v559, %v557
  %v566 = vpack.c.b16 %v562, %v560
  %v567 = vpack.c.b16 %v563, %v561
  %v571 = vsel %vm160, %v85, 0
  %v574 = vsel %vm160, %v86, 0
  %v577 = vsel %vm160, %v87, 0
  %v580 = vsel %vm170, %v566, 0
  %v583 = vsel %vm170, %v567, 0
  %585 = vmatprep.subr.bf16.mxu0 %v565
  %586 = vmatpush1.bf16.msra.mxu0 %v564
  %587 = vmatprep.subr.bf16.mxu0 %v583
  %588 = vmatpush1.bf16.msra.mxu0 %v580
  %589 = vmatprep.subr.bf16.mxu0 0
  %590 = vmatpush1.bf16.msra.mxu0 0
  %591 = vmatprep.subr.bf16.mxu0 0
  %592 = vmatpush1.bf16.msra.mxu0 0
  %593 = vmatprep.subr.bf16.mxu0 0
  %594 = vmatpush1.bf16.msra.mxu0 0
  %595 = vmatprep.subr.bf16.mxu0 0
  %596 = vmatpush1.bf16.msra.mxu0 0
  %597 = vmatprep.subr.bf16.mxu0 0
  %598 = vmatpush1.bf16.msra.mxu0 0
  %599 = vmatprep.subr.bf16.mxu0 0
  %600 = vmatpush1.bf16.msra.mxu0 0
  %601 = vmatprep.subr.bf16.mxu0 0
  %602 = vmatpush1.bf16.msra.mxu0 0
  %603 = vmatprep.subr.bf16.mxu0 0
  %604 = vmatpush1.bf16.msra.mxu0 0
  %605 = vmatprep.subr.bf16.mxu0 0
  %606 = vmatpush1.bf16.msra.mxu0 0
  %607 = vmatprep.subr.bf16.mxu0 0
  %608 = vmatpush1.bf16.msra.mxu0 0
  %609 = vmatprep.subr.bf16.mxu0 0
  %610 = vmatpush1.bf16.msra.mxu0 0
  %611 = vmatprep.subr.bf16.mxu0 0
  %612 = vmatpush1.bf16.msra.mxu0 0
  %613 = vmatprep.subr.bf16.mxu0 0
  %614 = vmatpush1.bf16.msra.mxu0 0
  %615 = vmatprep.subr.bf16.mxu0 0
  %616 = vmatpush1.bf16.msra.mxu0 0
  %617 = vmatprep.mubr.bf16.mxu0 0
  %618 = vmatmul.mubr.bf16.gmra.mrb[0].mxu0 %v571
  %v619 = vpop.f32.mrb[0].mxu0
  %v620 = vadd.f32 0.0, %v619
  %v621 = vpop.f32.mrb[0].mxu0
  %v622 = vadd.f32 0.0, %v621
  %v623 = vpop.f32.mrb[0].mxu0
  %v624 = vadd.f32 0.0, %v623
  %v625 = vpop.f32.mrb[0].mxu0
  %v626 = vadd.f32 0.0, %v625
  %627 = vmatprep.mubr.bf16.mxu0 0
  %628 = vmatmul.mubr.bf16.gmra.mrb[0].mxu0 %v574
  %v629 = vpop.f32.mrb[0].mxu0
  %v630 = vadd.f32 0.0, %v629
  %v631 = vpop.f32.mrb[0].mxu0
  %v632 = vadd.f32 0.0, %v631
  %v633 = vpop.f32.mrb[0].mxu0
  %v634 = vadd.f32 0.0, %v633
  %v635 = vpop.f32.mrb[0].mxu0
  %v636 = vadd.f32 0.0, %v635
  %637 = vmatprep.mubr.bf16.mxu0 0
  %638 = vmatmul.mubr.bf16.gmra.mrb[0].mxu0 %v577
  %v639 = vpop.f32.mrb[0].mxu0
  %v640 = vadd.f32 0.0, %v639
  %v641 = vpop.f32.mrb[0].mxu0
  %v642 = vadd.f32 0.0, %v641
  %v643 = vpop.f32.mrb[0].mxu0
  %v644 = vadd.f32 0.0, %v643
  %v645 = vpop.f32.mrb[0].mxu0
  %v646 = vadd.f32 0.0, %v645
  %647 = vdwg.mxu0
  %v648 = vadd.f32 %v540, %v620
  %v649 = vadd.f32 %v541, %v622
  %v650 = vadd.f32 %v542, %v624
  %v651 = vadd.f32 %v543, %v626
  %v652 = vadd.f32 %v544, %v630
  %v653 = vadd.f32 %v545, %v632
  %v654 = vadd.f32 %v546, %v634
  %v655 = vadd.f32 %v547, %v636
  %v656 = vadd.f32 %v548, %v640
  %v657 = vadd.f32 %v549, %v642
  %v658 = vadd.f32 %v550, %v644
  %v659 = vadd.f32 %v551, %v646
  %660 = vmatprep.subr.bf16.mxu0 %v155
  %661 = vmatpush1.bf16.msra.mxu0 %v154
  %662 = vmatprep.subr.bf16.mxu0 %v175
  %663 = vmatpush1.bf16.msra.mxu0 %v172
  %664 = vmatprep.subr.bf16.mxu0 0
  %665 = vmatpush1.bf16.msra.mxu0 0
  %666 = vmatprep.subr.bf16.mxu0 0
  %667 = vmatpush1.bf16.msra.mxu0 0
  %668 = vmatprep.subr.bf16.mxu0 0
  %669 = vmatpush1.bf16.msra.mxu0 0
  %670 = vmatprep.subr.bf16.mxu0 0
  %671 = vmatpush1.bf16.msra.mxu0 0
  %672 = vmatprep.subr.bf16.mxu0 0
  %673 = vmatpush1.bf16.msra.mxu0 0
  %674 = vmatprep.subr.bf16.mxu0 0
  %675 = vmatpush1.bf16.msra.mxu0 0
  %676 = vmatprep.subr.bf16.mxu0 0
  %677 = vmatpush1.bf16.msra.mxu0 0
  %678 = vmatprep.subr.bf16.mxu0 0
  %679 = vmatpush1.bf16.msra.mxu0 0
  %680 = vmatprep.subr.bf16.mxu0 0
  %681 = vmatpush1.bf16.msra.mxu0 0
  %682 = vmatprep.subr.bf16.mxu0 0
  %683 = vmatpush1.bf16.msra.mxu0 0
  %684 = vmatprep.subr.bf16.mxu0 0
  %685 = vmatpush1.bf16.msra.mxu0 0
  %686 = vmatprep.subr.bf16.mxu0 0
  %687 = vmatpush1.bf16.msra.mxu0 0
  %688 = vmatprep.subr.bf16.mxu0 0
  %689 = vmatpush1.bf16.msra.mxu0 0
  %690 = vmatprep.subr.bf16.mxu0 0
  %691 = vmatpush1.bf16.msra.mxu0 0
  %692 = vmatprep.mubr.bf16.mxu0 0
  %693 = vmatmul.mubr.bf16.gmra.mrb[0].mxu0 %v355
  %v694 = vpop.f32.mrb[0].mxu0
  %v695 = vadd.f32 0.0, %v694
  %v696 = vpop.f32.mrb[0].mxu0
  %v697 = vadd.f32 0.0, %v696
  %v698 = vpop.f32.mrb[0].mxu0
  %v699 = vadd.f32 0.0, %v698
  %v700 = vpop.f32.mrb[0].mxu0
  %v701 = vadd.f32 0.0, %v700
  %702 = vmatprep.mubr.bf16.mxu0 0
  %703 = vmatmul.mubr.bf16.gmra.mrb[0].mxu0 %v358
  %v704 = vpop.f32.mrb[0].mxu0
  %v705 = vadd.f32 0.0, %v704
  %v706 = vpop.f32.mrb[0].mxu0
  %v707 = vadd.f32 0.0, %v706
  %v708 = vpop.f32.mrb[0].mxu0
  %v709 = vadd.f32 0.0, %v708
  %v710 = vpop.f32.mrb[0].mxu0
  %v711 = vadd.f32 0.0, %v710
  %712 = vmatprep.mubr.bf16.mxu0 0
  %713 = vmatmul.mubr.bf16.gmra.mrb[0].mxu0 %v361
  %v714 = vpop.f32.mrb[0].mxu0
  %v715 = vadd.f32 0.0, %v714
  %v716 = vpop.f32.mrb[0].mxu0
  %v717 = vadd.f32 0.0, %v716
  %v718 = vpop.f32.mrb[0].mxu0
  %v719 = vadd.f32 0.0, %v718
  %v720 = vpop.f32.mrb[0].mxu0
  %v721 = vadd.f32 0.0, %v720
  %722 = vdwg.mxu0
  %723 = vmatprep.subr.bf16.mxu0 %v253
  %724 = vmatpush1.bf16.msra.mxu0 %v252
  %725 = vmatprep.subr.bf16.mxu0 %v271
  %726 = vmatpush1.bf16.msra.mxu0 %v268
  %727 = vmatprep.subr.bf16.mxu0 0
  %728 = vmatpush1.bf16.msra.mxu0 0
  %729 = vmatprep.subr.bf16.mxu0 0
  %730 = vmatpush1.bf16.msra.mxu0 0
  %731 = vmatprep.subr.bf16.mxu0 0
  %732 = vmatpush1.bf16.msra.mxu0 0
  %733 = vmatprep.subr.bf16.mxu0 0
  %734 = vmatpush1.bf16.msra.mxu0 0
  %735 = vmatprep.subr.bf16.mxu0 0
  %736 = vmatpush1.bf16.msra.mxu0 0
  %737 = vmatprep.subr.bf16.mxu0 0
  %738 = vmatpush1.bf16.msra.mxu0 0
  %739 = vmatprep.subr.bf16.mxu0 0
  %740 = vmatpush1.bf16.msra.mxu0 0
  %741 = vmatprep.subr.bf16.mxu0 0
  %742 = vmatpush1.bf16.msra.mxu0 0
  %743 = vmatprep.subr.bf16.mxu0 0
  %744 = vmatpush1.bf16.msra.mxu0 0
  %745 = vmatprep.subr.bf16.mxu0 0
  %746 = vmatpush1.bf16.msra.mxu0 0
  %747 = vmatprep.subr.bf16.mxu0 0
  %748 = vmatpush1.bf16.msra.mxu0 0
  %749 = vmatprep.subr.bf16.mxu0 0
  %750 = vmatpush1.bf16.msra.mxu0 0
  %751 = vmatprep.subr.bf16.mxu0 0
  %752 = vmatpush1.bf16.msra.mxu0 0
  %753 = vmatprep.subr.bf16.mxu0 0
  %754 = vmatpush1.bf16.msra.mxu0 0
  %755 = vmatprep.mubr.bf16.mxu0 0
  %756 = vmatmul.mubr.bf16.gmra.mrb[0].mxu0 %v162
  %v757 = vpop.f32.mrb[0].mxu0
  %v758 = vadd.f32 %v695, %v757
  %v759 = vpop.f32.mrb[0].mxu0
  %v760 = vadd.f32 %v697, %v759
  %v761 = vpop.f32.mrb[0].mxu0
  %v762 = vadd.f32 %v699, %v761
  %v763 = vpop.f32.mrb[0].mxu0
  %v764 = vadd.f32 %v701, %v763
  %765 = vmatprep.mubr.bf16.mxu0 0
  %766 = vmatmul.mubr.bf16.gmra.mrb[0].mxu0 %v165
  %v767 = vpop.f32.mrb[0].mxu0
  %v768 = vadd.f32 %v705, %v767
  %v769 = vpop.f32.mrb[0].mxu0
  %v770 = vadd.f32 %v707, %v769
  %v771 = vpop.f32.mrb[0].mxu0
  %v772 = vadd.f32 %v709, %v771
  %v773 = vpop.f32.mrb[0].mxu0
  %v774 = vadd.f32 %v711, %v773
  %775 = vmatprep.mubr.bf16.mxu0 0
  %776 = vmatmul.mubr.bf16.gmra.mrb[0].mxu0 %v168
  %v777 = vpop.f32.mrb[0].mxu0
  %v778 = vadd.f32 %v715, %v777
  %v779 = vpop.f32.mrb[0].mxu0
  %v780 = vadd.f32 %v717, %v779
  %v781 = vpop.f32.mrb[0].mxu0
  %v782 = vadd.f32 %v719, %v781
  %v783 = vpop.f32.mrb[0].mxu0
  %v784 = vadd.f32 %v721, %v783
  %785 = vdwg.mxu0
  %786 = vmatprep.subr.bf16.mxu0 %v349
  %787 = vmatpush1.bf16.msra.mxu0 %v348
  %788 = vmatprep.subr.bf16.mxu0 %v367
  %789 = vmatpush1.bf16.msra.mxu0 %v364
  %790 = vmatprep.subr.bf16.mxu0 0
  %791 = vmatpush1.bf16.msra.mxu0 0
  %792 = vmatprep.subr.bf16.mxu0 0
  %793 = vmatpush1.bf16.msra.mxu0 0
  %794 = vmatprep.subr.bf16.mxu0 0
  %795 = vmatpush1.bf16.msra.mxu0 0
  %796 = vmatprep.subr.bf16.mxu0 0
  %797 = vmatpush1.bf16.msra.mxu0 0
  %798 = vmatprep.subr.bf16.mxu0 0
  %799 = vmatpush1.bf16.msra.mxu0 0
  %800 = vmatprep.subr.bf16.mxu0 0
  %801 = vmatpush1.bf16.msra.mxu0 0
  %802 = vmatprep.subr.bf16.mxu0 0
  %803 = vmatpush1.bf16.msra.mxu0 0
  %804 = vmatprep.subr.bf16.mxu0 0
  %805 = vmatpush1.bf16.msra.mxu0 0
  %806 = vmatprep.subr.bf16.mxu0 0
  %807 = vmatpush1.bf16.msra.mxu0 0
  %808 = vmatprep.subr.bf16.mxu0 0
  %809 = vmatpush1.bf16.msra.mxu0 0
  %810 = vmatprep.subr.bf16.mxu0 0
  %811 = vmatpush1.bf16.msra.mxu0 0
  %812 = vmatprep.subr.bf16.mxu0 0
  %813 = vmatpush1.bf16.msra.mxu0 0
  %814 = vmatprep.subr.bf16.mxu0 0
  %815 = vmatpush1.bf16.msra.mxu0 0
  %816 = vmatprep.subr.bf16.mxu0 0
  %817 = vmatpush1.bf16.msra.mxu0 0
  %818 = vmatprep.mubr.bf16.mxu0 0
  %819 = vmatmul.mubr.bf16.gmra.mrb[0].mxu0 %v463
  %v820 = vpop.f32.mrb[0].mxu0
  %v821 = vadd.f32 0.0, %v820
  %v822 = vpop.f32.mrb[0].mxu0
  %v823 = vadd.f32 0.0, %v822
  %v824 = vpop.f32.mrb[0].mxu0
  %v825 = vadd.f32 0.0, %v824
  %v826 = vpop.f32.mrb[0].mxu0
  %v827 = vadd.f32 0.0, %v826
  %828 = vmatprep.mubr.bf16.mxu0 0
  %829 = vmatmul.mubr.bf16.gmra.mrb[0].mxu0 %v466
  %v830 = vpop.f32.mrb[0].mxu0
  %v831 = vadd.f32 0.0, %v830
  %v832 = vpop.f32.mrb[0].mxu0
  %v833 = vadd.f32 0.0, %v832
  %v834 = vpop.f32.mrb[0].mxu0
  %v835 = vadd.f32 0.0, %v834
  %v836 = vpop.f32.mrb[0].mxu0
  %v837 = vadd.f32 0.0, %v836
  %838 = vmatprep.mubr.bf16.mxu0 0
  %839 = vmatmul.mubr.bf16.gmra.mrb[0].mxu0 %v469
  %v840 = vpop.f32.mrb[0].mxu0
  %v841 = vadd.f32 0.0, %v840
  %v842 = vpop.f32.mrb[0].mxu0
  %v843 = vadd.f32 0.0, %v842
  %v844 = vpop.f32.mrb[0].mxu0
  %v845 = vadd.f32 0.0, %v844
  %v846 = vpop.f32.mrb[0].mxu0
  %v847 = vadd.f32 0.0, %v846
  %848 = vdwg.mxu0
  %v849 = vadd.f32 %v758, %v821
  %v850 = vadd.f32 %v760, %v823
  %v851 = vadd.f32 %v762, %v825
  %v852 = vadd.f32 %v764, %v827
  %v853 = vadd.f32 %v768, %v831
  %v854 = vadd.f32 %v770, %v833
  %v855 = vadd.f32 %v772, %v835
  %v856 = vadd.f32 %v774, %v837
  %v857 = vadd.f32 %v778, %v841
  %v858 = vadd.f32 %v780, %v843
  %v859 = vadd.f32 %v782, %v845
  %v860 = vadd.f32 %v784, %v847
  %861 = vmatprep.subr.bf16.mxu0 %v457
  %862 = vmatpush1.bf16.msra.mxu0 %v456
  %863 = vmatprep.subr.bf16.mxu0 %v475
  %864 = vmatpush1.bf16.msra.mxu0 %v472
  %865 = vmatprep.subr.bf16.mxu0 0
  %866 = vmatpush1.bf16.msra.mxu0 0
  %867 = vmatprep.subr.bf16.mxu0 0
  %868 = vmatpush1.bf16.msra.mxu0 0
  %869 = vmatprep.subr.bf16.mxu0 0
  %870 = vmatpush1.bf16.msra.mxu0 0
  %871 = vmatprep.subr.bf16.mxu0 0
  %872 = vmatpush1.bf16.msra.mxu0 0
  %873 = vmatprep.subr.bf16.mxu0 0
  %874 = vmatpush1.bf16.msra.mxu0 0
  %875 = vmatprep.subr.bf16.mxu0 0
  %876 = vmatpush1.bf16.msra.mxu0 0
  %877 = vmatprep.subr.bf16.mxu0 0
  %878 = vmatpush1.bf16.msra.mxu0 0
  %879 = vmatprep.subr.bf16.mxu0 0
  %880 = vmatpush1.bf16.msra.mxu0 0
  %881 = vmatprep.subr.bf16.mxu0 0
  %882 = vmatpush1.bf16.msra.mxu0 0
  %883 = vmatprep.subr.bf16.mxu0 0
  %884 = vmatpush1.bf16.msra.mxu0 0
  %885 = vmatprep.subr.bf16.mxu0 0
  %886 = vmatpush1.bf16.msra.mxu0 0
  %887 = vmatprep.subr.bf16.mxu0 0
  %888 = vmatpush1.bf16.msra.mxu0 0
  %889 = vmatprep.subr.bf16.mxu0 0
  %890 = vmatpush1.bf16.msra.mxu0 0
  %891 = vmatprep.subr.bf16.mxu0 0
  %892 = vmatpush1.bf16.msra.mxu0 0
  %893 = vmatprep.mubr.bf16.mxu0 0
  %894 = vmatmul.mubr.bf16.gmra.mrb[0].mxu0 %v571
  %v895 = vpop.f32.mrb[0].mxu0
  %v896 = vadd.f32 0.0, %v895
  %v897 = vpop.f32.mrb[0].mxu0
  %v898 = vadd.f32 0.0, %v897
  %v899 = vpop.f32.mrb[0].mxu0
  %v900 = vadd.f32 0.0, %v899
  %v901 = vpop.f32.mrb[0].mxu0
  %v902 = vadd.f32 0.0, %v901
  %903 = vmatprep.mubr.bf16.mxu0 0
  %904 = vmatmul.mubr.bf16.gmra.mrb[0].mxu0 %v574
  %v905 = vpop.f32.mrb[0].mxu0
  %v906 = vadd.f32 0.0, %v905
  %v907 = vpop.f32.mrb[0].mxu0
  %v908 = vadd.f32 0.0, %v907
  %v909 = vpop.f32.mrb[0].mxu0
  %v910 = vadd.f32 0.0, %v909
  %v911 = vpop.f32.mrb[0].mxu0
  %v912 = vadd.f32 0.0, %v911
  %913 = vmatprep.mubr.bf16.mxu0 0
  %914 = vmatmul.mubr.bf16.gmra.mrb[0].mxu0 %v577
  %v915 = vpop.f32.mrb[0].mxu0
  %v916 = vadd.f32 0.0, %v915
  %v917 = vpop.f32.mrb[0].mxu0
  %v918 = vadd.f32 0.0, %v917
  %v919 = vpop.f32.mrb[0].mxu0
  %v920 = vadd.f32 0.0, %v919
  %v921 = vpop.f32.mrb[0].mxu0
  %v922 = vadd.f32 0.0, %v921
  %923 = vdwg.mxu0
  %v924 = vadd.f32 %v849, %v896
  %v925 = vadd.f32 %v850, %v898
  %v926 = vadd.f32 %v851, %v900
  %v927 = vadd.f32 %v852, %v902
  %v928 = vadd.f32 %v853, %v906
  %v929 = vadd.f32 %v854, %v908
  %v930 = vadd.f32 %v855, %v910
  %v931 = vadd.f32 %v856, %v912
  %v932 = vadd.f32 %v857, %v916
  %v933 = vadd.f32 %v858, %v918
  %v934 = vadd.f32 %v859, %v920
  %v935 = vadd.f32 %v860, %v922
  %v937 = vsel %vm160, %v95, 0
  %v940 = vsel %vm160, %v96, 0
  %v943 = vsel %vm160, %v97, 0
  %945 = vmatprep.subr.bf16.mxu0 %v565
  %946 = vmatpush1.bf16.msra.mxu0 %v564
  %947 = vmatprep.subr.bf16.mxu0 %v583
  %948 = vmatpush1.bf16.msra.mxu0 %v580
  %949 = vmatprep.subr.bf16.mxu0 0
  %950 = vmatpush1.bf16.msra.mxu0 0
  %951 = vmatprep.subr.bf16.mxu0 0
  %952 = vmatpush1.bf16.msra.mxu0 0
  %953 = vmatprep.subr.bf16.mxu0 0
  %954 = vmatpush1.bf16.msra.mxu0 0
  %955 = vmatprep.subr.bf16.mxu0 0
  %956 = vmatpush1.bf16.msra.mxu0 0
  %957 = vmatprep.subr.bf16.mxu0 0
  %958 = vmatpush1.bf16.msra.mxu0 0
  %959 = vmatprep.subr.bf16.mxu0 0
  %960 = vmatpush1.bf16.msra.mxu0 0
  %961 = vmatprep.subr.bf16.mxu0 0
  %962 = vmatpush1.bf16.msra.mxu0 0
  %963 = vmatprep.subr.bf16.mxu0 0
  %964 = vmatpush1.bf16.msra.mxu0 0
  %965 = vmatprep.subr.bf16.mxu0 0
  %966 = vmatpush1.bf16.msra.mxu0 0
  %967 = vmatprep.subr.bf16.mxu0 0
  %968 = vmatpush1.bf16.msra.mxu0 0
  %969 = vmatprep.subr.bf16.mxu0 0
  %970 = vmatpush1.bf16.msra.mxu0 0
  %971 = vmatprep.subr.bf16.mxu0 0
  %972 = vmatpush1.bf16.msra.mxu0 0
  %973 = vmatprep.subr.bf16.mxu0 0
  %974 = vmatpush1.bf16.msra.mxu0 0
  %975 = vmatprep.subr.bf16.mxu0 0
  %976 = vmatpush1.bf16.msra.mxu0 0
  %977 = vmatprep.mubr.bf16.mxu0 0
  %978 = vmatmul.mubr.bf16.gmra.mrb[0].mxu0 %v937
  %v979 = vpop.f32.mrb[0].mxu0
  %v980 = vadd.f32 0.0, %v979
  %v981 = vpop.f32.mrb[0].mxu0
  %v982 = vadd.f32 0.0, %v981
  %v983 = vpop.f32.mrb[0].mxu0
  %v984 = vadd.f32 0.0, %v983
  %v985 = vpop.f32.mrb[0].mxu0
  %v986 = vadd.f32 0.0, %v985
  %987 = vmatprep.mubr.bf16.mxu0 0
  %988 = vmatmul.mubr.bf16.gmra.mrb[0].mxu0 %v940
  %v989 = vpop.f32.mrb[0].mxu0
  %v990 = vadd.f32 0.0, %v989
  %v991 = vpop.f32.mrb[0].mxu0
  %v992 = vadd.f32 0.0, %v991
  %v993 = vpop.f32.mrb[0].mxu0
  %v994 = vadd.f32 0.0, %v993
  %v995 = vpop.f32.mrb[0].mxu0
  %v996 = vadd.f32 0.0, %v995
  %997 = vmatprep.mubr.bf16.mxu0 0
  %998 = vmatmul.mubr.bf16.gmra.mrb[0].mxu0 %v943
  %v999 = vpop.f32.mrb[0].mxu0
  %v1000 = vadd.f32 0.0, %v999
  %v1001 = vpop.f32.mrb[0].mxu0
  %v1002 = vadd.f32 0.0, %v1001
  %v1003 = vpop.f32.mrb[0].mxu0
  %v1004 = vadd.f32 0.0, %v1003
  %v1005 = vpop.f32.mrb[0].mxu0
  %v1006 = vadd.f32 0.0, %v1005
  %1007 = vdwg.mxu0
  %v1008 = vadd.f32 %v924, %v980
  %v1009 = vadd.f32 %v925, %v982
  %v1010 = vadd.f32 %v926, %v984
  %v1011 = vadd.f32 %v927, %v986
  %v1012 = vadd.f32 %v928, %v990
  %v1013 = vadd.f32 %v929, %v992
  %v1014 = vadd.f32 %v930, %v994
  %v1015 = vadd.f32 %v931, %v996
  %v1016 = vadd.f32 %v932, %v1000
  %v1017 = vadd.f32 %v933, %v1002
  %v1018 = vadd.f32 %v934, %v1004
  %v1019 = vadd.f32 %v935, %v1006
  %1020 = vmatprep.subr.bf16.mxu0 %v155
  %1021 = vmatpush1.bf16.msra.mxu0 %v154
  %1022 = vmatprep.subr.bf16.mxu0 %v175
  %1023 = vmatpush1.bf16.msra.mxu0 %v172
  %1024 = vmatprep.subr.bf16.mxu0 0
  %1025 = vmatpush1.bf16.msra.mxu0 0
  %1026 = vmatprep.subr.bf16.mxu0 0
  %1027 = vmatpush1.bf16.msra.mxu0 0
  %1028 = vmatprep.subr.bf16.mxu0 0
  %1029 = vmatpush1.bf16.msra.mxu0 0
  %1030 = vmatprep.subr.bf16.mxu0 0
  %1031 = vmatpush1.bf16.msra.mxu0 0
  %1032 = vmatprep.subr.bf16.mxu0 0
  %1033 = vmatpush1.bf16.msra.mxu0 0
  %1034 = vmatprep.subr.bf16.mxu0 0
  %1035 = vmatpush1.bf16.msra.mxu0 0
  %1036 = vmatprep.subr.bf16.mxu0 0
  %1037 = vmatpush1.bf16.msra.mxu0 0
  %1038 = vmatprep.subr.bf16.mxu0 0
  %1039 = vmatpush1.bf16.msra.mxu0 0
  %1040 = vmatprep.subr.bf16.mxu0 0
  %1041 = vmatpush1.bf16.msra.mxu0 0
  %1042 = vmatprep.subr.bf16.mxu0 0
  %1043 = vmatpush1.bf16.msra.mxu0 0
  %1044 = vmatprep.subr.bf16.mxu0 0
  %1045 = vmatpush1.bf16.msra.mxu0 0
  %1046 = vmatprep.subr.bf16.mxu0 0
  %1047 = vmatpush1.bf16.msra.mxu0 0
  %1048 = vmatprep.subr.bf16.mxu0 0
  %1049 = vmatpush1.bf16.msra.mxu0 0
  %1050 = vmatprep.subr.bf16.mxu0 0
  %1051 = vmatpush1.bf16.msra.mxu0 0
  %1052 = vmatprep.mubr.bf16.mxu0 0
  %1053 = vmatmul.mubr.bf16.gmra.mrb[0].mxu0 %v463
  %v1054 = vpop.f32.mrb[0].mxu0
  %v1055 = vadd.f32 0.0, %v1054
  %v1056 = vpop.f32.mrb[0].mxu0
  %v1057 = vadd.f32 0.0, %v1056
  %v1058 = vpop.f32.mrb[0].mxu0
  %v1059 = vadd.f32 0.0, %v1058
  %v1060 = vpop.f32.mrb[0].mxu0
  %v1061 = vadd.f32 0.0, %v1060
  %1062 = vmatprep.mubr.bf16.mxu0 0
  %1063 = vmatmul.mubr.bf16.gmra.mrb[0].mxu0 %v466
  %v1064 = vpop.f32.mrb[0].mxu0
  %v1065 = vadd.f32 0.0, %v1064
  %v1066 = vpop.f32.mrb[0].mxu0
  %v1067 = vadd.f32 0.0, %v1066
  %v1068 = vpop.f32.mrb[0].mxu0
  %v1069 = vadd.f32 0.0, %v1068
  %v1070 = vpop.f32.mrb[0].mxu0
  %v1071 = vadd.f32 0.0, %v1070
  %1072 = vmatprep.mubr.bf16.mxu0 0
  %1073 = vmatmul.mubr.bf16.gmra.mrb[0].mxu0 %v469
  %v1074 = vpop.f32.mrb[0].mxu0
  %v1075 = vadd.f32 0.0, %v1074
  %v1076 = vpop.f32.mrb[0].mxu0
  %v1077 = vadd.f32 0.0, %v1076
  %v1078 = vpop.f32.mrb[0].mxu0
  %v1079 = vadd.f32 0.0, %v1078
  %v1080 = vpop.f32.mrb[0].mxu0
  %v1081 = vadd.f32 0.0, %v1080
  %1082 = vdwg.mxu0
  %1083 = vmatprep.subr.bf16.mxu0 %v253
  %1084 = vmatpush1.bf16.msra.mxu0 %v252
  %1085 = vmatprep.subr.bf16.mxu0 %v271
  %1086 = vmatpush1.bf16.msra.mxu0 %v268
  %1087 = vmatprep.subr.bf16.mxu0 0
  %1088 = vmatpush1.bf16.msra.mxu0 0
  %1089 = vmatprep.subr.bf16.mxu0 0
  %1090 = vmatpush1.bf16.msra.mxu0 0
  %1091 = vmatprep.subr.bf16.mxu0 0
  %1092 = vmatpush1.bf16.msra.mxu0 0
  %1093 = vmatprep.subr.bf16.mxu0 0
  %1094 = vmatpush1.bf16.msra.mxu0 0
  %1095 = vmatprep.subr.bf16.mxu0 0
  %1096 = vmatpush1.bf16.msra.mxu0 0
  %1097 = vmatprep.subr.bf16.mxu0 0
  %1098 = vmatpush1.bf16.msra.mxu0 0
  %1099 = vmatprep.subr.bf16.mxu0 0
  %1100 = vmatpush1.bf16.msra.mxu0 0
  %1101 = vmatprep.subr.bf16.mxu0 0
  %1102 = vmatpush1.bf16.msra.mxu0 0
  %1103 = vmatprep.subr.bf16.mxu0 0
  %1104 = vmatpush1.bf16.msra.mxu0 0
  %1105 = vmatprep.subr.bf16.mxu0 0
  %1106 = vmatpush1.bf16.msra.mxu0 0
  %1107 = vmatprep.subr.bf16.mxu0 0
  %1108 = vmatpush1.bf16.msra.mxu0 0
  %1109 = vmatprep.subr.bf16.mxu0 0
  %1110 = vmatpush1.bf16.msra.mxu0 0
  %1111 = vmatprep.subr.bf16.mxu0 0
  %1112 = vmatpush1.bf16.msra.mxu0 0
  %1113 = vmatprep.subr.bf16.mxu0 0
  %1114 = vmatpush1.bf16.msra.mxu0 0
  %1115 = vmatprep.mubr.bf16.mxu0 0
  %1116 = vmatmul.mubr.bf16.gmra.mrb[0].mxu0 %v355
  %v1117 = vpop.f32.mrb[0].mxu0
  %v1118 = vadd.f32 %v1055, %v1117
  %v1119 = vpop.f32.mrb[0].mxu0
  %v1120 = vadd.f32 %v1057, %v1119
  %v1121 = vpop.f32.mrb[0].mxu0
  %v1122 = vadd.f32 %v1059, %v1121
  %v1123 = vpop.f32.mrb[0].mxu0
  %v1124 = vadd.f32 %v1061, %v1123
  %1125 = vmatprep.mubr.bf16.mxu0 0
  %1126 = vmatmul.mubr.bf16.gmra.mrb[0].mxu0 %v358
  %v1127 = vpop.f32.mrb[0].mxu0
  %v1128 = vadd.f32 %v1065, %v1127
  %v1129 = vpop.f32.mrb[0].mxu0
  %v1130 = vadd.f32 %v1067, %v1129
  %v1131 = vpop.f32.mrb[0].mxu0
  %v1132 = vadd.f32 %v1069, %v1131
  %v1133 = vpop.f32.mrb[0].mxu0
  %v1134 = vadd.f32 %v1071, %v1133
  %1135 = vmatprep.mubr.bf16.mxu0 0
  %1136 = vmatmul.mubr.bf16.gmra.mrb[0].mxu0 %v361
  %v1137 = vpop.f32.mrb[0].mxu0
  %v1138 = vadd.f32 %v1075, %v1137
  %v1139 = vpop.f32.mrb[0].mxu0
  %v1140 = vadd.f32 %v1077, %v1139
  %v1141 = vpop.f32.mrb[0].mxu0
  %v1142 = vadd.f32 %v1079, %v1141
  %v1143 = vpop.f32.mrb[0].mxu0
  %v1144 = vadd.f32 %v1081, %v1143
  %1145 = vdwg.mxu0
  %1146 = vmatprep.subr.bf16.mxu0 %v349
  %1147 = vmatpush1.bf16.msra.mxu0 %v348
  %1148 = vmatprep.subr.bf16.mxu0 %v367
  %1149 = vmatpush1.bf16.msra.mxu0 %v364
  %1150 = vmatprep.subr.bf16.mxu0 0
  %1151 = vmatpush1.bf16.msra.mxu0 0
  %1152 = vmatprep.subr.bf16.mxu0 0
  %1153 = vmatpush1.bf16.msra.mxu0 0
  %1154 = vmatprep.subr.bf16.mxu0 0
  %1155 = vmatpush1.bf16.msra.mxu0 0
  %1156 = vmatprep.subr.bf16.mxu0 0
  %1157 = vmatpush1.bf16.msra.mxu0 0
  %1158 = vmatprep.subr.bf16.mxu0 0
  %1159 = vmatpush1.bf16.msra.mxu0 0
  %1160 = vmatprep.subr.bf16.mxu0 0
  %1161 = vmatpush1.bf16.msra.mxu0 0
  %1162 = vmatprep.subr.bf16.mxu0 0
  %1163 = vmatpush1.bf16.msra.mxu0 0
  %1164 = vmatprep.subr.bf16.mxu0 0
  %1165 = vmatpush1.bf16.msra.mxu0 0
  %1166 = vmatprep.subr.bf16.mxu0 0
  %1167 = vmatpush1.bf16.msra.mxu0 0
  %1168 = vmatprep.subr.bf16.mxu0 0
  %1169 = vmatpush1.bf16.msra.mxu0 0
  %1170 = vmatprep.subr.bf16.mxu0 0
  %1171 = vmatpush1.bf16.msra.mxu0 0
  %1172 = vmatprep.subr.bf16.mxu0 0
  %1173 = vmatpush1.bf16.msra.mxu0 0
  %1174 = vmatprep.subr.bf16.mxu0 0
  %1175 = vmatpush1.bf16.msra.mxu0 0
  %1176 = vmatprep.subr.bf16.mxu0 0
  %1177 = vmatpush1.bf16.msra.mxu0 0
  %1178 = vmatprep.mubr.bf16.mxu0 0
  %1179 = vmatmul.mubr.bf16.gmra.mrb[0].mxu0 %v571
  %v1180 = vpop.f32.mrb[0].mxu0
  %v1181 = vadd.f32 0.0, %v1180
  %v1182 = vpop.f32.mrb[0].mxu0
  %v1183 = vadd.f32 0.0, %v1182
  %v1184 = vpop.f32.mrb[0].mxu0
  %v1185 = vadd.f32 0.0, %v1184
  %v1186 = vpop.f32.mrb[0].mxu0
  %v1187 = vadd.f32 0.0, %v1186
  %1188 = vmatprep.mubr.bf16.mxu0 0
  %1189 = vmatmul.mubr.bf16.gmra.mrb[0].mxu0 %v574
  %v1190 = vpop.f32.mrb[0].mxu0
  %v1191 = vadd.f32 0.0, %v1190
  %v1192 = vpop.f32.mrb[0].mxu0
  %v1193 = vadd.f32 0.0, %v1192
  %v1194 = vpop.f32.mrb[0].mxu0
  %v1195 = vadd.f32 0.0, %v1194
  %v1196 = vpop.f32.mrb[0].mxu0
  %v1197 = vadd.f32 0.0, %v1196
  %1198 = vmatprep.mubr.bf16.mxu0 0
  %1199 = vmatmul.mubr.bf16.gmra.mrb[0].mxu0 %v577
  %v1200 = vpop.f32.mrb[0].mxu0
  %v1201 = vadd.f32 0.0, %v1200
  %v1202 = vpop.f32.mrb[0].mxu0
  %v1203 = vadd.f32 0.0, %v1202
  %v1204 = vpop.f32.mrb[0].mxu0
  %v1205 = vadd.f32 0.0, %v1204
  %v1206 = vpop.f32.mrb[0].mxu0
  %v1207 = vadd.f32 0.0, %v1206
  %1208 = vdwg.mxu0
  %v1209 = vadd.f32 %v1118, %v1181
  %v1210 = vadd.f32 %v1120, %v1183
  %v1211 = vadd.f32 %v1122, %v1185
  %v1212 = vadd.f32 %v1124, %v1187
  %v1213 = vadd.f32 %v1128, %v1191
  %v1214 = vadd.f32 %v1130, %v1193
  %v1215 = vadd.f32 %v1132, %v1195
  %v1216 = vadd.f32 %v1134, %v1197
  %v1217 = vadd.f32 %v1138, %v1201
  %v1218 = vadd.f32 %v1140, %v1203
  %v1219 = vadd.f32 %v1142, %v1205
  %v1220 = vadd.f32 %v1144, %v1207
  %1221 = vmatprep.subr.bf16.mxu0 %v457
  %1222 = vmatpush1.bf16.msra.mxu0 %v456
  %1223 = vmatprep.subr.bf16.mxu0 %v475
  %1224 = vmatpush1.bf16.msra.mxu0 %v472
  %1225 = vmatprep.subr.bf16.mxu0 0
  %1226 = vmatpush1.bf16.msra.mxu0 0
  %1227 = vmatprep.subr.bf16.mxu0 0
  %1228 = vmatpush1.bf16.msra.mxu0 0
  %1229 = vmatprep.subr.bf16.mxu0 0
  %1230 = vmatpush1.bf16.msra.mxu0 0
  %1231 = vmatprep.subr.bf16.mxu0 0
  %1232 = vmatpush1.bf16.msra.mxu0 0
  %1233 = vmatprep.subr.bf16.mxu0 0
  %1234 = vmatpush1.bf16.msra.mxu0 0
  %1235 = vmatprep.subr.bf16.mxu0 0
  %1236 = vmatpush1.bf16.msra.mxu0 0
  %1237 = vmatprep.subr.bf16.mxu0 0
  %1238 = vmatpush1.bf16.msra.mxu0 0
  %1239 = vmatprep.subr.bf16.mxu0 0
  %1240 = vmatpush1.bf16.msra.mxu0 0
  %1241 = vmatprep.subr.bf16.mxu0 0
  %1242 = vmatpush1.bf16.msra.mxu0 0
  %1243 = vmatprep.subr.bf16.mxu0 0
  %1244 = vmatpush1.bf16.msra.mxu0 0
  %1245 = vmatprep.subr.bf16.mxu0 0
  %1246 = vmatpush1.bf16.msra.mxu0 0
  %1247 = vmatprep.subr.bf16.mxu0 0
  %1248 = vmatpush1.bf16.msra.mxu0 0
  %1249 = vmatprep.subr.bf16.mxu0 0
  %1250 = vmatpush1.bf16.msra.mxu0 0
  %1251 = vmatprep.subr.bf16.mxu0 0
  %1252 = vmatpush1.bf16.msra.mxu0 0
  %1253 = vmatprep.mubr.bf16.mxu0 0
  %1254 = vmatmul.mubr.bf16.gmra.mrb[0].mxu0 %v937
  %v1255 = vpop.f32.mrb[0].mxu0
  %v1256 = vadd.f32 0.0, %v1255
  %v1257 = vpop.f32.mrb[0].mxu0
  %v1258 = vadd.f32 0.0, %v1257
  %v1259 = vpop.f32.mrb[0].mxu0
  %v1260 = vadd.f32 0.0, %v1259
  %v1261 = vpop.f32.mrb[0].mxu0
  %v1262 = vadd.f32 0.0, %v1261
  %1263 = vmatprep.mubr.bf16.mxu0 0
  %1264 = vmatmul.mubr.bf16.gmra.mrb[0].mxu0 %v940
  %v1265 = vpop.f32.mrb[0].mxu0
  %v1266 = vadd.f32 0.0, %v1265
  %v1267 = vpop.f32.mrb[0].mxu0
  %v1268 = vadd.f32 0.0, %v1267
  %v1269 = vpop.f32.mrb[0].mxu0
  %v1270 = vadd.f32 0.0, %v1269
  %v1271 = vpop.f32.mrb[0].mxu0
  %v1272 = vadd.f32 0.0, %v1271
  %1273 = vmatprep.mubr.bf16.mxu0 0
  %1274 = vmatmul.mubr.bf16.gmra.mrb[0].mxu0 %v943
  %v1275 = vpop.f32.mrb[0].mxu0
  %v1276 = vadd.f32 0.0, %v1275
  %v1277 = vpop.f32.mrb[0].mxu0
  %v1278 = vadd.f32 0.0, %v1277
  %v1279 = vpop.f32.mrb[0].mxu0
  %v1280 = vadd.f32 0.0, %v1279
  %v1281 = vpop.f32.mrb[0].mxu0
  %v1282 = vadd.f32 0.0, %v1281
  %1283 = vdwg.mxu0
  %v1284 = vadd.f32 %v1209, %v1256
  %v1285 = vadd.f32 %v1210, %v1258
  %v1286 = vadd.f32 %v1211, %v1260
  %v1287 = vadd.f32 %v1212, %v1262
  %v1288 = vadd.f32 %v1213, %v1266
  %v1289 = vadd.f32 %v1214, %v1268
  %v1290 = vadd.f32 %v1215, %v1270
  %v1291 = vadd.f32 %v1216, %v1272
  %v1292 = vadd.f32 %v1217, %v1276
  %v1293 = vadd.f32 %v1218, %v1278
  %v1294 = vadd.f32 %v1219, %v1280
  %v1295 = vadd.f32 %v1220, %v1282
  %v1297 = vsel %vm160, %v105, 0
  %v1300 = vsel %vm160, %v106, 0
  %v1303 = vsel %vm160, %v107, 0
  %1305 = vmatprep.subr.bf16.mxu0 %v565
  %1306 = vmatpush1.bf16.msra.mxu0 %v564
  %1307 = vmatprep.subr.bf16.mxu0 %v583
  %1308 = vmatpush1.bf16.msra.mxu0 %v580
  %1309 = vmatprep.subr.bf16.mxu0 0
  %1310 = vmatpush1.bf16.msra.mxu0 0
  %1311 = vmatprep.subr.bf16.mxu0 0
  %1312 = vmatpush1.bf16.msra.mxu0 0
  %1313 = vmatprep.subr.bf16.mxu0 0
  %1314 = vmatpush1.bf16.msra.mxu0 0
  %1315 = vmatprep.subr.bf16.mxu0 0
  %1316 = vmatpush1.bf16.msra.mxu0 0
  %1317 = vmatprep.subr.bf16.mxu0 0
  %1318 = vmatpush1.bf16.msra.mxu0 0
  %1319 = vmatprep.subr.bf16.mxu0 0
  %1320 = vmatpush1.bf16.msra.mxu0 0
  %1321 = vmatprep.subr.bf16.mxu0 0
  %1322 = vmatpush1.bf16.msra.mxu0 0
  %1323 = vmatprep.subr.bf16.mxu0 0
  %1324 = vmatpush1.bf16.msra.mxu0 0
  %1325 = vmatprep.subr.bf16.mxu0 0
  %1326 = vmatpush1.bf16.msra.mxu0 0
  %1327 = vmatprep.subr.bf16.mxu0 0
  %1328 = vmatpush1.bf16.msra.mxu0 0
  %1329 = vmatprep.subr.bf16.mxu0 0
  %1330 = vmatpush1.bf16.msra.mxu0 0
  %1331 = vmatprep.subr.bf16.mxu0 0
  %1332 = vmatpush1.bf16.msra.mxu0 0
  %1333 = vmatprep.subr.bf16.mxu0 0
  %1334 = vmatpush1.bf16.msra.mxu0 0
  %1335 = vmatprep.subr.bf16.mxu0 0
  %1336 = vmatpush1.bf16.msra.mxu0 0
  %1337 = vmatprep.mubr.bf16.mxu0 0
  %1338 = vmatmul.mubr.bf16.gmra.mrb[0].mxu0 %v1297
  %v1339 = vpop.f32.mrb[0].mxu0
  %v1340 = vadd.f32 0.0, %v1339
  %v1341 = vpop.f32.mrb[0].mxu0
  %v1342 = vadd.f32 0.0, %v1341
  %v1343 = vpop.f32.mrb[0].mxu0
  %v1344 = vadd.f32 0.0, %v1343
  %v1345 = vpop.f32.mrb[0].mxu0
  %v1346 = vadd.f32 0.0, %v1345
  %1347 = vmatprep.mubr.bf16.mxu0 0
  %1348 = vmatmul.mubr.bf16.gmra.mrb[0].mxu0 %v1300
  %v1349 = vpop.f32.mrb[0].mxu0
  %v1350 = vadd.f32 0.0, %v1349
  %v1351 = vpop.f32.mrb[0].mxu0
  %v1352 = vadd.f32 0.0, %v1351
  %v1353 = vpop.f32.mrb[0].mxu0
  %v1354 = vadd.f32 0.0, %v1353
  %v1355 = vpop.f32.mrb[0].mxu0
  %v1356 = vadd.f32 0.0, %v1355
  %1357 = vmatprep.mubr.bf16.mxu0 0
  %1358 = vmatmul.mubr.bf16.gmra.mrb[0].mxu0 %v1303
  %v1359 = vpop.f32.mrb[0].mxu0
  %v1360 = vadd.f32 0.0, %v1359
  %v1361 = vpop.f32.mrb[0].mxu0
  %v1362 = vadd.f32 0.0, %v1361
  %v1363 = vpop.f32.mrb[0].mxu0
  %v1364 = vadd.f32 0.0, %v1363
  %v1365 = vpop.f32.mrb[0].mxu0
  %v1366 = vadd.f32 0.0, %v1365
  %1367 = vdwg.mxu0
  %v1368 = vadd.f32 %v1284, %v1340
  %v1369 = vadd.f32 %v1285, %v1342
  %v1370 = vadd.f32 %v1286, %v1344
  %v1371 = vadd.f32 %v1287, %v1346
  %v1372 = vadd.f32 %v1288, %v1350
  %v1373 = vadd.f32 %v1289, %v1352
  %v1374 = vadd.f32 %v1290, %v1354
  %v1375 = vadd.f32 %v1291, %v1356
  %v1376 = vadd.f32 %v1292, %v1360
  %v1377 = vadd.f32 %v1293, %v1362
  %v1378 = vadd.f32 %v1294, %v1364
  %v1379 = vadd.f32 %v1295, %v1366
  %1380 = vmatprep.subr.bf16.mxu0 %v155
  %1381 = vmatpush1.bf16.msra.mxu0 %v154
  %1382 = vmatprep.subr.bf16.mxu0 %v175
  %1383 = vmatpush1.bf16.msra.mxu0 %v172
  %1384 = vmatprep.subr.bf16.mxu0 0
  %1385 = vmatpush1.bf16.msra.mxu0 0
  %1386 = vmatprep.subr.bf16.mxu0 0
  %1387 = vmatpush1.bf16.msra.mxu0 0
  %1388 = vmatprep.subr.bf16.mxu0 0
  %1389 = vmatpush1.bf16.msra.mxu0 0
  %1390 = vmatprep.subr.bf16.mxu0 0
  %1391 = vmatpush1.bf16.msra.mxu0 0
  %1392 = vmatprep.subr.bf16.mxu0 0
  %1393 = vmatpush1.bf16.msra.mxu0 0
  %1394 = vmatprep.subr.bf16.mxu0 0
  %1395 = vmatpush1.bf16.msra.mxu0 0
  %1396 = vmatprep.subr.bf16.mxu0 0
  %1397 = vmatpush1.bf16.msra.mxu0 0
  %1398 = vmatprep.subr.bf16.mxu0 0
  %1399 = vmatpush1.bf16.msra.mxu0 0
  %1400 = vmatprep.subr.bf16.mxu0 0
  %1401 = vmatpush1.bf16.msra.mxu0 0
  %1402 = vmatprep.subr.bf16.mxu0 0
  %1403 = vmatpush1.bf16.msra.mxu0 0
  %1404 = vmatprep.subr.bf16.mxu0 0
  %1405 = vmatpush1.bf16.msra.mxu0 0
  %1406 = vmatprep.subr.bf16.mxu0 0
  %1407 = vmatpush1.bf16.msra.mxu0 0
  %1408 = vmatprep.subr.bf16.mxu0 0
  %1409 = vmatpush1.bf16.msra.mxu0 0
  %1410 = vmatprep.subr.bf16.mxu0 0
  %1411 = vmatpush1.bf16.msra.mxu0 0
  %1412 = vmatprep.mubr.bf16.mxu0 0
  %1413 = vmatmul.mubr.bf16.gmra.mrb[0].mxu0 %v571
  %v1414 = vpop.f32.mrb[0].mxu0
  %v1415 = vadd.f32 0.0, %v1414
  %v1416 = vpop.f32.mrb[0].mxu0
  %v1417 = vadd.f32 0.0, %v1416
  %v1418 = vpop.f32.mrb[0].mxu0
  %v1419 = vadd.f32 0.0, %v1418
  %v1420 = vpop.f32.mrb[0].mxu0
  %v1421 = vadd.f32 0.0, %v1420
  %1422 = vmatprep.mubr.bf16.mxu0 0
  %1423 = vmatmul.mubr.bf16.gmra.mrb[0].mxu0 %v574
  %v1424 = vpop.f32.mrb[0].mxu0
  %v1425 = vadd.f32 0.0, %v1424
  %v1426 = vpop.f32.mrb[0].mxu0
  %v1427 = vadd.f32 0.0, %v1426
  %v1428 = vpop.f32.mrb[0].mxu0
  %v1429 = vadd.f32 0.0, %v1428
  %v1430 = vpop.f32.mrb[0].mxu0
  %v1431 = vadd.f32 0.0, %v1430
  %1432 = vmatprep.mubr.bf16.mxu0 0
  %1433 = vmatmul.mubr.bf16.gmra.mrb[0].mxu0 %v577
  %v1434 = vpop.f32.mrb[0].mxu0
  %v1435 = vadd.f32 0.0, %v1434
  %v1436 = vpop.f32.mrb[0].mxu0
  %v1437 = vadd.f32 0.0, %v1436
  %v1438 = vpop.f32.mrb[0].mxu0
  %v1439 = vadd.f32 0.0, %v1438
  %v1440 = vpop.f32.mrb[0].mxu0
  %v1441 = vadd.f32 0.0, %v1440
  %1442 = vdwg.mxu0
  %1443 = vmatprep.subr.bf16.mxu0 %v253
  %1444 = vmatpush1.bf16.msra.mxu0 %v252
  %1445 = vmatprep.subr.bf16.mxu0 %v271
  %1446 = vmatpush1.bf16.msra.mxu0 %v268
  %1447 = vmatprep.subr.bf16.mxu0 0
  %1448 = vmatpush1.bf16.msra.mxu0 0
  %1449 = vmatprep.subr.bf16.mxu0 0
  %1450 = vmatpush1.bf16.msra.mxu0 0
  %1451 = vmatprep.subr.bf16.mxu0 0
  %1452 = vmatpush1.bf16.msra.mxu0 0
  %1453 = vmatprep.subr.bf16.mxu0 0
  %1454 = vmatpush1.bf16.msra.mxu0 0
  %1455 = vmatprep.subr.bf16.mxu0 0
  %1456 = vmatpush1.bf16.msra.mxu0 0
  %1457 = vmatprep.subr.bf16.mxu0 0
  %1458 = vmatpush1.bf16.msra.mxu0 0
  %1459 = vmatprep.subr.bf16.mxu0 0
  %1460 = vmatpush1.bf16.msra.mxu0 0
  %1461 = vmatprep.subr.bf16.mxu0 0
  %1462 = vmatpush1.bf16.msra.mxu0 0
  %1463 = vmatprep.subr.bf16.mxu0 0
  %1464 = vmatpush1.bf16.msra.mxu0 0
  %1465 = vmatprep.subr.bf16.mxu0 0
  %1466 = vmatpush1.bf16.msra.mxu0 0
  %1467 = vmatprep.subr.bf16.mxu0 0
  %1468 = vmatpush1.bf16.msra.mxu0 0
  %1469 = vmatprep.subr.bf16.mxu0 0
  %1470 = vmatpush1.bf16.msra.mxu0 0
  %1471 = vmatprep.subr.bf16.mxu0 0
  %1472 = vmatpush1.bf16.msra.mxu0 0
  %1473 = vmatprep.subr.bf16.mxu0 0
  %1474 = vmatpush1.bf16.msra.mxu0 0
  %1475 = vmatprep.mubr.bf16.mxu0 0
  %1476 = vmatmul.mubr.bf16.gmra.mrb[0].mxu0 %v463
  %v1477 = vpop.f32.mrb[0].mxu0
  %v1478 = vadd.f32 %v1415, %v1477
  %v1479 = vpop.f32.mrb[0].mxu0
  %v1480 = vadd.f32 %v1417, %v1479
  %v1481 = vpop.f32.mrb[0].mxu0
  %v1482 = vadd.f32 %v1419, %v1481
  %v1483 = vpop.f32.mrb[0].mxu0
  %v1484 = vadd.f32 %v1421, %v1483
  %1485 = vmatprep.mubr.bf16.mxu0 0
  %1486 = vmatmul.mubr.bf16.gmra.mrb[0].mxu0 %v466
  %v1487 = vpop.f32.mrb[0].mxu0
  %v1488 = vadd.f32 %v1425, %v1487
  %v1489 = vpop.f32.mrb[0].mxu0
  %v1490 = vadd.f32 %v1427, %v1489
  %v1491 = vpop.f32.mrb[0].mxu0
  %v1492 = vadd.f32 %v1429, %v1491
  %v1493 = vpop.f32.mrb[0].mxu0
  %v1494 = vadd.f32 %v1431, %v1493
  %1495 = vmatprep.mubr.bf16.mxu0 0
  %1496 = vmatmul.mubr.bf16.gmra.mrb[0].mxu0 %v469
  %v1497 = vpop.f32.mrb[0].mxu0
  %v1498 = vadd.f32 %v1435, %v1497
  %v1499 = vpop.f32.mrb[0].mxu0
  %v1500 = vadd.f32 %v1437, %v1499
  %v1501 = vpop.f32.mrb[0].mxu0
  %v1502 = vadd.f32 %v1439, %v1501
  %v1503 = vpop.f32.mrb[0].mxu0
  %v1504 = vadd.f32 %v1441, %v1503
  %1505 = vdwg.mxu0
  %1506 = vmatprep.subr.bf16.mxu0 %v349
  %1507 = vmatpush1.bf16.msra.mxu0 %v348
  %1508 = vmatprep.subr.bf16.mxu0 %v367
  %1509 = vmatpush1.bf16.msra.mxu0 %v364
  %1510 = vmatprep.subr.bf16.mxu0 0
  %1511 = vmatpush1.bf16.msra.mxu0 0
  %1512 = vmatprep.subr.bf16.mxu0 0
  %1513 = vmatpush1.bf16.msra.mxu0 0
  %1514 = vmatprep.subr.bf16.mxu0 0
  %1515 = vmatpush1.bf16.msra.mxu0 0
  %1516 = vmatprep.subr.bf16.mxu0 0
  %1517 = vmatpush1.bf16.msra.mxu0 0
  %1518 = vmatprep.subr.bf16.mxu0 0
  %1519 = vmatpush1.bf16.msra.mxu0 0
  %1520 = vmatprep.subr.bf16.mxu0 0
  %1521 = vmatpush1.bf16.msra.mxu0 0
  %1522 = vmatprep.subr.bf16.mxu0 0
  %1523 = vmatpush1.bf16.msra.mxu0 0
  %1524 = vmatprep.subr.bf16.mxu0 0
  %1525 = vmatpush1.bf16.msra.mxu0 0
  %1526 = vmatprep.subr.bf16.mxu0 0
  %1527 = vmatpush1.bf16.msra.mxu0 0
  %1528 = vmatprep.subr.bf16.mxu0 0
  %1529 = vmatpush1.bf16.msra.mxu0 0
  %1530 = vmatprep.subr.bf16.mxu0 0
  %1531 = vmatpush1.bf16.msra.mxu0 0
  %1532 = vmatprep.subr.bf16.mxu0 0
  %1533 = vmatpush1.bf16.msra.mxu0 0
  %1534 = vmatprep.subr.bf16.mxu0 0
  %1535 = vmatpush1.bf16.msra.mxu0 0
  %1536 = vmatprep.subr.bf16.mxu0 0
  %1537 = vmatpush1.bf16.msra.mxu0 0
  %1538 = vmatprep.mubr.bf16.mxu0 0
  %1539 = vmatmul.mubr.bf16.gmra.mrb[0].mxu0 %v937
  %v1540 = vpop.f32.mrb[0].mxu0
  %v1541 = vadd.f32 0.0, %v1540
  %v1542 = vpop.f32.mrb[0].mxu0
  %v1543 = vadd.f32 0.0, %v1542
  %v1544 = vpop.f32.mrb[0].mxu0
  %v1545 = vadd.f32 0.0, %v1544
  %v1546 = vpop.f32.mrb[0].mxu0
  %v1547 = vadd.f32 0.0, %v1546
  %1548 = vmatprep.mubr.bf16.mxu0 0
  %1549 = vmatmul.mubr.bf16.gmra.mrb[0].mxu0 %v940
  %v1550 = vpop.f32.mrb[0].mxu0
  %v1551 = vadd.f32 0.0, %v1550
  %v1552 = vpop.f32.mrb[0].mxu0
  %v1553 = vadd.f32 0.0, %v1552
  %v1554 = vpop.f32.mrb[0].mxu0
  %v1555 = vadd.f32 0.0, %v1554
  %v1556 = vpop.f32.mrb[0].mxu0
  %v1557 = vadd.f32 0.0, %v1556
  %1558 = vmatprep.mubr.bf16.mxu0 0
  %1559 = vmatmul.mubr.bf16.gmra.mrb[0].mxu0 %v943
  %v1560 = vpop.f32.mrb[0].mxu0
  %v1561 = vadd.f32 0.0, %v1560
  %v1562 = vpop.f32.mrb[0].mxu0
  %v1563 = vadd.f32 0.0, %v1562
  %v1564 = vpop.f32.mrb[0].mxu0
  %v1565 = vadd.f32 0.0, %v1564
  %v1566 = vpop.f32.mrb[0].mxu0
  %v1567 = vadd.f32 0.0, %v1566
  %1568 = vdwg.mxu0
  %v1569 = vadd.f32 %v1478, %v1541
  %v1570 = vadd.f32 %v1480, %v1543
  %v1571 = vadd.f32 %v1482, %v1545
  %v1572 = vadd.f32 %v1484, %v1547
  %v1573 = vadd.f32 %v1488, %v1551
  %v1574 = vadd.f32 %v1490, %v1553
  %v1575 = vadd.f32 %v1492, %v1555
  %v1576 = vadd.f32 %v1494, %v1557
  %v1577 = vadd.f32 %v1498, %v1561
  %v1578 = vadd.f32 %v1500, %v1563
  %v1579 = vadd.f32 %v1502, %v1565
  %v1580 = vadd.f32 %v1504, %v1567
  %1581 = vmatprep.subr.bf16.mxu0 %v457
  %1582 = vmatpush1.bf16.msra.mxu0 %v456
  %1583 = vmatprep.subr.bf16.mxu0 %v475
  %1584 = vmatpush1.bf16.msra.mxu0 %v472
  %1585 = vmatprep.subr.bf16.mxu0 0
  %1586 = vmatpush1.bf16.msra.mxu0 0
  %1587 = vmatprep.subr.bf16.mxu0 0
  %1588 = vmatpush1.bf16.msra.mxu0 0
  %1589 = vmatprep.subr.bf16.mxu0 0
  %1590 = vmatpush1.bf16.msra.mxu0 0
  %1591 = vmatprep.subr.bf16.mxu0 0
  %1592 = vmatpush1.bf16.msra.mxu0 0
  %1593 = vmatprep.subr.bf16.mxu0 0
  %1594 = vmatpush1.bf16.msra.mxu0 0
  %1595 = vmatprep.subr.bf16.mxu0 0
  %1596 = vmatpush1.bf16.msra.mxu0 0
  %1597 = vmatprep.subr.bf16.mxu0 0
  %1598 = vmatpush1.bf16.msra.mxu0 0
  %1599 = vmatprep.subr.bf16.mxu0 0
  %1600 = vmatpush1.bf16.msra.mxu0 0
  %1601 = vmatprep.subr.bf16.mxu0 0
  %1602 = vmatpush1.bf16.msra.mxu0 0
  %1603 = vmatprep.subr.bf16.mxu0 0
  %1604 = vmatpush1.bf16.msra.mxu0 0
  %1605 = vmatprep.subr.bf16.mxu0 0
  %1606 = vmatpush1.bf16.msra.mxu0 0
  %1607 = vmatprep.subr.bf16.mxu0 0
  %1608 = vmatpush1.bf16.msra.mxu0 0
  %1609 = vmatprep.subr.bf16.mxu0 0
  %1610 = vmatpush1.bf16.msra.mxu0 0
  %1611 = vmatprep.subr.bf16.mxu0 0
  %1612 = vmatpush1.bf16.msra.mxu0 0
  %1613 = vmatprep.mubr.bf16.mxu0 0
  %1614 = vmatmul.mubr.bf16.gmra.mrb[0].mxu0 %v1297
  %v1615 = vpop.f32.mrb[0].mxu0
  %v1616 = vadd.f32 0.0, %v1615
  %v1617 = vpop.f32.mrb[0].mxu0
  %v1618 = vadd.f32 0.0, %v1617
  %v1619 = vpop.f32.mrb[0].mxu0
  %v1620 = vadd.f32 0.0, %v1619
  %v1621 = vpop.f32.mrb[0].mxu0
  %v1622 = vadd.f32 0.0, %v1621
  %1623 = vmatprep.mubr.bf16.mxu0 0
  %1624 = vmatmul.mubr.bf16.gmra.mrb[0].mxu0 %v1300
  %v1625 = vpop.f32.mrb[0].mxu0
  %v1626 = vadd.f32 0.0, %v1625
  %v1627 = vpop.f32.mrb[0].mxu0
  %v1628 = vadd.f32 0.0, %v1627
  %v1629 = vpop.f32.mrb[0].mxu0
  %v1630 = vadd.f32 0.0, %v1629
  %v1631 = vpop.f32.mrb[0].mxu0
  %v1632 = vadd.f32 0.0, %v1631
  %1633 = vmatprep.mubr.bf16.mxu0 0
  %1634 = vmatmul.mubr.bf16.gmra.mrb[0].mxu0 %v1303
  %v1635 = vpop.f32.mrb[0].mxu0
  %v1636 = vadd.f32 0.0, %v1635
  %v1637 = vpop.f32.mrb[0].mxu0
  %v1638 = vadd.f32 0.0, %v1637
  %v1639 = vpop.f32.mrb[0].mxu0
  %v1640 = vadd.f32 0.0, %v1639
  %v1641 = vpop.f32.mrb[0].mxu0
  %v1642 = vadd.f32 0.0, %v1641
  %1643 = vdwg.mxu0
  %v1644 = vadd.f32 %v1569, %v1616
  %v1645 = vadd.f32 %v1570, %v1618
  %v1646 = vadd.f32 %v1571, %v1620
  %v1647 = vadd.f32 %v1572, %v1622
  %v1648 = vadd.f32 %v1573, %v1626
  %v1649 = vadd.f32 %v1574, %v1628
  %v1650 = vadd.f32 %v1575, %v1630
  %v1651 = vadd.f32 %v1576, %v1632
  %v1652 = vadd.f32 %v1577, %v1636
  %v1653 = vadd.f32 %v1578, %v1638
  %v1654 = vadd.f32 %v1579, %v1640
  %v1655 = vadd.f32 %v1580, %v1642
  %v1657 = vsel %vm160, %v115, 0
  %v1660 = vsel %vm160, %v116, 0
  %v1663 = vsel %vm160, %v117, 0
  %1665 = vmatprep.subr.bf16.mxu0 %v565
  %1666 = vmatpush1.bf16.msra.mxu0 %v564
  %1667 = vmatprep.subr.bf16.mxu0 %v583
  %1668 = vmatpush1.bf16.msra.mxu0 %v580
  %1669 = vmatprep.subr.bf16.mxu0 0
  %1670 = vmatpush1.bf16.msra.mxu0 0
  %1671 = vmatprep.subr.bf16.mxu0 0
  %1672 = vmatpush1.bf16.msra.mxu0 0
  %1673 = vmatprep.subr.bf16.mxu0 0
  %1674 = vmatpush1.bf16.msra.mxu0 0
  %1675 = vmatprep.subr.bf16.mxu0 0
  %1676 = vmatpush1.bf16.msra.mxu0 0
  %1677 = vmatprep.subr.bf16.mxu0 0
  %1678 = vmatpush1.bf16.msra.mxu0 0
  %1679 = vmatprep.subr.bf16.mxu0 0
  %1680 = vmatpush1.bf16.msra.mxu0 0
  %1681 = vmatprep.subr.bf16.mxu0 0
  %1682 = vmatpush1.bf16.msra.mxu0 0
  %1683 = vmatprep.subr.bf16.mxu0 0
  %1684 = vmatpush1.bf16.msra.mxu0 0
  %1685 = vmatprep.subr.bf16.mxu0 0
  %1686 = vmatpush1.bf16.msra.mxu0 0
  %1687 = vmatprep.subr.bf16.mxu0 0
  %1688 = vmatpush1.bf16.msra.mxu0 0
  %1689 = vmatprep.subr.bf16.mxu0 0
  %1690 = vmatpush1.bf16.msra.mxu0 0
  %1691 = vmatprep.subr.bf16.mxu0 0
  %1692 = vmatpush1.bf16.msra.mxu0 0
  %1693 = vmatprep.subr.bf16.mxu0 0
  %1694 = vmatpush1.bf16.msra.mxu0 0
  %1695 = vmatprep.subr.bf16.mxu0 0
  %1696 = vmatpush1.bf16.msra.mxu0 0
  %1697 = vmatprep.mubr.bf16.mxu0 0
  %1698 = vmatmul.mubr.bf16.gmra.mrb[0].mxu0 %v1657
  %v1699 = vpop.f32.mrb[0].mxu0
  %v1700 = vadd.f32 0.0, %v1699
  %v1701 = vpop.f32.mrb[0].mxu0
  %v1702 = vadd.f32 0.0, %v1701
  %v1703 = vpop.f32.mrb[0].mxu0
  %v1704 = vadd.f32 0.0, %v1703
  %v1705 = vpop.f32.mrb[0].mxu0
  %v1706 = vadd.f32 0.0, %v1705
  %1707 = vmatprep.mubr.bf16.mxu0 0
  %1708 = vmatmul.mubr.bf16.gmra.mrb[0].mxu0 %v1660
  %v1709 = vpop.f32.mrb[0].mxu0
  %v1710 = vadd.f32 0.0, %v1709
  %v1711 = vpop.f32.mrb[0].mxu0
  %v1712 = vadd.f32 0.0, %v1711
  %v1713 = vpop.f32.mrb[0].mxu0
  %v1714 = vadd.f32 0.0, %v1713
  %v1715 = vpop.f32.mrb[0].mxu0
  %v1716 = vadd.f32 0.0, %v1715
  %1717 = vmatprep.mubr.bf16.mxu0 0
  %1718 = vmatmul.mubr.bf16.gmra.mrb[0].mxu0 %v1663
  %v1719 = vpop.f32.mrb[0].mxu0
  %v1720 = vadd.f32 0.0, %v1719
  %v1721 = vpop.f32.mrb[0].mxu0
  %v1722 = vadd.f32 0.0, %v1721
  %v1723 = vpop.f32.mrb[0].mxu0
  %v1724 = vadd.f32 0.0, %v1723
  %v1725 = vpop.f32.mrb[0].mxu0
  %v1726 = vadd.f32 0.0, %v1725
  %1727 = vdwg.mxu0
  %v1728 = vadd.f32 %v1644, %v1700
  %v1729 = vadd.f32 %v1645, %v1702
  %v1730 = vadd.f32 %v1646, %v1704
  %v1731 = vadd.f32 %v1647, %v1706
  %v1732 = vadd.f32 %v1648, %v1710
  %v1733 = vadd.f32 %v1649, %v1712
  %v1734 = vadd.f32 %v1650, %v1714
  %v1735 = vadd.f32 %v1651, %v1716
  %v1736 = vadd.f32 %v1652, %v1720
  %v1737 = vadd.f32 %v1653, %v1722
  %v1738 = vadd.f32 %v1654, %v1724
  %v1739 = vadd.f32 %v1655, %v1726
  %v1740 = vld [vmem:[%s2] sm:$0x1]
  %1753 = vrot.lane.b32.xlu0 %v648, 8
  %v1754 = vpop.permute.xlu0 %1753
  %1755 = vrot.lane.b32.xlu0 %v649, 8
  %v1756 = vpop.permute.xlu0 %1755
  %1757 = vrot.lane.b32.xlu0 %v650, 8
  %v1758 = vpop.permute.xlu0 %1757
  %1759 = vrot.lane.b32.xlu0 %v651, 8
  %v1760 = vpop.permute.xlu0 %1759
  %1761 = vrot.lane.b32.xlu0 %v652, 8
  %v1762 = vpop.permute.xlu0 %1761
  %1763 = vrot.lane.b32.xlu0 %v653, 8
  %v1764 = vpop.permute.xlu0 %1763
  %1765 = vrot.lane.b32.xlu0 %v654, 8
  %v1766 = vpop.permute.xlu0 %1765
  %1767 = vrot.lane.b32.xlu0 %v655, 8
  %v1768 = vpop.permute.xlu0 %1767
  %1769 = vrot.lane.b32.xlu0 %v656, 8
  %v1770 = vpop.permute.xlu0 %1769
  %1771 = vrot.lane.b32.xlu0 %v657, 8
  %v1772 = vpop.permute.xlu0 %1771
  %1773 = vrot.lane.b32.xlu0 %v658, 8
  %v1774 = vpop.permute.xlu0 %1773
  %1775 = vrot.lane.b32.xlu0 %v659, 8
  %v1776 = vpop.permute.xlu0 %1775
  %vm1777 = vcmask 64512
  %v1778 = vsel %vm1777, %v1754, %v1756
  %v1779 = vsel %vm1777, %v1758, %v1760
  %v1780 = vsel %vm1777, %v1762, %v1764
  %v1781 = vsel %vm1777, %v1766, %v1768
  %v1782 = vsel %vm1777, %v1770, %v1772
  %v1783 = vsel %vm1777, %v1774, %v1776
  %v1790 = vmax.f32 %v648, %v1778
  %v1791 = vmax.f32 %v650, %v1779
  %v1792 = vmax.f32 %v652, %v1780
  %v1793 = vmax.f32 %v654, %v1781
  %v1794 = vmax.f32 %v656, %v1782
  %v1795 = vmax.f32 %v658, %v1783
  %1808 = vrot.lane.b32.xlu0 %v1008, 8
  %v1809 = vpop.permute.xlu0 %1808
  %1810 = vrot.lane.b32.xlu0 %v1009, 8
  %v1811 = vpop.permute.xlu0 %1810
  %1812 = vrot.lane.b32.xlu0 %v1010, 8
  %v1813 = vpop.permute.xlu0 %1812
  %1814 = vrot.lane.b32.xlu0 %v1011, 8
  %v1815 = vpop.permute.xlu0 %1814
  %1816 = vrot.lane.b32.xlu0 %v1012, 8
  %v1817 = vpop.permute.xlu0 %1816
  %1818 = vrot.lane.b32.xlu0 %v1013, 8
  %v1819 = vpop.permute.xlu0 %1818
  %1820 = vrot.lane.b32.xlu0 %v1014, 8
  %v1821 = vpop.permute.xlu0 %1820
  %1822 = vrot.lane.b32.xlu0 %v1015, 8
  %v1823 = vpop.permute.xlu0 %1822
  %1824 = vrot.lane.b32.xlu0 %v1016, 8
  %v1825 = vpop.permute.xlu0 %1824
  %1826 = vrot.lane.b32.xlu0 %v1017, 8
  %v1827 = vpop.permute.xlu0 %1826
  %1828 = vrot.lane.b32.xlu0 %v1018, 8
  %v1829 = vpop.permute.xlu0 %1828
  %1830 = vrot.lane.b32.xlu0 %v1019, 8
  %v1831 = vpop.permute.xlu0 %1830
  %v1832 = vsel %vm1777, %v1809, %v1811
  %v1833 = vsel %vm1777, %v1813, %v1815
  %v1834 = vsel %vm1777, %v1817, %v1819
  %v1835 = vsel %vm1777, %v1821, %v1823
  %v1836 = vsel %vm1777, %v1825, %v1827
  %v1837 = vsel %vm1777, %v1829, %v1831
  %v1844 = vmax.f32 %v1008, %v1832
  %v1845 = vmax.f32 %v1010, %v1833
  %v1846 = vmax.f32 %v1012, %v1834
  %v1847 = vmax.f32 %v1014, %v1835
  %v1848 = vmax.f32 %v1016, %v1836
  %v1849 = vmax.f32 %v1018, %v1837
  %v1850 = vmax.f32 %v1790, %v1844
  %v1851 = vmax.f32 %v1791, %v1845
  %v1852 = vmax.f32 %v1792, %v1846
  %v1853 = vmax.f32 %v1793, %v1847
  %v1854 = vmax.f32 %v1794, %v1848
  %v1855 = vmax.f32 %v1795, %v1849
  %v1857 = vlaneseq
  %v1858 = vshrl.u32 %v1857, 7
  %v1859 = vsub.s32 0, %v1858
  %v1860 = vrot.slane %v1740, %v1859
  %v1862 = vadd.f32 %v1850, %v1860
  %v1863 = vadd.f32 %v1851, %v1860
  %v1864 = vadd.f32 %v1852, %v1860
  %v1865 = vadd.f32 %v1853, %v1860
  %v1866 = vadd.f32 %v1854, %v1860
  %v1867 = vadd.f32 %v1855, %v1860
  %v1868 = vmax.f32 %v1862, 0.0
  %v1869 = vmax.f32 %v1863, 0.0
  %v1870 = vmax.f32 %v1864, 0.0
  %v1871 = vmax.f32 %v1865, 0.0
  %v1872 = vmax.f32 %v1866, 0.0
  %v1873 = vmax.f32 %v1867, 0.0
  %1886 = vrot.lane.b32.xlu0 %v1368, 8
  %v1887 = vpop.permute.xlu0 %1886
  %1888 = vrot.lane.b32.xlu0 %v1369, 8
  %v1889 = vpop.permute.xlu0 %1888
  %1890 = vrot.lane.b32.xlu0 %v1370, 8
  %v1891 = vpop.permute.xlu0 %1890
  %1892 = vrot.lane.b32.xlu0 %v1371, 8
  %v1893 = vpop.permute.xlu0 %1892
  %1894 = vrot.lane.b32.xlu0 %v1372, 8
  %v1895 = vpop.permute.xlu0 %1894
  %1896 = vrot.lane.b32.xlu0 %v1373, 8
  %v1897 = vpop.permute.xlu0 %1896
  %1898 = vrot.lane.b32.xlu0 %v1374, 8
  %v1899 = vpop.permute.xlu0 %1898
  %1900 = vrot.lane.b32.xlu0 %v1375, 8
  %v1901 = vpop.permute.xlu0 %1900
  %1902 = vrot.lane.b32.xlu0 %v1376, 8
  %v1903 = vpop.permute.xlu0 %1902
  %1904 = vrot.lane.b32.xlu0 %v1377, 8
  %v1905 = vpop.permute.xlu0 %1904
  %1906 = vrot.lane.b32.xlu0 %v1378, 8
  %v1907 = vpop.permute.xlu0 %1906
  %1908 = vrot.lane.b32.xlu0 %v1379, 8
  %v1909 = vpop.permute.xlu0 %1908
  %v1910 = vsel %vm1777, %v1887, %v1889
  %v1911 = vsel %vm1777, %v1891, %v1893
  %v1912 = vsel %vm1777, %v1895, %v1897
  %v1913 = vsel %vm1777, %v1899, %v1901
  %v1914 = vsel %vm1777, %v1903, %v1905
  %v1915 = vsel %vm1777, %v1907, %v1909
  %v1922 = vmax.f32 %v1368, %v1910
  %v1923 = vmax.f32 %v1370, %v1911
  %v1924 = vmax.f32 %v1372, %v1912
  %v1925 = vmax.f32 %v1374, %v1913
  %v1926 = vmax.f32 %v1376, %v1914
  %v1927 = vmax.f32 %v1378, %v1915
  %1940 = vrot.lane.b32.xlu0 %v1728, 8
  %v1941 = vpop.permute.xlu0 %1940
  %1942 = vrot.lane.b32.xlu0 %v1729, 8
  %v1943 = vpop.permute.xlu0 %1942
  %1944 = vrot.lane.b32.xlu0 %v1730, 8
  %v1945 = vpop.permute.xlu0 %1944
  %1946 = vrot.lane.b32.xlu0 %v1731, 8
  %v1947 = vpop.permute.xlu0 %1946
  %1948 = vrot.lane.b32.xlu0 %v1732, 8
  %v1949 = vpop.permute.xlu0 %1948
  %1950 = vrot.lane.b32.xlu0 %v1733, 8
  %v1951 = vpop.permute.xlu0 %1950
  %1952 = vrot.lane.b32.xlu0 %v1734, 8
  %v1953 = vpop.permute.xlu0 %1952
  %1954 = vrot.lane.b32.xlu0 %v1735, 8
  %v1955 = vpop.permute.xlu0 %1954
  %1956 = vrot.lane.b32.xlu0 %v1736, 8
  %v1957 = vpop.permute.xlu0 %1956
  %1958 = vrot.lane.b32.xlu0 %v1737, 8
  %v1959 = vpop.permute.xlu0 %1958
  %1960 = vrot.lane.b32.xlu0 %v1738, 8
  %v1961 = vpop.permute.xlu0 %1960
  %1962 = vrot.lane.b32.xlu0 %v1739, 8
  %v1963 = vpop.permute.xlu0 %1962
  %v1964 = vsel %vm1777, %v1941, %v1943
  %v1965 = vsel %vm1777, %v1945, %v1947
  %v1966 = vsel %vm1777, %v1949, %v1951
  %v1967 = vsel %vm1777, %v1953, %v1955
  %v1968 = vsel %vm1777, %v1957, %v1959
  %v1969 = vsel %vm1777, %v1961, %v1963
  %v1976 = vmax.f32 %v1728, %v1964
  %v1977 = vmax.f32 %v1730, %v1965
  %v1978 = vmax.f32 %v1732, %v1966
  %v1979 = vmax.f32 %v1734, %v1967
  %v1980 = vmax.f32 %v1736, %v1968
  %v1981 = vmax.f32 %v1738, %v1969
  %v1982 = vmax.f32 %v1922, %v1976
  %v1983 = vmax.f32 %v1923, %v1977
  %v1984 = vmax.f32 %v1924, %v1978
  %v1985 = vmax.f32 %v1925, %v1979
  %v1986 = vmax.f32 %v1926, %v1980
  %v1987 = vmax.f32 %v1927, %v1981
  %v1988 = vadd.f32 %v1982, %v1860
  %v1989 = vadd.f32 %v1983, %v1860
  %v1990 = vadd.f32 %v1984, %v1860
  %v1991 = vadd.f32 %v1985, %v1860
  %v1992 = vadd.f32 %v1986, %v1860
  %v1993 = vadd.f32 %v1987, %v1860
  %v1994 = vmax.f32 %v1988, 0.0
  %v1995 = vmax.f32 %v1989, 0.0
  %v1996 = vmax.f32 %v1990, 0.0
  %v1997 = vmax.f32 %v1991, 0.0
  %v1998 = vmax.f32 %v1992, 0.0
  %v1999 = vmax.f32 %v1993, 0.0
  %v2000 = vld [vmem:[%s5] sm:$0xff]
  %v2001 = vld [vmem:[%s5 + $0x8] sm:$0xff]
  %v2002 = vld [vmem:[%s5 + $0x10] sm:$0xff]
  %v2003 = vld [vmem:[%s5 + $0x18] sm:$0xff]
  %vm2004 = vcmask 392192
  %v2006 = vsel %vm2004, %v2000, 0
  %v2009 = vsel %vm2004, %v2001, 0
  %v2012 = vsel %vm2004, %v2002, 0
  %v2015 = vsel %vm2004, %v2003, 0
  %2017 = vmatprep.subr.mxu0 0.0
  %2018 = vmatpush1.msra.mxu0 %v1868
  %2019 = vmatprep.subr.mxu0 0.0
  %2020 = vmatpush1.msra.mxu0 %v1869
  %2021 = vmatprep.subr.mxu0 0.0
  %2022 = vmatpush1.msra.mxu0 %v1870
  %2023 = vmatprep.subr.mxu0 0.0
  %2024 = vmatpush1.msra.mxu0 %v1871
  %2025 = vmatprep.subr.mxu0 0.0
  %2026 = vmatpush1.msra.mxu0 %v1872
  %2027 = vmatprep.subr.mxu0 0.0
  %2028 = vmatpush1.msra.mxu0 %v1873
  %2029 = vmatprep.subr.mxu0 0.0
  %2030 = vmatpush1.msra.mxu0 0.0
  %2031 = vmatprep.subr.mxu0 0.0
  %2032 = vmatpush1.msra.mxu0 0.0
  %2033 = vmatprep.subr.mxu0 0.0
  %2034 = vmatpush1.msra.mxu0 0.0
  %2035 = vmatprep.subr.mxu0 0.0
  %2036 = vmatpush1.msra.mxu0 0.0
  %2037 = vmatprep.subr.mxu0 0.0
  %2038 = vmatpush1.msra.mxu0 0.0
  %2039 = vmatprep.subr.mxu0 0.0
  %2040 = vmatpush1.msra.mxu0 0.0
  %2041 = vmatprep.subr.mxu0 0.0
  %2042 = vmatpush1.msra.mxu0 0.0
  %2043 = vmatprep.subr.mxu0 0.0
  %2044 = vmatpush1.msra.mxu0 0.0
  %2045 = vmatprep.subr.mxu0 0.0
  %2046 = vmatpush1.msra.mxu0 0.0
  %2047 = vmatprep.subr.mxu0 0.0
  %2048 = vmatpush1.msra.mxu0 0.0
  %2049 = vmatprep.subr.mxu0 0.0
  %2050 = vmatpush1.msra.mxu0 0.0
  %2051 = vmatprep.subr.mxu0 0.0
  %2052 = vmatpush1.msra.mxu0 0.0
  %2053 = vmatprep.subr.mxu0 0.0
  %2054 = vmatpush1.msra.mxu0 0.0
  %2055 = vmatprep.subr.mxu0 0.0
  %2056 = vmatpush1.msra.mxu0 0.0
  %2057 = vmatprep.subr.mxu0 0.0
  %2058 = vmatpush1.msra.mxu0 0.0
  %2059 = vmatprep.subr.mxu0 0.0
  %2060 = vmatpush1.msra.mxu0 0.0
  %2061 = vmatprep.subr.mxu0 0.0
  %2062 = vmatpush1.msra.mxu0 0.0
  %2063 = vmatprep.subr.mxu0 0.0
  %2064 = vmatpush1.msra.mxu0 0.0
  %2065 = vmatprep.subr.mxu0 0.0
  %2066 = vmatpush1.msra.mxu0 0.0
  %2067 = vmatprep.subr.mxu0 0.0
  %2068 = vmatpush1.msra.mxu0 0.0
  %2069 = vmatprep.subr.mxu0 0.0
  %2070 = vmatpush1.msra.mxu0 0.0
  %2071 = vmatprep.subr.mxu0 0.0
  %2072 = vmatpush1.msra.mxu0 0.0
  %2073 = vmatprep.subr.mxu0 0.0
  %2074 = vmatpush1.msra.mxu0 0.0
  %2075 = vmatprep.subr.mxu0 0.0
  %2076 = vmatpush1.msra.mxu0 0.0
  %2077 = vmatprep.subr.mxu0 0.0
  %2078 = vmatpush1.msra.mxu0 0.0
  %2079 = vmatprep.subr.mxu0 0.0
  %2080 = vmatpush1.msra.mxu0 0.0
  %2081 = vmatprep.mubr.f32.mxu0 0.0
  %2082 = vmatmul.mubr.f32.gmra.mrb[0].mxu0 %v2006
  %v2083 = vpop.f32.mrb[0].mxu0
  %v2084 = vadd.f32 0.0, %v2083
  %v2085 = vpop.f32.mrb[0].mxu0
  %2086 = vmatprep.mubr.f32.mxu0 0.0
  %2087 = vmatmul.mubr.f32.gmra.mrb[0].mxu0 %v2009
  %v2088 = vpop.f32.mrb[0].mxu0
  %v2089 = vadd.f32 0.0, %v2088
  %v2090 = vpop.f32.mrb[0].mxu0
  %2091 = vmatprep.mubr.f32.mxu0 0.0
  %2092 = vmatmul.mubr.f32.gmra.mrb[0].mxu0 %v2012
  %v2093 = vpop.f32.mrb[0].mxu0
  %v2094 = vadd.f32 0.0, %v2093
  %v2095 = vpop.f32.mrb[0].mxu0
  %2096 = vmatprep.mubr.f32.mxu0 0.0
  %2097 = vmatmul.mubr.f32.gmra.mrb[0].mxu0 %v2015
  %v2098 = vpop.f32.mrb[0].mxu0
  %v2099 = vadd.f32 0.0, %v2098
  %v2100 = vpop.f32.mrb[0].mxu0
  %2101 = vdwg.mxu0
  %v2102 = vpack.c.bf16 %v2089, %v2084
  %v2103 = vpack.c.bf16 %v2099, %v2094
  %2104 = vmatprep.subr.mxu0 0.0
  %2105 = vmatpush1.msra.mxu0 %v1994
  %2106 = vmatprep.subr.mxu0 0.0
  %2107 = vmatpush1.msra.mxu0 %v1995
  %2108 = vmatprep.subr.mxu0 0.0
  %2109 = vmatpush1.msra.mxu0 %v1996
  %2110 = vmatprep.subr.mxu0 0.0
  %2111 = vmatpush1.msra.mxu0 %v1997
  %2112 = vmatprep.subr.mxu0 0.0
  %2113 = vmatpush1.msra.mxu0 %v1998
  %2114 = vmatprep.subr.mxu0 0.0
  %2115 = vmatpush1.msra.mxu0 %v1999
  %2116 = vmatprep.subr.mxu0 0.0
  %2117 = vmatpush1.msra.mxu0 0.0
  %2118 = vmatprep.subr.mxu0 0.0
  %2119 = vmatpush1.msra.mxu0 0.0
  %2120 = vmatprep.subr.mxu0 0.0
  %2121 = vmatpush1.msra.mxu0 0.0
  %2122 = vmatprep.subr.mxu0 0.0
  %2123 = vmatpush1.msra.mxu0 0.0
  %2124 = vmatprep.subr.mxu0 0.0
  %2125 = vmatpush1.msra.mxu0 0.0
  %2126 = vmatprep.subr.mxu0 0.0
  %2127 = vmatpush1.msra.mxu0 0.0
  %2128 = vmatprep.subr.mxu0 0.0
  %2129 = vmatpush1.msra.mxu0 0.0
  %2130 = vmatprep.subr.mxu0 0.0
  %2131 = vmatpush1.msra.mxu0 0.0
  %2132 = vmatprep.subr.mxu0 0.0
  %2133 = vmatpush1.msra.mxu0 0.0
  %2134 = vmatprep.subr.mxu0 0.0
  %2135 = vmatpush1.msra.mxu0 0.0
  %2136 = vmatprep.subr.mxu0 0.0
  %2137 = vmatpush1.msra.mxu0 0.0
  %2138 = vmatprep.subr.mxu0 0.0
  %2139 = vmatpush1.msra.mxu0 0.0
  %2140 = vmatprep.subr.mxu0 0.0
  %2141 = vmatpush1.msra.mxu0 0.0
  %2142 = vmatprep.subr.mxu0 0.0
  %2143 = vmatpush1.msra.mxu0 0.0
  %2144 = vmatprep.subr.mxu0 0.0
  %2145 = vmatpush1.msra.mxu0 0.0
  %2146 = vmatprep.subr.mxu0 0.0
  %2147 = vmatpush1.msra.mxu0 0.0
  %2148 = vmatprep.subr.mxu0 0.0
  %2149 = vmatpush1.msra.mxu0 0.0
  %2150 = vmatprep.subr.mxu0 0.0
  %2151 = vmatpush1.msra.mxu0 0.0
  %2152 = vmatprep.subr.mxu0 0.0
  %2153 = vmatpush1.msra.mxu0 0.0
  %2154 = vmatprep.subr.mxu0 0.0
  %2155 = vmatpush1.msra.mxu0 0.0
  %2156 = vmatprep.subr.mxu0 0.0
  %2157 = vmatpush1.msra.mxu0 0.0
  %2158 = vmatprep.subr.mxu0 0.0
  %2159 = vmatpush1.msra.mxu0 0.0
  %2160 = vmatprep.subr.mxu0 0.0
  %2161 = vmatpush1.msra.mxu0 0.0
  %2162 = vmatprep.subr.mxu0 0.0
  %2163 = vmatpush1.msra.mxu0 0.0
  %2164 = vmatprep.subr.mxu0 0.0
  %2165 = vmatpush1.msra.mxu0 0.0
  %2166 = vmatprep.subr.mxu0 0.0
  %2167 = vmatpush1.msra.mxu0 0.0
  %2168 = vmatprep.mubr.f32.mxu0 0.0
  %2169 = vmatmul.mubr.f32.gmra.mrb[0].mxu0 %v2006
  %v2170 = vpop.f32.mrb[0].mxu0
  %v2171 = vadd.f32 0.0, %v2170
  %v2172 = vpop.f32.mrb[0].mxu0
  %2173 = vmatprep.mubr.f32.mxu0 0.0
  %2174 = vmatmul.mubr.f32.gmra.mrb[0].mxu0 %v2009
  %v2175 = vpop.f32.mrb[0].mxu0
  %v2176 = vadd.f32 0.0, %v2175
  %v2177 = vpop.f32.mrb[0].mxu0
  %2178 = vmatprep.mubr.f32.mxu0 0.0
  %2179 = vmatmul.mubr.f32.gmra.mrb[0].mxu0 %v2012
  %v2180 = vpop.f32.mrb[0].mxu0
  %v2181 = vadd.f32 0.0, %v2180
  %v2182 = vpop.f32.mrb[0].mxu0
  %2183 = vmatprep.mubr.f32.mxu0 0.0
  %2184 = vmatmul.mubr.f32.gmra.mrb[0].mxu0 %v2015
  %v2185 = vpop.f32.mrb[0].mxu0
  %v2186 = vadd.f32 0.0, %v2185
  %v2187 = vpop.f32.mrb[0].mxu0
  %2188 = vdwg.mxu0
  %v2189 = vpack.c.bf16 %v2176, %v2171
  %v2190 = vpack.c.bf16 %v2186, %v2181
  %s2191 = scalar_lea.vmem %s5, 32
  %v2192 = vld [vmem:[%s2191] sm:$0xff]
  %v2193 = vld [vmem:[%s2191 + $0x8] sm:$0xff]
  %v2194 = vld [vmem:[%s2191 + $0x10] sm:$0xff]
  %v2195 = vld [vmem:[%s2191 + $0x18] sm:$0xff]
  %v2197 = vsel %vm2004, %v2192, 0
  %v2200 = vsel %vm2004, %v2193, 0
  %v2203 = vsel %vm2004, %v2194, 0
  %v2206 = vsel %vm2004, %v2195, 0
  %2208 = vmatprep.subr.mxu0 0.0
  %2209 = vmatpush1.msra.mxu0 %v1868
  %2210 = vmatprep.subr.mxu0 0.0
  %2211 = vmatpush1.msra.mxu0 %v1869
  %2212 = vmatprep.subr.mxu0 0.0
  %2213 = vmatpush1.msra.mxu0 %v1870
  %2214 = vmatprep.subr.mxu0 0.0
  %2215 = vmatpush1.msra.mxu0 %v1871
  %2216 = vmatprep.subr.mxu0 0.0
  %2217 = vmatpush1.msra.mxu0 %v1872
  %2218 = vmatprep.subr.mxu0 0.0
  %2219 = vmatpush1.msra.mxu0 %v1873
  %2220 = vmatprep.subr.mxu0 0.0
  %2221 = vmatpush1.msra.mxu0 0.0
  %2222 = vmatprep.subr.mxu0 0.0
  %2223 = vmatpush1.msra.mxu0 0.0
  %2224 = vmatprep.subr.mxu0 0.0
  %2225 = vmatpush1.msra.mxu0 0.0
  %2226 = vmatprep.subr.mxu0 0.0
  %2227 = vmatpush1.msra.mxu0 0.0
  %2228 = vmatprep.subr.mxu0 0.0
  %2229 = vmatpush1.msra.mxu0 0.0
  %2230 = vmatprep.subr.mxu0 0.0
  %2231 = vmatpush1.msra.mxu0 0.0
  %2232 = vmatprep.subr.mxu0 0.0
  %2233 = vmatpush1.msra.mxu0 0.0
  %2234 = vmatprep.subr.mxu0 0.0
  %2235 = vmatpush1.msra.mxu0 0.0
  %2236 = vmatprep.subr.mxu0 0.0
  %2237 = vmatpush1.msra.mxu0 0.0
  %2238 = vmatprep.subr.mxu0 0.0
  %2239 = vmatpush1.msra.mxu0 0.0
  %2240 = vmatprep.subr.mxu0 0.0
  %2241 = vmatpush1.msra.mxu0 0.0
  %2242 = vmatprep.subr.mxu0 0.0
  %2243 = vmatpush1.msra.mxu0 0.0
  %2244 = vmatprep.subr.mxu0 0.0
  %2245 = vmatpush1.msra.mxu0 0.0
  %2246 = vmatprep.subr.mxu0 0.0
  %2247 = vmatpush1.msra.mxu0 0.0
  %2248 = vmatprep.subr.mxu0 0.0
  %2249 = vmatpush1.msra.mxu0 0.0
  %2250 = vmatprep.subr.mxu0 0.0
  %2251 = vmatpush1.msra.mxu0 0.0
  %2252 = vmatprep.subr.mxu0 0.0
  %2253 = vmatpush1.msra.mxu0 0.0
  %2254 = vmatprep.subr.mxu0 0.0
  %2255 = vmatpush1.msra.mxu0 0.0
  %2256 = vmatprep.subr.mxu0 0.0
  %2257 = vmatpush1.msra.mxu0 0.0
  %2258 = vmatprep.subr.mxu0 0.0
  %2259 = vmatpush1.msra.mxu0 0.0
  %2260 = vmatprep.subr.mxu0 0.0
  %2261 = vmatpush1.msra.mxu0 0.0
  %2262 = vmatprep.subr.mxu0 0.0
  %2263 = vmatpush1.msra.mxu0 0.0
  %2264 = vmatprep.subr.mxu0 0.0
  %2265 = vmatpush1.msra.mxu0 0.0
  %2266 = vmatprep.subr.mxu0 0.0
  %2267 = vmatpush1.msra.mxu0 0.0
  %2268 = vmatprep.subr.mxu0 0.0
  %2269 = vmatpush1.msra.mxu0 0.0
  %2270 = vmatprep.subr.mxu0 0.0
  %2271 = vmatpush1.msra.mxu0 0.0
  %2272 = vmatprep.mubr.f32.mxu0 0.0
  %2273 = vmatmul.mubr.f32.gmra.mrb[0].mxu0 %v2197
  %v2274 = vpop.f32.mrb[0].mxu0
  %v2275 = vadd.f32 0.0, %v2274
  %v2276 = vpop.f32.mrb[0].mxu0
  %2277 = vmatprep.mubr.f32.mxu0 0.0
  %2278 = vmatmul.mubr.f32.gmra.mrb[0].mxu0 %v2200
  %v2279 = vpop.f32.mrb[0].mxu0
  %v2280 = vadd.f32 0.0, %v2279
  %v2281 = vpop.f32.mrb[0].mxu0
  %2282 = vmatprep.mubr.f32.mxu0 0.0
  %2283 = vmatmul.mubr.f32.gmra.mrb[0].mxu0 %v2203
  %v2284 = vpop.f32.mrb[0].mxu0
  %v2285 = vadd.f32 0.0, %v2284
  %v2286 = vpop.f32.mrb[0].mxu0
  %2287 = vmatprep.mubr.f32.mxu0 0.0
  %2288 = vmatmul.mubr.f32.gmra.mrb[0].mxu0 %v2206
  %v2289 = vpop.f32.mrb[0].mxu0
  %v2290 = vadd.f32 0.0, %v2289
  %v2291 = vpop.f32.mrb[0].mxu0
  %2292 = vdwg.mxu0
  %v2293 = vpack.c.bf16 %v2280, %v2275
  %v2294 = vpack.c.bf16 %v2290, %v2285
  %2295 = vmatprep.subr.mxu0 0.0
  %2296 = vmatpush1.msra.mxu0 %v1994
  %2297 = vmatprep.subr.mxu0 0.0
  %2298 = vmatpush1.msra.mxu0 %v1995
  %2299 = vmatprep.subr.mxu0 0.0
  %2300 = vmatpush1.msra.mxu0 %v1996
  %2301 = vmatprep.subr.mxu0 0.0
  %2302 = vmatpush1.msra.mxu0 %v1997
  %2303 = vmatprep.subr.mxu0 0.0
  %2304 = vmatpush1.msra.mxu0 %v1998
  %2305 = vmatprep.subr.mxu0 0.0
  %2306 = vmatpush1.msra.mxu0 %v1999
  %2307 = vmatprep.subr.mxu0 0.0
  %2308 = vmatpush1.msra.mxu0 0.0
  %2309 = vmatprep.subr.mxu0 0.0
  %2310 = vmatpush1.msra.mxu0 0.0
  %2311 = vmatprep.subr.mxu0 0.0
  %2312 = vmatpush1.msra.mxu0 0.0
  %2313 = vmatprep.subr.mxu0 0.0
  %2314 = vmatpush1.msra.mxu0 0.0
  %2315 = vmatprep.subr.mxu0 0.0
  %2316 = vmatpush1.msra.mxu0 0.0
  %2317 = vmatprep.subr.mxu0 0.0
  %2318 = vmatpush1.msra.mxu0 0.0
  %2319 = vmatprep.subr.mxu0 0.0
  %2320 = vmatpush1.msra.mxu0 0.0
  %2321 = vmatprep.subr.mxu0 0.0
  %2322 = vmatpush1.msra.mxu0 0.0
  %2323 = vmatprep.subr.mxu0 0.0
  %2324 = vmatpush1.msra.mxu0 0.0
  %2325 = vmatprep.subr.mxu0 0.0
  %2326 = vmatpush1.msra.mxu0 0.0
  %2327 = vmatprep.subr.mxu0 0.0
  %2328 = vmatpush1.msra.mxu0 0.0
  %2329 = vmatprep.subr.mxu0 0.0
  %2330 = vmatpush1.msra.mxu0 0.0
  %2331 = vmatprep.subr.mxu0 0.0
  %2332 = vmatpush1.msra.mxu0 0.0
  %2333 = vmatprep.subr.mxu0 0.0
  %2334 = vmatpush1.msra.mxu0 0.0
  %2335 = vmatprep.subr.mxu0 0.0
  %2336 = vmatpush1.msra.mxu0 0.0
  %2337 = vmatprep.subr.mxu0 0.0
  %2338 = vmatpush1.msra.mxu0 0.0
  %2339 = vmatprep.subr.mxu0 0.0
  %2340 = vmatpush1.msra.mxu0 0.0
  %2341 = vmatprep.subr.mxu0 0.0
  %2342 = vmatpush1.msra.mxu0 0.0
  %2343 = vmatprep.subr.mxu0 0.0
  %2344 = vmatpush1.msra.mxu0 0.0
  %2345 = vmatprep.subr.mxu0 0.0
  %2346 = vmatpush1.msra.mxu0 0.0
  %2347 = vmatprep.subr.mxu0 0.0
  %2348 = vmatpush1.msra.mxu0 0.0
  %2349 = vmatprep.subr.mxu0 0.0
  %2350 = vmatpush1.msra.mxu0 0.0
  %2351 = vmatprep.subr.mxu0 0.0
  %2352 = vmatpush1.msra.mxu0 0.0
  %2353 = vmatprep.subr.mxu0 0.0
  %2354 = vmatpush1.msra.mxu0 0.0
  %2355 = vmatprep.subr.mxu0 0.0
  %2356 = vmatpush1.msra.mxu0 0.0
  %2357 = vmatprep.subr.mxu0 0.0
  %2358 = vmatpush1.msra.mxu0 0.0
  %2359 = vmatprep.mubr.f32.mxu0 0.0
  %2360 = vmatmul.mubr.f32.gmra.mrb[0].mxu0 %v2197
  %v2361 = vpop.f32.mrb[0].mxu0
  %v2362 = vadd.f32 0.0, %v2361
  %v2363 = vpop.f32.mrb[0].mxu0
  %2364 = vmatprep.mubr.f32.mxu0 0.0
  %2365 = vmatmul.mubr.f32.gmra.mrb[0].mxu0 %v2200
  %v2366 = vpop.f32.mrb[0].mxu0
  %v2367 = vadd.f32 0.0, %v2366
  %v2368 = vpop.f32.mrb[0].mxu0
  %2369 = vmatprep.mubr.f32.mxu0 0.0
  %2370 = vmatmul.mubr.f32.gmra.mrb[0].mxu0 %v2203
  %v2371 = vpop.f32.mrb[0].mxu0
  %v2372 = vadd.f32 0.0, %v2371
  %v2373 = vpop.f32.mrb[0].mxu0
  %2374 = vmatprep.mubr.f32.mxu0 0.0
  %2375 = vmatmul.mubr.f32.gmra.mrb[0].mxu0 %v2206
  %v2376 = vpop.f32.mrb[0].mxu0
  %v2377 = vadd.f32 0.0, %v2376
  %v2378 = vpop.f32.mrb[0].mxu0
  %2379 = vdwg.mxu0
  %v2380 = vpack.c.bf16 %v2367, %v2362
  %v2381 = vpack.c.bf16 %v2377, %v2372
  %s2382 = scalar_lea.vmem %s5, 64
  %v2383 = vld [vmem:[%s2382] sm:$0xff]
  %v2384 = vld [vmem:[%s2382 + $0x8] sm:$0xff]
  %v2385 = vld [vmem:[%s2382 + $0x10] sm:$0xff]
  %v2386 = vld [vmem:[%s2382 + $0x18] sm:$0xff]
  %v2388 = vsel %vm2004, %v2383, 0
  %v2391 = vsel %vm2004, %v2384, 0
  %v2394 = vsel %vm2004, %v2385, 0
  %v2397 = vsel %vm2004, %v2386, 0
  %2399 = vmatprep.subr.mxu0 0.0
  %2400 = vmatpush1.msra.mxu0 %v1868
  %2401 = vmatprep.subr.mxu0 0.0
  %2402 = vmatpush1.msra.mxu0 %v1869
  %2403 = vmatprep.subr.mxu0 0.0
  %2404 = vmatpush1.msra.mxu0 %v1870
  %2405 = vmatprep.subr.mxu0 0.0
  %2406 = vmatpush1.msra.mxu0 %v1871
  %2407 = vmatprep.subr.mxu0 0.0
  %2408 = vmatpush1.msra.mxu0 %v1872
  %2409 = vmatprep.subr.mxu0 0.0
  %2410 = vmatpush1.msra.mxu0 %v1873
  %2411 = vmatprep.subr.mxu0 0.0
  %2412 = vmatpush1.msra.mxu0 0.0
  %2413 = vmatprep.subr.mxu0 0.0
  %2414 = vmatpush1.msra.mxu0 0.0
  %2415 = vmatprep.subr.mxu0 0.0
  %2416 = vmatpush1.msra.mxu0 0.0
  %2417 = vmatprep.subr.mxu0 0.0
  %2418 = vmatpush1.msra.mxu0 0.0
  %2419 = vmatprep.subr.mxu0 0.0
  %2420 = vmatpush1.msra.mxu0 0.0
  %2421 = vmatprep.subr.mxu0 0.0
  %2422 = vmatpush1.msra.mxu0 0.0
  %2423 = vmatprep.subr.mxu0 0.0
  %2424 = vmatpush1.msra.mxu0 0.0
  %2425 = vmatprep.subr.mxu0 0.0
  %2426 = vmatpush1.msra.mxu0 0.0
  %2427 = vmatprep.subr.mxu0 0.0
  %2428 = vmatpush1.msra.mxu0 0.0
  %2429 = vmatprep.subr.mxu0 0.0
  %2430 = vmatpush1.msra.mxu0 0.0
  %2431 = vmatprep.subr.mxu0 0.0
  %2432 = vmatpush1.msra.mxu0 0.0
  %2433 = vmatprep.subr.mxu0 0.0
  %2434 = vmatpush1.msra.mxu0 0.0
  %2435 = vmatprep.subr.mxu0 0.0
  %2436 = vmatpush1.msra.mxu0 0.0
  %2437 = vmatprep.subr.mxu0 0.0
  %2438 = vmatpush1.msra.mxu0 0.0
  %2439 = vmatprep.subr.mxu0 0.0
  %2440 = vmatpush1.msra.mxu0 0.0
  %2441 = vmatprep.subr.mxu0 0.0
  %2442 = vmatpush1.msra.mxu0 0.0
  %2443 = vmatprep.subr.mxu0 0.0
  %2444 = vmatpush1.msra.mxu0 0.0
  %2445 = vmatprep.subr.mxu0 0.0
  %2446 = vmatpush1.msra.mxu0 0.0
  %2447 = vmatprep.subr.mxu0 0.0
  %2448 = vmatpush1.msra.mxu0 0.0
  %2449 = vmatprep.subr.mxu0 0.0
  %2450 = vmatpush1.msra.mxu0 0.0
  %2451 = vmatprep.subr.mxu0 0.0
  %2452 = vmatpush1.msra.mxu0 0.0
  %2453 = vmatprep.subr.mxu0 0.0
  %2454 = vmatpush1.msra.mxu0 0.0
  %2455 = vmatprep.subr.mxu0 0.0
  %2456 = vmatpush1.msra.mxu0 0.0
  %2457 = vmatprep.subr.mxu0 0.0
  %2458 = vmatpush1.msra.mxu0 0.0
  %2459 = vmatprep.subr.mxu0 0.0
  %2460 = vmatpush1.msra.mxu0 0.0
  %2461 = vmatprep.subr.mxu0 0.0
  %2462 = vmatpush1.msra.mxu0 0.0
  %2463 = vmatprep.mubr.f32.mxu0 0.0
  %2464 = vmatmul.mubr.f32.gmra.mrb[0].mxu0 %v2388
  %v2465 = vpop.f32.mrb[0].mxu0
  %v2466 = vadd.f32 0.0, %v2465
  %v2467 = vpop.f32.mrb[0].mxu0
  %2468 = vmatprep.mubr.f32.mxu0 0.0
  %2469 = vmatmul.mubr.f32.gmra.mrb[0].mxu0 %v2391
  %v2470 = vpop.f32.mrb[0].mxu0
  %v2471 = vadd.f32 0.0, %v2470
  %v2472 = vpop.f32.mrb[0].mxu0
  %2473 = vmatprep.mubr.f32.mxu0 0.0
  %2474 = vmatmul.mubr.f32.gmra.mrb[0].mxu0 %v2394
  %v2475 = vpop.f32.mrb[0].mxu0
  %v2476 = vadd.f32 0.0, %v2475
  %v2477 = vpop.f32.mrb[0].mxu0
  %2478 = vmatprep.mubr.f32.mxu0 0.0
  %2479 = vmatmul.mubr.f32.gmra.mrb[0].mxu0 %v2397
  %v2480 = vpop.f32.mrb[0].mxu0
  %v2481 = vadd.f32 0.0, %v2480
  %v2482 = vpop.f32.mrb[0].mxu0
  %2483 = vdwg.mxu0
  %v2484 = vpack.c.bf16 %v2471, %v2466
  %v2485 = vpack.c.bf16 %v2481, %v2476
  %2486 = vmatprep.subr.mxu0 0.0
  %2487 = vmatpush1.msra.mxu0 %v1994
  %2488 = vmatprep.subr.mxu0 0.0
  %2489 = vmatpush1.msra.mxu0 %v1995
  %2490 = vmatprep.subr.mxu0 0.0
  %2491 = vmatpush1.msra.mxu0 %v1996
  %2492 = vmatprep.subr.mxu0 0.0
  %2493 = vmatpush1.msra.mxu0 %v1997
  %2494 = vmatprep.subr.mxu0 0.0
  %2495 = vmatpush1.msra.mxu0 %v1998
  %2496 = vmatprep.subr.mxu0 0.0
  %2497 = vmatpush1.msra.mxu0 %v1999
  %2498 = vmatprep.subr.mxu0 0.0
  %2499 = vmatpush1.msra.mxu0 0.0
  %2500 = vmatprep.subr.mxu0 0.0
  %2501 = vmatpush1.msra.mxu0 0.0
  %2502 = vmatprep.subr.mxu0 0.0
  %2503 = vmatpush1.msra.mxu0 0.0
  %2504 = vmatprep.subr.mxu0 0.0
  %2505 = vmatpush1.msra.mxu0 0.0
  %2506 = vmatprep.subr.mxu0 0.0
  %2507 = vmatpush1.msra.mxu0 0.0
  %2508 = vmatprep.subr.mxu0 0.0
  %2509 = vmatpush1.msra.mxu0 0.0
  %2510 = vmatprep.subr.mxu0 0.0
  %2511 = vmatpush1.msra.mxu0 0.0
  %2512 = vmatprep.subr.mxu0 0.0
  %2513 = vmatpush1.msra.mxu0 0.0
  %2514 = vmatprep.subr.mxu0 0.0
  %2515 = vmatpush1.msra.mxu0 0.0
  %2516 = vmatprep.subr.mxu0 0.0
  %2517 = vmatpush1.msra.mxu0 0.0
  %2518 = vmatprep.subr.mxu0 0.0
  %2519 = vmatpush1.msra.mxu0 0.0
  %2520 = vmatprep.subr.mxu0 0.0
  %2521 = vmatpush1.msra.mxu0 0.0
  %2522 = vmatprep.subr.mxu0 0.0
  %2523 = vmatpush1.msra.mxu0 0.0
  %2524 = vmatprep.subr.mxu0 0.0
  %2525 = vmatpush1.msra.mxu0 0.0
  %2526 = vmatprep.subr.mxu0 0.0
  %2527 = vmatpush1.msra.mxu0 0.0
  %2528 = vmatprep.subr.mxu0 0.0
  %2529 = vmatpush1.msra.mxu0 0.0
  %2530 = vmatprep.subr.mxu0 0.0
  %2531 = vmatpush1.msra.mxu0 0.0
  %2532 = vmatprep.subr.mxu0 0.0
  %2533 = vmatpush1.msra.mxu0 0.0
  %2534 = vmatprep.subr.mxu0 0.0
  %2535 = vmatpush1.msra.mxu0 0.0
  %2536 = vmatprep.subr.mxu0 0.0
  %2537 = vmatpush1.msra.mxu0 0.0
  %2538 = vmatprep.subr.mxu0 0.0
  %2539 = vmatpush1.msra.mxu0 0.0
  %2540 = vmatprep.subr.mxu0 0.0
  %2541 = vmatpush1.msra.mxu0 0.0
  %2542 = vmatprep.subr.mxu0 0.0
  %2543 = vmatpush1.msra.mxu0 0.0
  %2544 = vmatprep.subr.mxu0 0.0
  %2545 = vmatpush1.msra.mxu0 0.0
  %2546 = vmatprep.subr.mxu0 0.0
  %2547 = vmatpush1.msra.mxu0 0.0
  %2548 = vmatprep.subr.mxu0 0.0
  %2549 = vmatpush1.msra.mxu0 0.0
  %2550 = vmatprep.mubr.f32.mxu0 0.0
  %2551 = vmatmul.mubr.f32.gmra.mrb[0].mxu0 %v2388
  %v2552 = vpop.f32.mrb[0].mxu0
  %v2553 = vadd.f32 0.0, %v2552
  %v2554 = vpop.f32.mrb[0].mxu0
  %2555 = vmatprep.mubr.f32.mxu0 0.0
  %2556 = vmatmul.mubr.f32.gmra.mrb[0].mxu0 %v2391
  %v2557 = vpop.f32.mrb[0].mxu0
  %v2558 = vadd.f32 0.0, %v2557
  %v2559 = vpop.f32.mrb[0].mxu0
  %2560 = vmatprep.mubr.f32.mxu0 0.0
  %2561 = vmatmul.mubr.f32.gmra.mrb[0].mxu0 %v2394
  %v2562 = vpop.f32.mrb[0].mxu0
  %v2563 = vadd.f32 0.0, %v2562
  %v2564 = vpop.f32.mrb[0].mxu0
  %2565 = vmatprep.mubr.f32.mxu0 0.0
  %2566 = vmatmul.mubr.f32.gmra.mrb[0].mxu0 %v2397
  %v2567 = vpop.f32.mrb[0].mxu0
  %v2568 = vadd.f32 0.0, %v2567
  %v2569 = vpop.f32.mrb[0].mxu0
  %2570 = vdwg.mxu0
  %v2571 = vpack.c.bf16 %v2558, %v2553
  %v2572 = vpack.c.bf16 %v2568, %v2563
  %v2573 = vld [vmem:[%s3] sm:$0xff]
  %v2574 = vld [vmem:[%s3 + $0x8] sm:$0xff]
  %v2575 = vld [vmem:[%s3 + $0x10] sm:$0xff]
  %v2576 = vld [vmem:[%s3 + $0x18] sm:$0xff]
  %v2577 = vld [vmem:[%s3 + $0x20] sm:$0xff]
  %v2578 = vld [vmem:[%s3 + $0x28] sm:$0xff]
  %v2579 = vld [vmem:[%s3 + $0x30] sm:$0xff]
  %v2580 = vld [vmem:[%s3 + $0x38] sm:$0xff]
  %v2581 = vld [vmem:[%s3 + $0x40] sm:$0xff]
  %v2582 = vld [vmem:[%s3 + $0x48] sm:$0xff]
  %v2583 = vld [vmem:[%s3 + $0x50] sm:$0xff]
  %v2584 = vld [vmem:[%s3 + $0x58] sm:$0xff]
  %v2585 = vld [vmem:[%s3 + $0x60] sm:$0xff]
  %v2586 = vld [vmem:[%s3 + $0x68] sm:$0xff]
  %v2587 = vld [vmem:[%s3 + $0x70] sm:$0xff]
  %s2588 = scalar_lea.vmem %s3, 120
  %v2589 = vld [vmem:[%s2588] sm:$0xff]
  %v2590 = vld [vmem:[%s2588 + $0x8] sm:$0xff]
  %v2591 = vld [vmem:[%s2588 + $0x10] sm:$0xff]
  %v2592 = vld [vmem:[%s2588 + $0x18] sm:$0xff]
  %v2593 = vld [vmem:[%s2588 + $0x20] sm:$0xff]
  %v2594 = vld [vmem:[%s2588 + $0x28] sm:$0xff]
  %v2595 = vld [vmem:[%s2588 + $0x30] sm:$0xff]
  %v2596 = vld [vmem:[%s2588 + $0x38] sm:$0xff]
  %v2597 = vld [vmem:[%s2588 + $0x40] sm:$0xff]
  %v2598 = vld [vmem:[%s2588 + $0x48] sm:$0xff]
  %v2599 = vld [vmem:[%s2588 + $0x50] sm:$0xff]
  %v2600 = vld [vmem:[%s2588 + $0x58] sm:$0xff]
  %v2601 = vld [vmem:[%s2588 + $0x60] sm:$0xff]
  %v2602 = vld [vmem:[%s2588 + $0x68] sm:$0xff]
  %v2603 = vld [vmem:[%s2588 + $0x70] sm:$0xff]
  %s2604 = scalar_lea.vmem %s3, 240
  %v2605 = vld [vmem:[%s2604] sm:$0xff]
  %v2606 = vld [vmem:[%s2604 + $0x8] sm:$0xff]
  %v2607 = vld [vmem:[%s2604 + $0x10] sm:$0xff]
  %v2608 = vld [vmem:[%s2604 + $0x18] sm:$0xff]
  %v2609 = vld [vmem:[%s2604 + $0x20] sm:$0xff]
  %v2610 = vld [vmem:[%s2604 + $0x28] sm:$0xff]
  %v2611 = vld [vmem:[%s2604 + $0x30] sm:$0xff]
  %v2612 = vld [vmem:[%s2604 + $0x38] sm:$0xff]
  %v2613 = vld [vmem:[%s2604 + $0x40] sm:$0xff]
  %v2614 = vld [vmem:[%s2604 + $0x48] sm:$0xff]
  %v2615 = vld [vmem:[%s2604 + $0x50] sm:$0xff]
  %v2616 = vld [vmem:[%s2604 + $0x58] sm:$0xff]
  %v2617 = vld [vmem:[%s2604 + $0x60] sm:$0xff]
  %v2618 = vld [vmem:[%s2604 + $0x68] sm:$0xff]
  %v2619 = vld [vmem:[%s2604 + $0x70] sm:$0xff]
  %s2620 = scalar_lea.vmem %s3, 360
  %v2621 = vld [vmem:[%s2620] sm:$0xff]
  %v2622 = vld [vmem:[%s2620 + $0x8] sm:$0xff]
  %v2623 = vld [vmem:[%s2620 + $0x10] sm:$0xff]
  %v2624 = vld [vmem:[%s2620 + $0x18] sm:$0xff]
  %v2625 = vld [vmem:[%s2620 + $0x20] sm:$0xff]
  %v2626 = vld [vmem:[%s2620 + $0x28] sm:$0xff]
  %v2627 = vld [vmem:[%s2620 + $0x30] sm:$0xff]
  %v2628 = vld [vmem:[%s2620 + $0x38] sm:$0xff]
  %v2629 = vld [vmem:[%s2620 + $0x40] sm:$0xff]
  %v2630 = vld [vmem:[%s2620 + $0x48] sm:$0xff]
  %v2631 = vld [vmem:[%s2620 + $0x50] sm:$0xff]
  %v2632 = vld [vmem:[%s2620 + $0x58] sm:$0xff]
  %v2633 = vld [vmem:[%s2620 + $0x60] sm:$0xff]
  %v2634 = vld [vmem:[%s2620 + $0x68] sm:$0xff]
  %v2635 = vld [vmem:[%s2620 + $0x70] sm:$0xff]
  %s2636 = scalar_lea.vmem %s3, 480
  %v2637 = vld [vmem:[%s2636] sm:$0xff]
  %v2638 = vld [vmem:[%s2636 + $0x8] sm:$0xff]
  %v2639 = vld [vmem:[%s2636 + $0x10] sm:$0xff]
  %v2640 = vld [vmem:[%s2636 + $0x18] sm:$0xff]
  %v2641 = vld [vmem:[%s2636 + $0x20] sm:$0xff]
  %v2642 = vld [vmem:[%s2636 + $0x28] sm:$0xff]
  %v2643 = vld [vmem:[%s2636 + $0x30] sm:$0xff]
  %v2644 = vld [vmem:[%s2636 + $0x38] sm:$0xff]
  %v2645 = vld [vmem:[%s2636 + $0x40] sm:$0xff]
  %v2646 = vld [vmem:[%s2636 + $0x48] sm:$0xff]
  %v2647 = vld [vmem:[%s2636 + $0x50] sm:$0xff]
  %v2648 = vld [vmem:[%s2636 + $0x58] sm:$0xff]
  %v2649 = vld [vmem:[%s2636 + $0x60] sm:$0xff]
  %v2650 = vld [vmem:[%s2636 + $0x68] sm:$0xff]
  %v2651 = vld [vmem:[%s2636 + $0x70] sm:$0xff]
  %v2667 = vunpack.c.l.b16 %v2589
  %v2668 = vunpack.c.h.b16 %v2589
  %v2669 = vunpack.c.l.b16 %v2590
  %v2670 = vunpack.c.h.b16 %v2590
  %v2671 = vunpack.c.l.b16 %v2591
  %v2672 = vunpack.c.h.b16 %v2591
  %v2673 = vunpack.c.l.b16 %v2592
  %v2674 = vunpack.c.h.b16 %v2592
  %v2675 = vunpack.c.l.b16 %v2593
  %v2676 = vunpack.c.h.b16 %v2593
  %v2677 = vunpack.c.l.b16 %v2594
  %v2678 = vunpack.c.h.b16 %v2594
  %v2679 = vunpack.c.l.b16 %v2595
  %v2680 = vunpack.c.h.b16 %v2595
  %v2681 = vunpack.c.l.b16 %v2596
  %v2682 = vunpack.c.h.b16 %v2596
  %v2683 = vunpack.c.l.b16 %v2597
  %v2684 = vunpack.c.h.b16 %v2597
  %v2685 = vunpack.c.l.b16 %v2598
  %v2686 = vunpack.c.h.b16 %v2598
  %v2687 = vunpack.c.l.b16 %v2599
  %v2688 = vunpack.c.h.b16 %v2599
  %v2689 = vunpack.c.l.b16 %v2600
  %v2690 = vunpack.c.h.b16 %v2600
  %v2691 = vunpack.c.l.b16 %v2601
  %v2692 = vunpack.c.h.b16 %v2601
  %v2693 = vunpack.c.l.b16 %v2602
  %v2694 = vunpack.c.h.b16 %v2602
  %v2695 = vunpack.c.l.b16 %v2603
  %v2696 = vunpack.c.h.b16 %v2603
  %v2697 = vpack.c.b16 %v2669, %v2667
  %v2698 = vpack.c.b16 %v2670, %v2668
  %v2699 = vpack.c.b16 %v2673, %v2671
  %v2700 = vpack.c.b16 %v2674, %v2672
  %v2701 = vpack.c.b16 %v2677, %v2675
  %v2702 = vpack.c.b16 %v2678, %v2676
  %v2703 = vpack.c.b16 %v2681, %v2679
  %v2704 = vpack.c.b16 %v2682, %v2680
  %v2705 = vpack.c.b16 %v2685, %v2683
  %v2706 = vpack.c.b16 %v2686, %v2684
  %v2707 = vpack.c.b16 %v2689, %v2687
  %v2708 = vpack.c.b16 %v2690, %v2688
  %v2709 = vpack.c.b16 %v2693, %v2691
  %v2710 = vpack.c.b16 %v2694, %v2692
  %v2711 = vpack.c.b16 %v2695, %v2695
  %v2712 = vpack.c.b16 %v2696, %v2696
  %vm2727 = vcmask 982016
  %v2729 = vsel %vm2727, %v2189, 0
  %v2732 = vsel %vm2727, %v2190, 0
  %vm2734 = vcmask 1043456
  %v2736 = vsel %vm2734, %v2711, 0
  %v2739 = vsel %vm2734, %v2712, 0
  %2741 = vmatprep.subr.bf16.mxu0 %v2698
  %2742 = vmatpush1.bf16.msra.mxu0 %v2697
  %2743 = vmatprep.subr.bf16.mxu0 %v2700
  %2744 = vmatpush1.bf16.msra.mxu0 %v2699
  %2745 = vmatprep.subr.bf16.mxu0 %v2702
  %2746 = vmatpush1.bf16.msra.mxu0 %v2701
  %2747 = vmatprep.subr.bf16.mxu0 %v2704
  %2748 = vmatpush1.bf16.msra.mxu0 %v2703
  %2749 = vmatprep.subr.bf16.mxu0 %v2706
  %2750 = vmatpush1.bf16.msra.mxu0 %v2705
  %2751 = vmatprep.subr.bf16.mxu0 %v2708
  %2752 = vmatpush1.bf16.msra.mxu0 %v2707
  %2753 = vmatprep.subr.bf16.mxu0 %v2710
  %2754 = vmatpush1.bf16.msra.mxu0 %v2709
  %2755 = vmatprep.subr.bf16.mxu0 %v2739
  %2756 = vmatpush1.bf16.msra.mxu0 %v2736
  %2757 = vmatprep.subr.bf16.mxu0 0
  %2758 = vmatpush1.bf16.msra.mxu0 0
  %2759 = vmatprep.subr.bf16.mxu0 0
  %2760 = vmatpush1.bf16.msra.mxu0 0
  %2761 = vmatprep.subr.bf16.mxu0 0
  %2762 = vmatpush1.bf16.msra.mxu0 0
  %2763 = vmatprep.subr.bf16.mxu0 0
  %2764 = vmatpush1.bf16.msra.mxu0 0
  %2765 = vmatprep.subr.bf16.mxu0 0
  %2766 = vmatpush1.bf16.msra.mxu0 0
  %2767 = vmatprep.subr.bf16.mxu0 0
  %2768 = vmatpush1.bf16.msra.mxu0 0
  %2769 = vmatprep.subr.bf16.mxu0 0
  %2770 = vmatpush1.bf16.msra.mxu0 0
  %2771 = vmatprep.subr.bf16.mxu0 0
  %2772 = vmatpush1.bf16.msra.mxu0 0
  %2773 = vmatprep.mubr.bf16.mxu0 0
  %2774 = vmatmul.mubr.bf16.gmra.mrb[0].mxu0 %v2729
  %v2775 = vpop.f32.mrb[0].mxu0
  %v2776 = vadd.f32 0.0, %v2775
  %v2777 = vpop.f32.mrb[0].mxu0
  %v2778 = vadd.f32 0.0, %v2777
  %v2779 = vpop.f32.mrb[0].mxu0
  %v2780 = vadd.f32 0.0, %v2779
  %v2781 = vpop.f32.mrb[0].mxu0
  %v2782 = vadd.f32 0.0, %v2781
  %2783 = vmatprep.mubr.bf16.mxu0 0
  %2784 = vmatmul.mubr.bf16.gmra.mrb[0].mxu0 %v2732
  %v2785 = vpop.f32.mrb[0].mxu0
  %v2786 = vadd.f32 0.0, %v2785
  %v2787 = vpop.f32.mrb[0].mxu0
  %v2788 = vadd.f32 0.0, %v2787
  %v2789 = vpop.f32.mrb[0].mxu0
  %v2790 = vadd.f32 0.0, %v2789
  %v2791 = vpop.f32.mrb[0].mxu0
  %v2792 = vadd.f32 0.0, %v2791
  %2793 = vdwg.mxu0
  %v2809 = vunpack.c.l.b16 %v2573
  %v2810 = vunpack.c.h.b16 %v2573
  %v2811 = vunpack.c.l.b16 %v2574
  %v2812 = vunpack.c.h.b16 %v2574
  %v2813 = vunpack.c.l.b16 %v2575
  %v2814 = vunpack.c.h.b16 %v2575
  %v2815 = vunpack.c.l.b16 %v2576
  %v2816 = vunpack.c.h.b16 %v2576
  %v2817 = vunpack.c.l.b16 %v2577
  %v2818 = vunpack.c.h.b16 %v2577
  %v2819 = vunpack.c.l.b16 %v2578
  %v2820 = vunpack.c.h.b16 %v2578
  %v2821 = vunpack.c.l.b16 %v2579
  %v2822 = vunpack.c.h.b16 %v2579
  %v2823 = vunpack.c.l.b16 %v2580
  %v2824 = vunpack.c.h.b16 %v2580
  %v2825 = vunpack.c.l.b16 %v2581
  %v2826 = vunpack.c.h.b16 %v2581
  %v2827 = vunpack.c.l.b16 %v2582
  %v2828 = vunpack.c.h.b16 %v2582
  %v2829 = vunpack.c.l.b16 %v2583
  %v2830 = vunpack.c.h.b16 %v2583
  %v2831 = vunpack.c.l.b16 %v2584
  %v2832 = vunpack.c.h.b16 %v2584
  %v2833 = vunpack.c.l.b16 %v2585
  %v2834 = vunpack.c.h.b16 %v2585
  %v2835 = vunpack.c.l.b16 %v2586
  %v2836 = vunpack.c.h.b16 %v2586
  %v2837 = vunpack.c.l.b16 %v2587
  %v2838 = vunpack.c.h.b16 %v2587
  %v2839 = vpack.c.b16 %v2811, %v2809
  %v2840 = vpack.c.b16 %v2812, %v2810
  %v2841 = vpack.c.b16 %v2815, %v2813
  %v2842 = vpack.c.b16 %v2816, %v2814
  %v2843 = vpack.c.b16 %v2819, %v2817
  %v2844 = vpack.c.b16 %v2820, %v2818
  %v2845 = vpack.c.b16 %v2823, %v2821
  %v2846 = vpack.c.b16 %v2824, %v2822
  %v2847 = vpack.c.b16 %v2827, %v2825
  %v2848 = vpack.c.b16 %v2828, %v2826
  %v2849 = vpack.c.b16 %v2831, %v2829
  %v2850 = vpack.c.b16 %v2832, %v2830
  %v2851 = vpack.c.b16 %v2835, %v2833
  %v2852 = vpack.c.b16 %v2836, %v2834
  %v2853 = vpack.c.b16 %v2837, %v2837
  %v2854 = vpack.c.b16 %v2838, %v2838
  %v2870 = vsel %vm2727, %v2102, 0
  %v2873 = vsel %vm2727, %v2103, 0
  %v2876 = vsel %vm2734, %v2853, 0
  %v2879 = vsel %vm2734, %v2854, 0
  %2881 = vmatprep.subr.bf16.mxu0 %v2840
  %2882 = vmatpush1.bf16.msra.mxu0 %v2839
  %2883 = vmatprep.subr.bf16.mxu0 %v2842
  %2884 = vmatpush1.bf16.msra.mxu0 %v2841
  %2885 = vmatprep.subr.bf16.mxu0 %v2844
  %2886 = vmatpush1.bf16.msra.mxu0 %v2843
  %2887 = vmatprep.subr.bf16.mxu0 %v2846
  %2888 = vmatpush1.bf16.msra.mxu0 %v2845
  %2889 = vmatprep.subr.bf16.mxu0 %v2848
  %2890 = vmatpush1.bf16.msra.mxu0 %v2847
  %2891 = vmatprep.subr.bf16.mxu0 %v2850
  %2892 = vmatpush1.bf16.msra.mxu0 %v2849
  %2893 = vmatprep.subr.bf16.mxu0 %v2852
  %2894 = vmatpush1.bf16.msra.mxu0 %v2851
  %2895 = vmatprep.subr.bf16.mxu0 %v2879
  %2896 = vmatpush1.bf16.msra.mxu0 %v2876
  %2897 = vmatprep.subr.bf16.mxu0 0
  %2898 = vmatpush1.bf16.msra.mxu0 0
  %2899 = vmatprep.subr.bf16.mxu0 0
  %2900 = vmatpush1.bf16.msra.mxu0 0
  %2901 = vmatprep.subr.bf16.mxu0 0
  %2902 = vmatpush1.bf16.msra.mxu0 0
  %2903 = vmatprep.subr.bf16.mxu0 0
  %2904 = vmatpush1.bf16.msra.mxu0 0
  %2905 = vmatprep.subr.bf16.mxu0 0
  %2906 = vmatpush1.bf16.msra.mxu0 0
  %2907 = vmatprep.subr.bf16.mxu0 0
  %2908 = vmatpush1.bf16.msra.mxu0 0
  %2909 = vmatprep.subr.bf16.mxu0 0
  %2910 = vmatpush1.bf16.msra.mxu0 0
  %2911 = vmatprep.subr.bf16.mxu0 0
  %2912 = vmatpush1.bf16.msra.mxu0 0
  %2913 = vmatprep.mubr.bf16.mxu0 0
  %2914 = vmatmul.mubr.bf16.gmra.mrb[0].mxu0 %v2870
  %v2915 = vpop.f32.mrb[0].mxu0
  %v2916 = vadd.f32 %v2776, %v2915
  %v2917 = vpop.f32.mrb[0].mxu0
  %v2918 = vadd.f32 %v2778, %v2917
  %v2919 = vpop.f32.mrb[0].mxu0
  %v2920 = vadd.f32 %v2780, %v2919
  %v2921 = vpop.f32.mrb[0].mxu0
  %v2922 = vadd.f32 %v2782, %v2921
  %2923 = vmatprep.mubr.bf16.mxu0 0
  %2924 = vmatmul.mubr.bf16.gmra.mrb[0].mxu0 %v2873
  %v2925 = vpop.f32.mrb[0].mxu0
  %v2926 = vadd.f32 %v2786, %v2925
  %v2927 = vpop.f32.mrb[0].mxu0
  %v2928 = vadd.f32 %v2788, %v2927
  %v2929 = vpop.f32.mrb[0].mxu0
  %v2930 = vadd.f32 %v2790, %v2929
  %v2931 = vpop.f32.mrb[0].mxu0
  %v2932 = vadd.f32 %v2792, %v2931
  %2933 = vdwg.mxu0
  %v2949 = vunpack.c.l.b16 %v2605
  %v2950 = vunpack.c.h.b16 %v2605
  %v2951 = vunpack.c.l.b16 %v2606
  %v2952 = vunpack.c.h.b16 %v2606
  %v2953 = vunpack.c.l.b16 %v2607
  %v2954 = vunpack.c.h.b16 %v2607
  %v2955 = vunpack.c.l.b16 %v2608
  %v2956 = vunpack.c.h.b16 %v2608
  %v2957 = vunpack.c.l.b16 %v2609
  %v2958 = vunpack.c.h.b16 %v2609
  %v2959 = vunpack.c.l.b16 %v2610
  %v2960 = vunpack.c.h.b16 %v2610
  %v2961 = vunpack.c.l.b16 %v2611
  %v2962 = vunpack.c.h.b16 %v2611
  %v2963 = vunpack.c.l.b16 %v2612
  %v2964 = vunpack.c.h.b16 %v2612
  %v2965 = vunpack.c.l.b16 %v2613
  %v2966 = vunpack.c.h.b16 %v2613
  %v2967 = vunpack.c.l.b16 %v2614
  %v2968 = vunpack.c.h.b16 %v2614
  %v2969 = vunpack.c.l.b16 %v2615
  %v2970 = vunpack.c.h.b16 %v2615
  %v2971 = vunpack.c.l.b16 %v2616
  %v2972 = vunpack.c.h.b16 %v2616
  %v2973 = vunpack.c.l.b16 %v2617
  %v2974 = vunpack.c.h.b16 %v2617
  %v2975 = vunpack.c.l.b16 %v2618
  %v2976 = vunpack.c.h.b16 %v2618
  %v2977 = vunpack.c.l.b16 %v2619
  %v2978 = vunpack.c.h.b16 %v2619
  %v2979 = vpack.c.b16 %v2951, %v2949
  %v2980 = vpack.c.b16 %v2952, %v2950
  %v2981 = vpack.c.b16 %v2955, %v2953
  %v2982 = vpack.c.b16 %v2956, %v2954
  %v2983 = vpack.c.b16 %v2959, %v2957
  %v2984 = vpack.c.b16 %v2960, %v2958
  %v2985 = vpack.c.b16 %v2963, %v2961
  %v2986 = vpack.c.b16 %v2964, %v2962
  %v2987 = vpack.c.b16 %v2967, %v2965
  %v2988 = vpack.c.b16 %v2968, %v2966
  %v2989 = vpack.c.b16 %v2971, %v2969
  %v2990 = vpack.c.b16 %v2972, %v2970
  %v2991 = vpack.c.b16 %v2975, %v2973
  %v2992 = vpack.c.b16 %v2976, %v2974
  %v2993 = vpack.c.b16 %v2977, %v2977
  %v2994 = vpack.c.b16 %v2978, %v2978
  %v3010 = vsel %vm2727, %v2293, 0
  %v3013 = vsel %vm2727, %v2294, 0
  %v3016 = vsel %vm2734, %v2993, 0
  %v3019 = vsel %vm2734, %v2994, 0
  %3021 = vmatprep.subr.bf16.mxu0 %v2980
  %3022 = vmatpush1.bf16.msra.mxu0 %v2979
  %3023 = vmatprep.subr.bf16.mxu0 %v2982
  %3024 = vmatpush1.bf16.msra.mxu0 %v2981
  %3025 = vmatprep.subr.bf16.mxu0 %v2984
  %3026 = vmatpush1.bf16.msra.mxu0 %v2983
  %3027 = vmatprep.subr.bf16.mxu0 %v2986
  %3028 = vmatpush1.bf16.msra.mxu0 %v2985
  %3029 = vmatprep.subr.bf16.mxu0 %v2988
  %3030 = vmatpush1.bf16.msra.mxu0 %v2987
  %3031 = vmatprep.subr.bf16.mxu0 %v2990
  %3032 = vmatpush1.bf16.msra.mxu0 %v2989
  %3033 = vmatprep.subr.bf16.mxu0 %v2992
  %3034 = vmatpush1.bf16.msra.mxu0 %v2991
  %3035 = vmatprep.subr.bf16.mxu0 %v3019
  %3036 = vmatpush1.bf16.msra.mxu0 %v3016
  %3037 = vmatprep.subr.bf16.mxu0 0
  %3038 = vmatpush1.bf16.msra.mxu0 0
  %3039 = vmatprep.subr.bf16.mxu0 0
  %3040 = vmatpush1.bf16.msra.mxu0 0
  %3041 = vmatprep.subr.bf16.mxu0 0
  %3042 = vmatpush1.bf16.msra.mxu0 0
  %3043 = vmatprep.subr.bf16.mxu0 0
  %3044 = vmatpush1.bf16.msra.mxu0 0
  %3045 = vmatprep.subr.bf16.mxu0 0
  %3046 = vmatpush1.bf16.msra.mxu0 0
  %3047 = vmatprep.subr.bf16.mxu0 0
  %3048 = vmatpush1.bf16.msra.mxu0 0
  %3049 = vmatprep.subr.bf16.mxu0 0
  %3050 = vmatpush1.bf16.msra.mxu0 0
  %3051 = vmatprep.subr.bf16.mxu0 0
  %3052 = vmatpush1.bf16.msra.mxu0 0
  %3053 = vmatprep.mubr.bf16.mxu0 0
  %3054 = vmatmul.mubr.bf16.gmra.mrb[0].mxu0 %v3010
  %v3055 = vpop.f32.mrb[0].mxu0
  %v3056 = vadd.f32 0.0, %v3055
  %v3057 = vpop.f32.mrb[0].mxu0
  %v3058 = vadd.f32 0.0, %v3057
  %v3059 = vpop.f32.mrb[0].mxu0
  %v3060 = vadd.f32 0.0, %v3059
  %v3061 = vpop.f32.mrb[0].mxu0
  %v3062 = vadd.f32 0.0, %v3061
  %3063 = vmatprep.mubr.bf16.mxu0 0
  %3064 = vmatmul.mubr.bf16.gmra.mrb[0].mxu0 %v3013
  %v3065 = vpop.f32.mrb[0].mxu0
  %v3066 = vadd.f32 0.0, %v3065
  %v3067 = vpop.f32.mrb[0].mxu0
  %v3068 = vadd.f32 0.0, %v3067
  %v3069 = vpop.f32.mrb[0].mxu0
  %v3070 = vadd.f32 0.0, %v3069
  %v3071 = vpop.f32.mrb[0].mxu0
  %v3072 = vadd.f32 0.0, %v3071
  %3073 = vdwg.mxu0
  %v3074 = vadd.f32 %v2916, %v3056
  %v3075 = vadd.f32 %v2918, %v3058
  %v3076 = vadd.f32 %v2920, %v3060
  %v3077 = vadd.f32 %v2922, %v3062
  %v3078 = vadd.f32 %v2926, %v3066
  %v3079 = vadd.f32 %v2928, %v3068
  %v3080 = vadd.f32 %v2930, %v3070
  %v3081 = vadd.f32 %v2932, %v3072
  %v3097 = vunpack.c.l.b16 %v2621
  %v3098 = vunpack.c.h.b16 %v2621
  %v3099 = vunpack.c.l.b16 %v2622
  %v3100 = vunpack.c.h.b16 %v2622
  %v3101 = vunpack.c.l.b16 %v2623
  %v3102 = vunpack.c.h.b16 %v2623
  %v3103 = vunpack.c.l.b16 %v2624
  %v3104 = vunpack.c.h.b16 %v2624
  %v3105 = vunpack.c.l.b16 %v2625
  %v3106 = vunpack.c.h.b16 %v2625
  %v3107 = vunpack.c.l.b16 %v2626
  %v3108 = vunpack.c.h.b16 %v2626
  %v3109 = vunpack.c.l.b16 %v2627
  %v3110 = vunpack.c.h.b16 %v2627
  %v3111 = vunpack.c.l.b16 %v2628
  %v3112 = vunpack.c.h.b16 %v2628
  %v3113 = vunpack.c.l.b16 %v2629
  %v3114 = vunpack.c.h.b16 %v2629
  %v3115 = vunpack.c.l.b16 %v2630
  %v3116 = vunpack.c.h.b16 %v2630
  %v3117 = vunpack.c.l.b16 %v2631
  %v3118 = vunpack.c.h.b16 %v2631
  %v3119 = vunpack.c.l.b16 %v2632
  %v3120 = vunpack.c.h.b16 %v2632
  %v3121 = vunpack.c.l.b16 %v2633
  %v3122 = vunpack.c.h.b16 %v2633
  %v3123 = vunpack.c.l.b16 %v2634
  %v3124 = vunpack.c.h.b16 %v2634
  %v3125 = vunpack.c.l.b16 %v2635
  %v3126 = vunpack.c.h.b16 %v2635
  %v3127 = vpack.c.b16 %v3099, %v3097
  %v3128 = vpack.c.b16 %v3100, %v3098
  %v3129 = vpack.c.b16 %v3103, %v3101
  %v3130 = vpack.c.b16 %v3104, %v3102
  %v3131 = vpack.c.b16 %v3107, %v3105
  %v3132 = vpack.c.b16 %v3108, %v3106
  %v3133 = vpack.c.b16 %v3111, %v3109
  %v3134 = vpack.c.b16 %v3112, %v3110
  %v3135 = vpack.c.b16 %v3115, %v3113
  %v3136 = vpack.c.b16 %v3116, %v3114
  %v3137 = vpack.c.b16 %v3119, %v3117
  %v3138 = vpack.c.b16 %v3120, %v3118
  %v3139 = vpack.c.b16 %v3123, %v3121
  %v3140 = vpack.c.b16 %v3124, %v3122
  %v3141 = vpack.c.b16 %v3125, %v3125
  %v3142 = vpack.c.b16 %v3126, %v3126
  %v3158 = vsel %vm2727, %v2380, 0
  %v3161 = vsel %vm2727, %v2381, 0
  %v3164 = vsel %vm2734, %v3141, 0
  %v3167 = vsel %vm2734, %v3142, 0
  %3169 = vmatprep.subr.bf16.mxu0 %v3128
  %3170 = vmatpush1.bf16.msra.mxu0 %v3127
  %3171 = vmatprep.subr.bf16.mxu0 %v3130
  %3172 = vmatpush1.bf16.msra.mxu0 %v3129
  %3173 = vmatprep.subr.bf16.mxu0 %v3132
  %3174 = vmatpush1.bf16.msra.mxu0 %v3131
  %3175 = vmatprep.subr.bf16.mxu0 %v3134
  %3176 = vmatpush1.bf16.msra.mxu0 %v3133
  %3177 = vmatprep.subr.bf16.mxu0 %v3136
  %3178 = vmatpush1.bf16.msra.mxu0 %v3135
  %3179 = vmatprep.subr.bf16.mxu0 %v3138
  %3180 = vmatpush1.bf16.msra.mxu0 %v3137
  %3181 = vmatprep.subr.bf16.mxu0 %v3140
  %3182 = vmatpush1.bf16.msra.mxu0 %v3139
  %3183 = vmatprep.subr.bf16.mxu0 %v3167
  %3184 = vmatpush1.bf16.msra.mxu0 %v3164
  %3185 = vmatprep.subr.bf16.mxu0 0
  %3186 = vmatpush1.bf16.msra.mxu0 0
  %3187 = vmatprep.subr.bf16.mxu0 0
  %3188 = vmatpush1.bf16.msra.mxu0 0
  %3189 = vmatprep.subr.bf16.mxu0 0
  %3190 = vmatpush1.bf16.msra.mxu0 0
  %3191 = vmatprep.subr.bf16.mxu0 0
  %3192 = vmatpush1.bf16.msra.mxu0 0
  %3193 = vmatprep.subr.bf16.mxu0 0
  %3194 = vmatpush1.bf16.msra.mxu0 0
  %3195 = vmatprep.subr.bf16.mxu0 0
  %3196 = vmatpush1.bf16.msra.mxu0 0
  %3197 = vmatprep.subr.bf16.mxu0 0
  %3198 = vmatpush1.bf16.msra.mxu0 0
  %3199 = vmatprep.subr.bf16.mxu0 0
  %3200 = vmatpush1.bf16.msra.mxu0 0
  %3201 = vmatprep.mubr.bf16.mxu0 0
  %3202 = vmatmul.mubr.bf16.gmra.mrb[0].mxu0 %v3158
  %v3203 = vpop.f32.mrb[0].mxu0
  %v3204 = vadd.f32 0.0, %v3203
  %v3205 = vpop.f32.mrb[0].mxu0
  %v3206 = vadd.f32 0.0, %v3205
  %v3207 = vpop.f32.mrb[0].mxu0
  %v3208 = vadd.f32 0.0, %v3207
  %v3209 = vpop.f32.mrb[0].mxu0
  %v3210 = vadd.f32 0.0, %v3209
  %3211 = vmatprep.mubr.bf16.mxu0 0
  %3212 = vmatmul.mubr.bf16.gmra.mrb[0].mxu0 %v3161
  %v3213 = vpop.f32.mrb[0].mxu0
  %v3214 = vadd.f32 0.0, %v3213
  %v3215 = vpop.f32.mrb[0].mxu0
  %v3216 = vadd.f32 0.0, %v3215
  %v3217 = vpop.f32.mrb[0].mxu0
  %v3218 = vadd.f32 0.0, %v3217
  %v3219 = vpop.f32.mrb[0].mxu0
  %v3220 = vadd.f32 0.0, %v3219
  %3221 = vdwg.mxu0
  %v3222 = vadd.f32 %v3074, %v3204
  %v3223 = vadd.f32 %v3075, %v3206
  %v3224 = vadd.f32 %v3076, %v3208
  %v3225 = vadd.f32 %v3077, %v3210
  %v3226 = vadd.f32 %v3078, %v3214
  %v3227 = vadd.f32 %v3079, %v3216
  %v3228 = vadd.f32 %v3080, %v3218
  %v3229 = vadd.f32 %v3081, %v3220
  %v3245 = vunpack.c.l.b16 %v2637
  %v3246 = vunpack.c.h.b16 %v2637
  %v3247 = vunpack.c.l.b16 %v2638
  %v3248 = vunpack.c.h.b16 %v2638
  %v3249 = vunpack.c.l.b16 %v2639
  %v3250 = vunpack.c.h.b16 %v2639
  %v3251 = vunpack.c.l.b16 %v2640
  %v3252 = vunpack.c.h.b16 %v2640
  %v3253 = vunpack.c.l.b16 %v2641
  %v3254 = vunpack.c.h.b16 %v2641
  %v3255 = vunpack.c.l.b16 %v2642
  %v3256 = vunpack.c.h.b16 %v2642
  %v3257 = vunpack.c.l.b16 %v2643
  %v3258 = vunpack.c.h.b16 %v2643
  %v3259 = vunpack.c.l.b16 %v2644
  %v3260 = vunpack.c.h.b16 %v2644
  %v3261 = vunpack.c.l.b16 %v2645
  %v3262 = vunpack.c.h.b16 %v2645
  %v3263 = vunpack.c.l.b16 %v2646
  %v3264 = vunpack.c.h.b16 %v2646
  %v3265 = vunpack.c.l.b16 %v2647
  %v3266 = vunpack.c.h.b16 %v2647
  %v3267 = vunpack.c.l.b16 %v2648
  %v3268 = vunpack.c.h.b16 %v2648
  %v3269 = vunpack.c.l.b16 %v2649
  %v3270 = vunpack.c.h.b16 %v2649
  %v3271 = vunpack.c.l.b16 %v2650
  %v3272 = vunpack.c.h.b16 %v2650
  %v3273 = vunpack.c.l.b16 %v2651
  %v3274 = vunpack.c.h.b16 %v2651
  %v3275 = vpack.c.b16 %v3247, %v3245
  %v3276 = vpack.c.b16 %v3248, %v3246
  %v3277 = vpack.c.b16 %v3251, %v3249
  %v3278 = vpack.c.b16 %v3252, %v3250
  %v3279 = vpack.c.b16 %v3255, %v3253
  %v3280 = vpack.c.b16 %v3256, %v3254
  %v3281 = vpack.c.b16 %v3259, %v3257
  %v3282 = vpack.c.b16 %v3260, %v3258
  %v3283 = vpack.c.b16 %v3263, %v3261
  %v3284 = vpack.c.b16 %v3264, %v3262
  %v3285 = vpack.c.b16 %v3267, %v3265
  %v3286 = vpack.c.b16 %v3268, %v3266
  %v3287 = vpack.c.b16 %v3271, %v3269
  %v3288 = vpack.c.b16 %v3272, %v3270
  %v3289 = vpack.c.b16 %v3273, %v3273
  %v3290 = vpack.c.b16 %v3274, %v3274
  %v3306 = vsel %vm2727, %v2484, 0
  %v3309 = vsel %vm2727, %v2485, 0
  %v3312 = vsel %vm2734, %v3289, 0
  %v3315 = vsel %vm2734, %v3290, 0
  %3317 = vmatprep.subr.bf16.mxu0 %v3276
  %3318 = vmatpush1.bf16.msra.mxu0 %v3275
  %3319 = vmatprep.subr.bf16.mxu0 %v3278
  %3320 = vmatpush1.bf16.msra.mxu0 %v3277
  %3321 = vmatprep.subr.bf16.mxu0 %v3280
  %3322 = vmatpush1.bf16.msra.mxu0 %v3279
  %3323 = vmatprep.subr.bf16.mxu0 %v3282
  %3324 = vmatpush1.bf16.msra.mxu0 %v3281
  %3325 = vmatprep.subr.bf16.mxu0 %v3284
  %3326 = vmatpush1.bf16.msra.mxu0 %v3283
  %3327 = vmatprep.subr.bf16.mxu0 %v3286
  %3328 = vmatpush1.bf16.msra.mxu0 %v3285
  %3329 = vmatprep.subr.bf16.mxu0 %v3288
  %3330 = vmatpush1.bf16.msra.mxu0 %v3287
  %3331 = vmatprep.subr.bf16.mxu0 %v3315
  %3332 = vmatpush1.bf16.msra.mxu0 %v3312
  %3333 = vmatprep.subr.bf16.mxu0 0
  %3334 = vmatpush1.bf16.msra.mxu0 0
  %3335 = vmatprep.subr.bf16.mxu0 0
  %3336 = vmatpush1.bf16.msra.mxu0 0
  %3337 = vmatprep.subr.bf16.mxu0 0
  %3338 = vmatpush1.bf16.msra.mxu0 0
  %3339 = vmatprep.subr.bf16.mxu0 0
  %3340 = vmatpush1.bf16.msra.mxu0 0
  %3341 = vmatprep.subr.bf16.mxu0 0
  %3342 = vmatpush1.bf16.msra.mxu0 0
  %3343 = vmatprep.subr.bf16.mxu0 0
  %3344 = vmatpush1.bf16.msra.mxu0 0
  %3345 = vmatprep.subr.bf16.mxu0 0
  %3346 = vmatpush1.bf16.msra.mxu0 0
  %3347 = vmatprep.subr.bf16.mxu0 0
  %3348 = vmatpush1.bf16.msra.mxu0 0
  %3349 = vmatprep.mubr.bf16.mxu0 0
  %3350 = vmatmul.mubr.bf16.gmra.mrb[0].mxu0 %v3306
  %v3351 = vpop.f32.mrb[0].mxu0
  %v3352 = vadd.f32 0.0, %v3351
  %v3353 = vpop.f32.mrb[0].mxu0
  %v3354 = vadd.f32 0.0, %v3353
  %v3355 = vpop.f32.mrb[0].mxu0
  %v3356 = vadd.f32 0.0, %v3355
  %v3357 = vpop.f32.mrb[0].mxu0
  %v3358 = vadd.f32 0.0, %v3357
  %3359 = vmatprep.mubr.bf16.mxu0 0
  %3360 = vmatmul.mubr.bf16.gmra.mrb[0].mxu0 %v3309
  %v3361 = vpop.f32.mrb[0].mxu0
  %v3362 = vadd.f32 0.0, %v3361
  %v3363 = vpop.f32.mrb[0].mxu0
  %v3364 = vadd.f32 0.0, %v3363
  %v3365 = vpop.f32.mrb[0].mxu0
  %v3366 = vadd.f32 0.0, %v3365
  %v3367 = vpop.f32.mrb[0].mxu0
  %v3368 = vadd.f32 0.0, %v3367
  %3369 = vdwg.mxu0
  %v3370 = vadd.f32 %v3222, %v3352
  %v3371 = vadd.f32 %v3223, %v3354
  %v3372 = vadd.f32 %v3224, %v3356
  %v3373 = vadd.f32 %v3225, %v3358
  %v3374 = vadd.f32 %v3226, %v3362
  %v3375 = vadd.f32 %v3227, %v3364
  %v3376 = vadd.f32 %v3228, %v3366
  %v3377 = vadd.f32 %v3229, %v3368
  %3378 = vmatprep.subr.bf16.mxu0 %v2698
  %3379 = vmatpush1.bf16.msra.mxu0 %v2697
  %3380 = vmatprep.subr.bf16.mxu0 %v2700
  %3381 = vmatpush1.bf16.msra.mxu0 %v2699
  %3382 = vmatprep.subr.bf16.mxu0 %v2702
  %3383 = vmatpush1.bf16.msra.mxu0 %v2701
  %3384 = vmatprep.subr.bf16.mxu0 %v2704
  %3385 = vmatpush1.bf16.msra.mxu0 %v2703
  %3386 = vmatprep.subr.bf16.mxu0 %v2706
  %3387 = vmatpush1.bf16.msra.mxu0 %v2705
  %3388 = vmatprep.subr.bf16.mxu0 %v2708
  %3389 = vmatpush1.bf16.msra.mxu0 %v2707
  %3390 = vmatprep.subr.bf16.mxu0 %v2710
  %3391 = vmatpush1.bf16.msra.mxu0 %v2709
  %3392 = vmatprep.subr.bf16.mxu0 %v2739
  %3393 = vmatpush1.bf16.msra.mxu0 %v2736
  %3394 = vmatprep.subr.bf16.mxu0 0
  %3395 = vmatpush1.bf16.msra.mxu0 0
  %3396 = vmatprep.subr.bf16.mxu0 0
  %3397 = vmatpush1.bf16.msra.mxu0 0
  %3398 = vmatprep.subr.bf16.mxu0 0
  %3399 = vmatpush1.bf16.msra.mxu0 0
  %3400 = vmatprep.subr.bf16.mxu0 0
  %3401 = vmatpush1.bf16.msra.mxu0 0
  %3402 = vmatprep.subr.bf16.mxu0 0
  %3403 = vmatpush1.bf16.msra.mxu0 0
  %3404 = vmatprep.subr.bf16.mxu0 0
  %3405 = vmatpush1.bf16.msra.mxu0 0
  %3406 = vmatprep.subr.bf16.mxu0 0
  %3407 = vmatpush1.bf16.msra.mxu0 0
  %3408 = vmatprep.subr.bf16.mxu0 0
  %3409 = vmatpush1.bf16.msra.mxu0 0
  %3410 = vmatprep.mubr.bf16.mxu0 0
  %3411 = vmatmul.mubr.bf16.gmra.mrb[0].mxu0 %v3010
  %v3412 = vpop.f32.mrb[0].mxu0
  %v3413 = vadd.f32 0.0, %v3412
  %v3414 = vpop.f32.mrb[0].mxu0
  %v3415 = vadd.f32 0.0, %v3414
  %v3416 = vpop.f32.mrb[0].mxu0
  %v3417 = vadd.f32 0.0, %v3416
  %v3418 = vpop.f32.mrb[0].mxu0
  %v3419 = vadd.f32 0.0, %v3418
  %3420 = vmatprep.mubr.bf16.mxu0 0
  %3421 = vmatmul.mubr.bf16.gmra.mrb[0].mxu0 %v3013
  %v3422 = vpop.f32.mrb[0].mxu0
  %v3423 = vadd.f32 0.0, %v3422
  %v3424 = vpop.f32.mrb[0].mxu0
  %v3425 = vadd.f32 0.0, %v3424
  %v3426 = vpop.f32.mrb[0].mxu0
  %v3427 = vadd.f32 0.0, %v3426
  %v3428 = vpop.f32.mrb[0].mxu0
  %v3429 = vadd.f32 0.0, %v3428
  %3430 = vdwg.mxu0
  %3431 = vmatprep.subr.bf16.mxu0 %v2840
  %3432 = vmatpush1.bf16.msra.mxu0 %v2839
  %3433 = vmatprep.subr.bf16.mxu0 %v2842
  %3434 = vmatpush1.bf16.msra.mxu0 %v2841
  %3435 = vmatprep.subr.bf16.mxu0 %v2844
  %3436 = vmatpush1.bf16.msra.mxu0 %v2843
  %3437 = vmatprep.subr.bf16.mxu0 %v2846
  %3438 = vmatpush1.bf16.msra.mxu0 %v2845
  %3439 = vmatprep.subr.bf16.mxu0 %v2848
  %3440 = vmatpush1.bf16.msra.mxu0 %v2847
  %3441 = vmatprep.subr.bf16.mxu0 %v2850
  %3442 = vmatpush1.bf16.msra.mxu0 %v2849
  %3443 = vmatprep.subr.bf16.mxu0 %v2852
  %3444 = vmatpush1.bf16.msra.mxu0 %v2851
  %3445 = vmatprep.subr.bf16.mxu0 %v2879
  %3446 = vmatpush1.bf16.msra.mxu0 %v2876
  %3447 = vmatprep.subr.bf16.mxu0 0
  %3448 = vmatpush1.bf16.msra.mxu0 0
  %3449 = vmatprep.subr.bf16.mxu0 0
  %3450 = vmatpush1.bf16.msra.mxu0 0
  %3451 = vmatprep.subr.bf16.mxu0 0
  %3452 = vmatpush1.bf16.msra.mxu0 0
  %3453 = vmatprep.subr.bf16.mxu0 0
  %3454 = vmatpush1.bf16.msra.mxu0 0
  %3455 = vmatprep.subr.bf16.mxu0 0
  %3456 = vmatpush1.bf16.msra.mxu0 0
  %3457 = vmatprep.subr.bf16.mxu0 0
  %3458 = vmatpush1.bf16.msra.mxu0 0
  %3459 = vmatprep.subr.bf16.mxu0 0
  %3460 = vmatpush1.bf16.msra.mxu0 0
  %3461 = vmatprep.subr.bf16.mxu0 0
  %3462 = vmatpush1.bf16.msra.mxu0 0
  %3463 = vmatprep.mubr.bf16.mxu0 0
  %3464 = vmatmul.mubr.bf16.gmra.mrb[0].mxu0 %v2729
  %v3465 = vpop.f32.mrb[0].mxu0
  %v3466 = vadd.f32 %v3413, %v3465
  %v3467 = vpop.f32.mrb[0].mxu0
  %v3468 = vadd.f32 %v3415, %v3467
  %v3469 = vpop.f32.mrb[0].mxu0
  %v3470 = vadd.f32 %v3417, %v3469
  %v3471 = vpop.f32.mrb[0].mxu0
  %v3472 = vadd.f32 %v3419, %v3471
  %3473 = vmatprep.mubr.bf16.mxu0 0
  %3474 = vmatmul.mubr.bf16.gmra.mrb[0].mxu0 %v2732
  %v3475 = vpop.f32.mrb[0].mxu0
  %v3476 = vadd.f32 %v3423, %v3475
  %v3477 = vpop.f32.mrb[0].mxu0
  %v3478 = vadd.f32 %v3425, %v3477
  %v3479 = vpop.f32.mrb[0].mxu0
  %v3480 = vadd.f32 %v3427, %v3479
  %v3481 = vpop.f32.mrb[0].mxu0
  %v3482 = vadd.f32 %v3429, %v3481
  %3483 = vdwg.mxu0
  %3484 = vmatprep.subr.bf16.mxu0 %v2980
  %3485 = vmatpush1.bf16.msra.mxu0 %v2979
  %3486 = vmatprep.subr.bf16.mxu0 %v2982
  %3487 = vmatpush1.bf16.msra.mxu0 %v2981
  %3488 = vmatprep.subr.bf16.mxu0 %v2984
  %3489 = vmatpush1.bf16.msra.mxu0 %v2983
  %3490 = vmatprep.subr.bf16.mxu0 %v2986
  %3491 = vmatpush1.bf16.msra.mxu0 %v2985
  %3492 = vmatprep.subr.bf16.mxu0 %v2988
  %3493 = vmatpush1.bf16.msra.mxu0 %v2987
  %3494 = vmatprep.subr.bf16.mxu0 %v2990
  %3495 = vmatpush1.bf16.msra.mxu0 %v2989
  %3496 = vmatprep.subr.bf16.mxu0 %v2992
  %3497 = vmatpush1.bf16.msra.mxu0 %v2991
  %3498 = vmatprep.subr.bf16.mxu0 %v3019
  %3499 = vmatpush1.bf16.msra.mxu0 %v3016
  %3500 = vmatprep.subr.bf16.mxu0 0
  %3501 = vmatpush1.bf16.msra.mxu0 0
  %3502 = vmatprep.subr.bf16.mxu0 0
  %3503 = vmatpush1.bf16.msra.mxu0 0
  %3504 = vmatprep.subr.bf16.mxu0 0
  %3505 = vmatpush1.bf16.msra.mxu0 0
  %3506 = vmatprep.subr.bf16.mxu0 0
  %3507 = vmatpush1.bf16.msra.mxu0 0
  %3508 = vmatprep.subr.bf16.mxu0 0
  %3509 = vmatpush1.bf16.msra.mxu0 0
  %3510 = vmatprep.subr.bf16.mxu0 0
  %3511 = vmatpush1.bf16.msra.mxu0 0
  %3512 = vmatprep.subr.bf16.mxu0 0
  %3513 = vmatpush1.bf16.msra.mxu0 0
  %3514 = vmatprep.subr.bf16.mxu0 0
  %3515 = vmatpush1.bf16.msra.mxu0 0
  %3516 = vmatprep.mubr.bf16.mxu0 0
  %3517 = vmatmul.mubr.bf16.gmra.mrb[0].mxu0 %v3158
  %v3518 = vpop.f32.mrb[0].mxu0
  %v3519 = vadd.f32 0.0, %v3518
  %v3520 = vpop.f32.mrb[0].mxu0
  %v3521 = vadd.f32 0.0, %v3520
  %v3522 = vpop.f32.mrb[0].mxu0
  %v3523 = vadd.f32 0.0, %v3522
  %v3524 = vpop.f32.mrb[0].mxu0
  %v3525 = vadd.f32 0.0, %v3524
  %3526 = vmatprep.mubr.bf16.mxu0 0
  %3527 = vmatmul.mubr.bf16.gmra.mrb[0].mxu0 %v3161
  %v3528 = vpop.f32.mrb[0].mxu0
  %v3529 = vadd.f32 0.0, %v3528
  %v3530 = vpop.f32.mrb[0].mxu0
  %v3531 = vadd.f32 0.0, %v3530
  %v3532 = vpop.f32.mrb[0].mxu0
  %v3533 = vadd.f32 0.0, %v3532
  %v3534 = vpop.f32.mrb[0].mxu0
  %v3535 = vadd.f32 0.0, %v3534
  %3536 = vdwg.mxu0
  %v3537 = vadd.f32 %v3466, %v3519
  %v3538 = vadd.f32 %v3468, %v3521
  %v3539 = vadd.f32 %v3470, %v3523
  %v3540 = vadd.f32 %v3472, %v3525
  %v3541 = vadd.f32 %v3476, %v3529
  %v3542 = vadd.f32 %v3478, %v3531
  %v3543 = vadd.f32 %v3480, %v3533
  %v3544 = vadd.f32 %v3482, %v3535
  %3545 = vmatprep.subr.bf16.mxu0 %v3128
  %3546 = vmatpush1.bf16.msra.mxu0 %v3127
  %3547 = vmatprep.subr.bf16.mxu0 %v3130
  %3548 = vmatpush1.bf16.msra.mxu0 %v3129
  %3549 = vmatprep.subr.bf16.mxu0 %v3132
  %3550 = vmatpush1.bf16.msra.mxu0 %v3131
  %3551 = vmatprep.subr.bf16.mxu0 %v3134
  %3552 = vmatpush1.bf16.msra.mxu0 %v3133
  %3553 = vmatprep.subr.bf16.mxu0 %v3136
  %3554 = vmatpush1.bf16.msra.mxu0 %v3135
  %3555 = vmatprep.subr.bf16.mxu0 %v3138
  %3556 = vmatpush1.bf16.msra.mxu0 %v3137
  %3557 = vmatprep.subr.bf16.mxu0 %v3140
  %3558 = vmatpush1.bf16.msra.mxu0 %v3139
  %3559 = vmatprep.subr.bf16.mxu0 %v3167
  %3560 = vmatpush1.bf16.msra.mxu0 %v3164
  %3561 = vmatprep.subr.bf16.mxu0 0
  %3562 = vmatpush1.bf16.msra.mxu0 0
  %3563 = vmatprep.subr.bf16.mxu0 0
  %3564 = vmatpush1.bf16.msra.mxu0 0
  %3565 = vmatprep.subr.bf16.mxu0 0
  %3566 = vmatpush1.bf16.msra.mxu0 0
  %3567 = vmatprep.subr.bf16.mxu0 0
  %3568 = vmatpush1.bf16.msra.mxu0 0
  %3569 = vmatprep.subr.bf16.mxu0 0
  %3570 = vmatpush1.bf16.msra.mxu0 0
  %3571 = vmatprep.subr.bf16.mxu0 0
  %3572 = vmatpush1.bf16.msra.mxu0 0
  %3573 = vmatprep.subr.bf16.mxu0 0
  %3574 = vmatpush1.bf16.msra.mxu0 0
  %3575 = vmatprep.subr.bf16.mxu0 0
  %3576 = vmatpush1.bf16.msra.mxu0 0
  %3577 = vmatprep.mubr.bf16.mxu0 0
  %3578 = vmatmul.mubr.bf16.gmra.mrb[0].mxu0 %v3306
  %v3579 = vpop.f32.mrb[0].mxu0
  %v3580 = vadd.f32 0.0, %v3579
  %v3581 = vpop.f32.mrb[0].mxu0
  %v3582 = vadd.f32 0.0, %v3581
  %v3583 = vpop.f32.mrb[0].mxu0
  %v3584 = vadd.f32 0.0, %v3583
  %v3585 = vpop.f32.mrb[0].mxu0
  %v3586 = vadd.f32 0.0, %v3585
  %3587 = vmatprep.mubr.bf16.mxu0 0
  %3588 = vmatmul.mubr.bf16.gmra.mrb[0].mxu0 %v3309
  %v3589 = vpop.f32.mrb[0].mxu0
  %v3590 = vadd.f32 0.0, %v3589
  %v3591 = vpop.f32.mrb[0].mxu0
  %v3592 = vadd.f32 0.0, %v3591
  %v3593 = vpop.f32.mrb[0].mxu0
  %v3594 = vadd.f32 0.0, %v3593
  %v3595 = vpop.f32.mrb[0].mxu0
  %v3596 = vadd.f32 0.0, %v3595
  %3597 = vdwg.mxu0
  %v3598 = vadd.f32 %v3537, %v3580
  %v3599 = vadd.f32 %v3538, %v3582
  %v3600 = vadd.f32 %v3539, %v3584
  %v3601 = vadd.f32 %v3540, %v3586
  %v3602 = vadd.f32 %v3541, %v3590
  %v3603 = vadd.f32 %v3542, %v3592
  %v3604 = vadd.f32 %v3543, %v3594
  %v3605 = vadd.f32 %v3544, %v3596
  %v3607 = vsel %vm2727, %v2571, 0
  %v3610 = vsel %vm2727, %v2572, 0
  %3612 = vmatprep.subr.bf16.mxu0 %v3276
  %3613 = vmatpush1.bf16.msra.mxu0 %v3275
  %3614 = vmatprep.subr.bf16.mxu0 %v3278
  %3615 = vmatpush1.bf16.msra.mxu0 %v3277
  %3616 = vmatprep.subr.bf16.mxu0 %v3280
  %3617 = vmatpush1.bf16.msra.mxu0 %v3279
  %3618 = vmatprep.subr.bf16.mxu0 %v3282
  %3619 = vmatpush1.bf16.msra.mxu0 %v3281
  %3620 = vmatprep.subr.bf16.mxu0 %v3284
  %3621 = vmatpush1.bf16.msra.mxu0 %v3283
  %3622 = vmatprep.subr.bf16.mxu0 %v3286
  %3623 = vmatpush1.bf16.msra.mxu0 %v3285
  %3624 = vmatprep.subr.bf16.mxu0 %v3288
  %3625 = vmatpush1.bf16.msra.mxu0 %v3287
  %3626 = vmatprep.subr.bf16.mxu0 %v3315
  %3627 = vmatpush1.bf16.msra.mxu0 %v3312
  %3628 = vmatprep.subr.bf16.mxu0 0
  %3629 = vmatpush1.bf16.msra.mxu0 0
  %3630 = vmatprep.subr.bf16.mxu0 0
  %3631 = vmatpush1.bf16.msra.mxu0 0
  %3632 = vmatprep.subr.bf16.mxu0 0
  %3633 = vmatpush1.bf16.msra.mxu0 0
  %3634 = vmatprep.subr.bf16.mxu0 0
  %3635 = vmatpush1.bf16.msra.mxu0 0
  %3636 = vmatprep.subr.bf16.mxu0 0
  %3637 = vmatpush1.bf16.msra.mxu0 0
  %3638 = vmatprep.subr.bf16.mxu0 0
  %3639 = vmatpush1.bf16.msra.mxu0 0
  %3640 = vmatprep.subr.bf16.mxu0 0
  %3641 = vmatpush1.bf16.msra.mxu0 0
  %3642 = vmatprep.subr.bf16.mxu0 0
  %3643 = vmatpush1.bf16.msra.mxu0 0
  %3644 = vmatprep.mubr.bf16.mxu0 0
  %3645 = vmatmul.mubr.bf16.gmra.mrb[0].mxu0 %v3607
  %v3646 = vpop.f32.mrb[0].mxu0
  %v3647 = vadd.f32 0.0, %v3646
  %v3648 = vpop.f32.mrb[0].mxu0
  %v3649 = vadd.f32 0.0, %v3648
  %v3650 = vpop.f32.mrb[0].mxu0
  %v3651 = vadd.f32 0.0, %v3650
  %v3652 = vpop.f32.mrb[0].mxu0
  %v3653 = vadd.f32 0.0, %v3652
  %3654 = vmatprep.mubr.bf16.mxu0 0
  %3655 = vmatmul.mubr.bf16.gmra.mrb[0].mxu0 %v3610
  %v3656 = vpop.f32.mrb[0].mxu0
  %v3657 = vadd.f32 0.0, %v3656
  %v3658 = vpop.f32.mrb[0].mxu0
  %v3659 = vadd.f32 0.0, %v3658
  %v3660 = vpop.f32.mrb[0].mxu0
  %v3661 = vadd.f32 0.0, %v3660
  %v3662 = vpop.f32.mrb[0].mxu0
  %v3663 = vadd.f32 0.0, %v3662
  %3664 = vdwg.mxu0
  %v3665 = vadd.f32 %v3598, %v3647
  %v3666 = vadd.f32 %v3599, %v3649
  %v3667 = vadd.f32 %v3600, %v3651
  %v3668 = vadd.f32 %v3601, %v3653
  %v3669 = vadd.f32 %v3602, %v3657
  %v3670 = vadd.f32 %v3603, %v3659
  %v3671 = vadd.f32 %v3604, %v3661
  %v3672 = vadd.f32 %v3605, %v3663
  %3681 = vrot.lane.b32.xlu0 %v3370, 48
  %v3682 = vpop.permute.xlu0 %3681
  %3683 = vrot.lane.b32.xlu0 %v3371, 48
  %v3684 = vpop.permute.xlu0 %3683
  %3685 = vrot.lane.b32.xlu0 %v3372, 48
  %v3686 = vpop.permute.xlu0 %3685
  %3687 = vrot.lane.b32.xlu0 %v3373, 48
  %v3688 = vpop.permute.xlu0 %3687
  %3689 = vrot.lane.b32.xlu0 %v3374, 48
  %v3690 = vpop.permute.xlu0 %3689
  %3691 = vrot.lane.b32.xlu0 %v3375, 48
  %v3692 = vpop.permute.xlu0 %3691
  %3693 = vrot.lane.b32.xlu0 %v3376, 48
  %v3694 = vpop.permute.xlu0 %3693
  %3695 = vrot.lane.b32.xlu0 %v3377, 48
  %v3696 = vpop.permute.xlu0 %3695
  %v3697 = vsel %vm2004, %v3682, %v3684
  %v3698 = vsel %vm2004, %v3686, %v3688
  %v3699 = vsel %vm2004, %v3690, %v3692
  %v3700 = vsel %vm2004, %v3694, %v3696
  %v3705 = vmax.f32 %v3370, %v3697
  %v3706 = vmax.f32 %v3372, %v3698
  %v3707 = vmax.f32 %v3374, %v3699
  %v3708 = vmax.f32 %v3376, %v3700
  %3717 = vrot.lane.b32.xlu0 %v3665, 48
  %v3718 = vpop.permute.xlu0 %3717
  %3719 = vrot.lane.b32.xlu0 %v3666, 48
  %v3720 = vpop.permute.xlu0 %3719
  %3721 = vrot.lane.b32.xlu0 %v3667, 48
  %v3722 = vpop.permute.xlu0 %3721
  %3723 = vrot.lane.b32.xlu0 %v3668, 48
  %v3724 = vpop.permute.xlu0 %3723
  %3725 = vrot.lane.b32.xlu0 %v3669, 48
  %v3726 = vpop.permute.xlu0 %3725
  %3727 = vrot.lane.b32.xlu0 %v3670, 48
  %v3728 = vpop.permute.xlu0 %3727
  %3729 = vrot.lane.b32.xlu0 %v3671, 48
  %v3730 = vpop.permute.xlu0 %3729
  %3731 = vrot.lane.b32.xlu0 %v3672, 48
  %v3732 = vpop.permute.xlu0 %3731
  %v3733 = vsel %vm2004, %v3718, %v3720
  %v3734 = vsel %vm2004, %v3722, %v3724
  %v3735 = vsel %vm2004, %v3726, %v3728
  %v3736 = vsel %vm2004, %v3730, %v3732
  %v3741 = vmax.f32 %v3665, %v3733
  %v3742 = vmax.f32 %v3667, %v3734
  %v3743 = vmax.f32 %v3669, %v3735
  %v3744 = vmax.f32 %v3671, %v3736
  %v3745 = vmax.f32 %v3705, %v3741
  %v3746 = vmax.f32 %v3706, %v3742
  %v3747 = vmax.f32 %v3707, %v3743
  %v3748 = vmax.f32 %v3708, %v3744
  %v3749 = vld [vmem:[%s4] sm:$0x1]
  %v3751 = vlaneseq
  %v3752 = vshrl.u32 %v3751, 7
  %v3753 = vsub.s32 0, %v3752
  %v3754 = vrot.slane %v3749, %v3753
  %v3756 = vadd.f32 %v3745, %v3754
  %v3757 = vadd.f32 %v3746, %v3754
  %v3758 = vadd.f32 %v3747, %v3754
  %v3759 = vadd.f32 %v3748, %v3754
  %v3760 = vmax.f32 %v3756, 0.0
  %v3761 = vmax.f32 %v3757, 0.0
  %v3762 = vmax.f32 %v3758, 0.0
  %v3763 = vmax.f32 %v3759, 0.0
  %v3764 = vld [vmem:[%s6] sm:$0xff]
  %vm3765 = vcmask 261120
  %v3767 = vsel %vm3765, %v3764, 0
  %3769 = vmatprep.subr.mxu0 0.0
  %3770 = vmatpush1.msra.mxu0 %v3760
  %3771 = vmatprep.subr.mxu0 0.0
  %3772 = vmatpush1.msra.mxu0 %v3761
  %3773 = vmatprep.subr.mxu0 0.0
  %3774 = vmatpush1.msra.mxu0 %v3762
  %3775 = vmatprep.subr.mxu0 0.0
  %3776 = vmatpush1.msra.mxu0 %v3763
  %3777 = vmatprep.subr.mxu0 0.0
  %3778 = vmatpush1.msra.mxu0 0.0
  %3779 = vmatprep.subr.mxu0 0.0
  %3780 = vmatpush1.msra.mxu0 0.0
  %3781 = vmatprep.subr.mxu0 0.0
  %3782 = vmatpush1.msra.mxu0 0.0
  %3783 = vmatprep.subr.mxu0 0.0
  %3784 = vmatpush1.msra.mxu0 0.0
  %3785 = vmatprep.subr.mxu0 0.0
  %3786 = vmatpush1.msra.mxu0 0.0
  %3787 = vmatprep.subr.mxu0 0.0
  %3788 = vmatpush1.msra.mxu0 0.0
  %3789 = vmatprep.subr.mxu0 0.0
  %3790 = vmatpush1.msra.mxu0 0.0
  %3791 = vmatprep.subr.mxu0 0.0
  %3792 = vmatpush1.msra.mxu0 0.0
  %3793 = vmatprep.subr.mxu0 0.0
  %3794 = vmatpush1.msra.mxu0 0.0
  %3795 = vmatprep.subr.mxu0 0.0
  %3796 = vmatpush1.msra.mxu0 0.0
  %3797 = vmatprep.subr.mxu0 0.0
  %3798 = vmatpush1.msra.mxu0 0.0
  %3799 = vmatprep.subr.mxu0 0.0
  %3800 = vmatpush1.msra.mxu0 0.0
  %3801 = vmatprep.subr.mxu0 0.0
  %3802 = vmatpush1.msra.mxu0 0.0
  %3803 = vmatprep.subr.mxu0 0.0
  %3804 = vmatpush1.msra.mxu0 0.0
  %3805 = vmatprep.subr.mxu0 0.0
  %3806 = vmatpush1.msra.mxu0 0.0
  %3807 = vmatprep.subr.mxu0 0.0
  %3808 = vmatpush1.msra.mxu0 0.0
  %3809 = vmatprep.subr.mxu0 0.0
  %3810 = vmatpush1.msra.mxu0 0.0
  %3811 = vmatprep.subr.mxu0 0.0
  %3812 = vmatpush1.msra.mxu0 0.0
  %3813 = vmatprep.subr.mxu0 0.0
  %3814 = vmatpush1.msra.mxu0 0.0
  %3815 = vmatprep.subr.mxu0 0.0
  %3816 = vmatpush1.msra.mxu0 0.0
  %3817 = vmatprep.subr.mxu0 0.0
  %3818 = vmatpush1.msra.mxu0 0.0
  %3819 = vmatprep.subr.mxu0 0.0
  %3820 = vmatpush1.msra.mxu0 0.0
  %3821 = vmatprep.subr.mxu0 0.0
  %3822 = vmatpush1.msra.mxu0 0.0
  %3823 = vmatprep.subr.mxu0 0.0
  %3824 = vmatpush1.msra.mxu0 0.0
  %3825 = vmatprep.subr.mxu0 0.0
  %3826 = vmatpush1.msra.mxu0 0.0
  %3827 = vmatprep.subr.mxu0 0.0
  %3828 = vmatpush1.msra.mxu0 0.0
  %3829 = vmatprep.subr.mxu0 0.0
  %3830 = vmatpush1.msra.mxu0 0.0
  %3831 = vmatprep.subr.mxu0 0.0
  %3832 = vmatpush1.msra.mxu0 0.0
  %3833 = vmatprep.mubr.f32.mxu0 0.0
  %3834 = vmatmul.mubr.f32.gmra.mrb[0].mxu0 %v3767
  %v3835 = vpop.f32.mrb[0].mxu0
  %v3836 = vadd.f32 0.0, %v3835
  %v3837 = vpop.f32.mrb[0].mxu0
  %3838 = vdwg.mxu0
  %s3839 = scalar_lea.vmem %s6, 8
  %v3840 = vld [vmem:[%s3839] sm:$0xff]
  %v3842 = vsel %vm3765, %v3840, 0
  %3844 = vmatprep.subr.mxu0 0.0
  %3845 = vmatpush1.msra.mxu0 %v3760
  %3846 = vmatprep.subr.mxu0 0.0
  %3847 = vmatpush1.msra.mxu0 %v3761
  %3848 = vmatprep.subr.mxu0 0.0
  %3849 = vmatpush1.msra.mxu0 %v3762
  %3850 = vmatprep.subr.mxu0 0.0
  %3851 = vmatpush1.msra.mxu0 %v3763
  %3852 = vmatprep.subr.mxu0 0.0
  %3853 = vmatpush1.msra.mxu0 0.0
  %3854 = vmatprep.subr.mxu0 0.0
  %3855 = vmatpush1.msra.mxu0 0.0
  %3856 = vmatprep.subr.mxu0 0.0
  %3857 = vmatpush1.msra.mxu0 0.0
  %3858 = vmatprep.subr.mxu0 0.0
  %3859 = vmatpush1.msra.mxu0 0.0
  %3860 = vmatprep.subr.mxu0 0.0
  %3861 = vmatpush1.msra.mxu0 0.0
  %3862 = vmatprep.subr.mxu0 0.0
  %3863 = vmatpush1.msra.mxu0 0.0
  %3864 = vmatprep.subr.mxu0 0.0
  %3865 = vmatpush1.msra.mxu0 0.0
  %3866 = vmatprep.subr.mxu0 0.0
  %3867 = vmatpush1.msra.mxu0 0.0
  %3868 = vmatprep.subr.mxu0 0.0
  %3869 = vmatpush1.msra.mxu0 0.0
  %3870 = vmatprep.subr.mxu0 0.0
  %3871 = vmatpush1.msra.mxu0 0.0
  %3872 = vmatprep.subr.mxu0 0.0
  %3873 = vmatpush1.msra.mxu0 0.0
  %3874 = vmatprep.subr.mxu0 0.0
  %3875 = vmatpush1.msra.mxu0 0.0
  %3876 = vmatprep.subr.mxu0 0.0
  %3877 = vmatpush1.msra.mxu0 0.0
  %3878 = vmatprep.subr.mxu0 0.0
  %3879 = vmatpush1.msra.mxu0 0.0
  %3880 = vmatprep.subr.mxu0 0.0
  %3881 = vmatpush1.msra.mxu0 0.0
  %3882 = vmatprep.subr.mxu0 0.0
  %3883 = vmatpush1.msra.mxu0 0.0
  %3884 = vmatprep.subr.mxu0 0.0
  %3885 = vmatpush1.msra.mxu0 0.0
  %3886 = vmatprep.subr.mxu0 0.0
  %3887 = vmatpush1.msra.mxu0 0.0
  %3888 = vmatprep.subr.mxu0 0.0
  %3889 = vmatpush1.msra.mxu0 0.0
  %3890 = vmatprep.subr.mxu0 0.0
  %3891 = vmatpush1.msra.mxu0 0.0
  %3892 = vmatprep.subr.mxu0 0.0
  %3893 = vmatpush1.msra.mxu0 0.0
  %3894 = vmatprep.subr.mxu0 0.0
  %3895 = vmatpush1.msra.mxu0 0.0
  %3896 = vmatprep.subr.mxu0 0.0
  %3897 = vmatpush1.msra.mxu0 0.0
  %3898 = vmatprep.subr.mxu0 0.0
  %3899 = vmatpush1.msra.mxu0 0.0
  %3900 = vmatprep.subr.mxu0 0.0
  %3901 = vmatpush1.msra.mxu0 0.0
  %3902 = vmatprep.subr.mxu0 0.0
  %3903 = vmatpush1.msra.mxu0 0.0
  %3904 = vmatprep.subr.mxu0 0.0
  %3905 = vmatpush1.msra.mxu0 0.0
  %3906 = vmatprep.subr.mxu0 0.0
  %3907 = vmatpush1.msra.mxu0 0.0
  %3908 = vmatprep.mubr.f32.mxu0 0.0
  %3909 = vmatmul.mubr.f32.gmra.mrb[0].mxu0 %v3842
  %v3910 = vpop.f32.mrb[0].mxu0
  %v3911 = vadd.f32 0.0, %v3910
  %v3912 = vpop.f32.mrb[0].mxu0
  %3913 = vdwg.mxu0
  %s3914 = scalar_lea.vmem %s6, 16
  %v3915 = vld [vmem:[%s3914] sm:$0xff]
  %v3917 = vsel %vm3765, %v3915, 0
  %3919 = vmatprep.subr.mxu0 0.0
  %3920 = vmatpush1.msra.mxu0 %v3760
  %3921 = vmatprep.subr.mxu0 0.0
  %3922 = vmatpush1.msra.mxu0 %v3761
  %3923 = vmatprep.subr.mxu0 0.0
  %3924 = vmatpush1.msra.mxu0 %v3762
  %3925 = vmatprep.subr.mxu0 0.0
  %3926 = vmatpush1.msra.mxu0 %v3763
  %3927 = vmatprep.subr.mxu0 0.0
  %3928 = vmatpush1.msra.mxu0 0.0
  %3929 = vmatprep.subr.mxu0 0.0
  %3930 = vmatpush1.msra.mxu0 0.0
  %3931 = vmatprep.subr.mxu0 0.0
  %3932 = vmatpush1.msra.mxu0 0.0
  %3933 = vmatprep.subr.mxu0 0.0
  %3934 = vmatpush1.msra.mxu0 0.0
  %3935 = vmatprep.subr.mxu0 0.0
  %3936 = vmatpush1.msra.mxu0 0.0
  %3937 = vmatprep.subr.mxu0 0.0
  %3938 = vmatpush1.msra.mxu0 0.0
  %3939 = vmatprep.subr.mxu0 0.0
  %3940 = vmatpush1.msra.mxu0 0.0
  %3941 = vmatprep.subr.mxu0 0.0
  %3942 = vmatpush1.msra.mxu0 0.0
  %3943 = vmatprep.subr.mxu0 0.0
  %3944 = vmatpush1.msra.mxu0 0.0
  %3945 = vmatprep.subr.mxu0 0.0
  %3946 = vmatpush1.msra.mxu0 0.0
  %3947 = vmatprep.subr.mxu0 0.0
  %3948 = vmatpush1.msra.mxu0 0.0
  %3949 = vmatprep.subr.mxu0 0.0
  %3950 = vmatpush1.msra.mxu0 0.0
  %3951 = vmatprep.subr.mxu0 0.0
  %3952 = vmatpush1.msra.mxu0 0.0
  %3953 = vmatprep.subr.mxu0 0.0
  %3954 = vmatpush1.msra.mxu0 0.0
  %3955 = vmatprep.subr.mxu0 0.0
  %3956 = vmatpush1.msra.mxu0 0.0
  %3957 = vmatprep.subr.mxu0 0.0
  %3958 = vmatpush1.msra.mxu0 0.0
  %3959 = vmatprep.subr.mxu0 0.0
  %3960 = vmatpush1.msra.mxu0 0.0
  %3961 = vmatprep.subr.mxu0 0.0
  %3962 = vmatpush1.msra.mxu0 0.0
  %3963 = vmatprep.subr.mxu0 0.0
  %3964 = vmatpush1.msra.mxu0 0.0
  %3965 = vmatprep.subr.mxu0 0.0
  %3966 = vmatpush1.msra.mxu0 0.0
  %3967 = vmatprep.subr.mxu0 0.0
  %3968 = vmatpush1.msra.mxu0 0.0
  %3969 = vmatprep.subr.mxu0 0.0
  %3970 = vmatpush1.msra.mxu0 0.0
  %3971 = vmatprep.subr.mxu0 0.0
  %3972 = vmatpush1.msra.mxu0 0.0
  %3973 = vmatprep.subr.mxu0 0.0
  %3974 = vmatpush1.msra.mxu0 0.0
  %3975 = vmatprep.subr.mxu0 0.0
  %3976 = vmatpush1.msra.mxu0 0.0
  %3977 = vmatprep.subr.mxu0 0.0
  %3978 = vmatpush1.msra.mxu0 0.0
  %3979 = vmatprep.subr.mxu0 0.0
  %3980 = vmatpush1.msra.mxu0 0.0
  %3981 = vmatprep.subr.mxu0 0.0
  %3982 = vmatpush1.msra.mxu0 0.0
  %3983 = vmatprep.mubr.f32.mxu0 0.0
  %3984 = vmatmul.mubr.f32.gmra.mrb[0].mxu0 %v3917
  %v3985 = vpop.f32.mrb[0].mxu0
  %v3986 = vadd.f32 0.0, %v3985
  %v3987 = vpop.f32.mrb[0].mxu0
  %3988 = vdwg.mxu0
  %s3989 = scalar_lea.vmem %s6, 24
  %v3990 = vld [vmem:[%s3989] sm:$0xff]
  %v3992 = vsel %vm3765, %v3990, 0
  %3994 = vmatprep.subr.mxu0 0.0
  %3995 = vmatpush1.msra.mxu0 %v3760
  %3996 = vmatprep.subr.mxu0 0.0
  %3997 = vmatpush1.msra.mxu0 %v3761
  %3998 = vmatprep.subr.mxu0 0.0
  %3999 = vmatpush1.msra.mxu0 %v3762
  %4000 = vmatprep.subr.mxu0 0.0
  %4001 = vmatpush1.msra.mxu0 %v3763
  %4002 = vmatprep.subr.mxu0 0.0
  %4003 = vmatpush1.msra.mxu0 0.0
  %4004 = vmatprep.subr.mxu0 0.0
  %4005 = vmatpush1.msra.mxu0 0.0
  %4006 = vmatprep.subr.mxu0 0.0
  %4007 = vmatpush1.msra.mxu0 0.0
  %4008 = vmatprep.subr.mxu0 0.0
  %4009 = vmatpush1.msra.mxu0 0.0
  %4010 = vmatprep.subr.mxu0 0.0
  %4011 = vmatpush1.msra.mxu0 0.0
  %4012 = vmatprep.subr.mxu0 0.0
  %4013 = vmatpush1.msra.mxu0 0.0
  %4014 = vmatprep.subr.mxu0 0.0
  %4015 = vmatpush1.msra.mxu0 0.0
  %4016 = vmatprep.subr.mxu0 0.0
  %4017 = vmatpush1.msra.mxu0 0.0
  %4018 = vmatprep.subr.mxu0 0.0
  %4019 = vmatpush1.msra.mxu0 0.0
  %4020 = vmatprep.subr.mxu0 0.0
  %4021 = vmatpush1.msra.mxu0 0.0
  %4022 = vmatprep.subr.mxu0 0.0
  %4023 = vmatpush1.msra.mxu0 0.0
  %4024 = vmatprep.subr.mxu0 0.0
  %4025 = vmatpush1.msra.mxu0 0.0
  %4026 = vmatprep.subr.mxu0 0.0
  %4027 = vmatpush1.msra.mxu0 0.0
  %4028 = vmatprep.subr.mxu0 0.0
  %4029 = vmatpush1.msra.mxu0 0.0
  %4030 = vmatprep.subr.mxu0 0.0
  %4031 = vmatpush1.msra.mxu0 0.0
  %4032 = vmatprep.subr.mxu0 0.0
  %4033 = vmatpush1.msra.mxu0 0.0
  %4034 = vmatprep.subr.mxu0 0.0
  %4035 = vmatpush1.msra.mxu0 0.0
  %4036 = vmatprep.subr.mxu0 0.0
  %4037 = vmatpush1.msra.mxu0 0.0
  %4038 = vmatprep.subr.mxu0 0.0
  %4039 = vmatpush1.msra.mxu0 0.0
  %4040 = vmatprep.subr.mxu0 0.0
  %4041 = vmatpush1.msra.mxu0 0.0
  %4042 = vmatprep.subr.mxu0 0.0
  %4043 = vmatpush1.msra.mxu0 0.0
  %4044 = vmatprep.subr.mxu0 0.0
  %4045 = vmatpush1.msra.mxu0 0.0
  %4046 = vmatprep.subr.mxu0 0.0
  %4047 = vmatpush1.msra.mxu0 0.0
  %4048 = vmatprep.subr.mxu0 0.0
  %4049 = vmatpush1.msra.mxu0 0.0
  %4050 = vmatprep.subr.mxu0 0.0
  %4051 = vmatpush1.msra.mxu0 0.0
  %4052 = vmatprep.subr.mxu0 0.0
  %4053 = vmatpush1.msra.mxu0 0.0
  %4054 = vmatprep.subr.mxu0 0.0
  %4055 = vmatpush1.msra.mxu0 0.0
  %4056 = vmatprep.subr.mxu0 0.0
  %4057 = vmatpush1.msra.mxu0 0.0
  %4058 = vmatprep.mubr.f32.mxu0 0.0
  %4059 = vmatmul.mubr.f32.gmra.mrb[0].mxu0 %v3992
  %v4060 = vpop.f32.mrb[0].mxu0
  %v4061 = vadd.f32 0.0, %v4060
  %v4062 = vpop.f32.mrb[0].mxu0
  %4063 = vdwg.mxu0
  %4065 = vrot.lane.b32.xlu0 %v3911, 80
  %v4066 = vpop.permute.xlu0 %4065
  %4069 = vrot.lane.b32.xlu0 %v3986, 32
  %v4070 = vpop.permute.xlu0 %4069
  %4073 = vrot.lane.b32.xlu0 %v4061, 112
  %v4074 = vpop.permute.xlu0 %4073
  %vm4076 = vcmask 654336
  %v4077 = vsel %vm4076, %v3836, %v4066
  %v4078 = vsel %vm3765, %v4066, %v4070
  %vm4079 = vcmask 916480
  %v4080 = vsel %vm4079, %v4078, %v4074
  %v4081 = vpack.c.bf16 %v4077, %v4077
  %v4082 = vpack.c.bf16 %v4080, %v4080
  %v4083 = vpack.c.bf16 %v4074, %v4074
  %v4084 = vld [vmem:[%s7] sm:$0xf]
  %v4085 = vld [vmem:[%s7 + $0x4] sm:$0xf]
  %v4086 = vld [vmem:[%s7 + $0x8] sm:$0xf]
  %v4087 = vld [vmem:[%s7 + $0xc] sm:$0xf]
  %v4088 = vld [vmem:[%s7 + $0x10] sm:$0xf]
  %v4089 = vld [vmem:[%s7 + $0x14] sm:$0xf]
  %v4090 = vld [vmem:[%s7 + $0x18] sm:$0xf]
  %v4091 = vld [vmem:[%s7 + $0x1c] sm:$0xf]
  %v4092 = vld [vmem:[%s7 + $0x20] sm:$0xf]
  %v4093 = vld [vmem:[%s7 + $0x24] sm:$0xf]
  %v4094 = vld [vmem:[%s7 + $0x28] sm:$0xf]
  %v4095 = vld [vmem:[%s7 + $0x2c] sm:$0xf]
  %v4096 = vld [vmem:[%s7 + $0x30] sm:$0xf]
  %v4097 = vld [vmem:[%s7 + $0x34] sm:$0xf]
  %v4098 = vld [vmem:[%s7 + $0x38] sm:$0xf]
  %v4099 = vld [vmem:[%s7 + $0x3c] sm:$0xf]
  %v4100 = vld [vmem:[%s7 + $0x40] sm:$0xf]
  %v4101 = vld [vmem:[%s7 + $0x44] sm:$0xf]
  %v4102 = vld [vmem:[%s7 + $0x48] sm:$0xf]
  %v4103 = vld [vmem:[%s7 + $0x4c] sm:$0xf]
  %v4104 = vld [vmem:[%s7 + $0x50] sm:$0xf]
  %v4105 = vld [vmem:[%s7 + $0x54] sm:$0xf]
  %v4106 = vld [vmem:[%s7 + $0x58] sm:$0xf]
  %v4107 = vld [vmem:[%s7 + $0x5c] sm:$0xf]
  %v4108 = vld [vmem:[%s7 + $0x60] sm:$0xf]
  %v4109 = vld [vmem:[%s7 + $0x64] sm:$0xf]
  %v4110 = vld [vmem:[%s7 + $0x68] sm:$0xf]
  %v4111 = vld [vmem:[%s7 + $0x6c] sm:$0xf]
  %v4112 = vld [vmem:[%s7 + $0x70] sm:$0xf]
  %v4113 = vld [vmem:[%s7 + $0x74] sm:$0xf]
  %v4114 = vld [vmem:[%s7 + $0x78] sm:$0xf]
  %v4115 = vld [vmem:[%s7 + $0x7c] sm:$0xf]
  %v4116 = vld [vmem:[%s7 + $0x80] sm:$0xf]
  %v4117 = vld [vmem:[%s7 + $0x84] sm:$0xf]
  %v4118 = vld [vmem:[%s7 + $0x88] sm:$0xf]
  %v4119 = vld [vmem:[%s7 + $0x8c] sm:$0xf]
  %v4120 = vld [vmem:[%s7 + $0x90] sm:$0xf]
  %v4121 = vld [vmem:[%s7 + $0x94] sm:$0xf]
  %v4122 = vld [vmem:[%s7 + $0x98] sm:$0xf]
  %v4123 = vld [vmem:[%s7 + $0x9c] sm:$0xf]
  %v4124 = vld [vmem:[%s8] sm:$0x1]
  %v4126 = vlaneseq
  %v4127 = vshrl.u32 %v4126, 7
  %v4128 = vsub.s32 0, %v4127
  %v4129 = vrot.slane %v4124, %v4128
  %v4171 = vunpack.c.l.b16 %v4084
  %v4172 = vunpack.c.l.b16 %v4085
  %v4173 = vunpack.c.l.b16 %v4086
  %v4174 = vunpack.c.l.b16 %v4087
  %v4175 = vunpack.c.l.b16 %v4088
  %v4176 = vunpack.c.l.b16 %v4089
  %v4177 = vunpack.c.l.b16 %v4090
  %v4178 = vunpack.c.l.b16 %v4091
  %v4179 = vunpack.c.l.b16 %v4092
  %v4180 = vunpack.c.l.b16 %v4093
  %v4181 = vunpack.c.l.b16 %v4094
  %v4182 = vunpack.c.l.b16 %v4095
  %v4183 = vunpack.c.l.b16 %v4096
  %v4184 = vunpack.c.l.b16 %v4097
  %v4185 = vunpack.c.l.b16 %v4098
  %v4186 = vunpack.c.l.b16 %v4099
  %v4187 = vunpack.c.l.b16 %v4100
  %v4188 = vunpack.c.l.b16 %v4101
  %v4189 = vunpack.c.l.b16 %v4102
  %v4190 = vunpack.c.l.b16 %v4103
  %v4191 = vunpack.c.l.b16 %v4104
  %v4192 = vunpack.c.l.b16 %v4105
  %v4193 = vunpack.c.l.b16 %v4106
  %v4194 = vunpack.c.l.b16 %v4107
  %v4195 = vunpack.c.l.b16 %v4108
  %v4196 = vunpack.c.l.b16 %v4109
  %v4197 = vunpack.c.l.b16 %v4110
  %v4198 = vunpack.c.l.b16 %v4111
  %v4199 = vunpack.c.l.b16 %v4112
  %v4200 = vunpack.c.l.b16 %v4113
  %v4201 = vunpack.c.l.b16 %v4114
  %v4202 = vunpack.c.l.b16 %v4115
  %v4203 = vunpack.c.l.b16 %v4116
  %v4204 = vunpack.c.l.b16 %v4117
  %v4205 = vunpack.c.l.b16 %v4118
  %v4206 = vunpack.c.l.b16 %v4119
  %v4207 = vunpack.c.l.b16 %v4120
  %v4208 = vunpack.c.l.b16 %v4121
  %v4209 = vunpack.c.l.b16 %v4122
  %v4210 = vunpack.c.l.b16 %v4123
  %v4211 = vpack.c.b16 %v4172, %v4171
  %v4212 = vpack.c.b16 %v4174, %v4173
  %v4213 = vpack.c.b16 %v4176, %v4175
  %v4214 = vpack.c.b16 %v4178, %v4177
  %v4215 = vpack.c.b16 %v4180, %v4179
  %v4216 = vpack.c.b16 %v4182, %v4181
  %v4217 = vpack.c.b16 %v4184, %v4183
  %v4218 = vpack.c.b16 %v4186, %v4185
  %v4219 = vpack.c.b16 %v4188, %v4187
  %v4220 = vpack.c.b16 %v4190, %v4189
  %v4221 = vpack.c.b16 %v4192, %v4191
  %v4222 = vpack.c.b16 %v4194, %v4193
  %v4223 = vpack.c.b16 %v4196, %v4195
  %v4224 = vpack.c.b16 %v4198, %v4197
  %v4225 = vpack.c.b16 %v4200, %v4199
  %v4226 = vpack.c.b16 %v4202, %v4201
  %v4227 = vpack.c.b16 %v4204, %v4203
  %v4228 = vpack.c.b16 %v4206, %v4205
  %v4229 = vpack.c.b16 %v4208, %v4207
  %v4230 = vpack.c.b16 %v4210, %v4209
  %vm4251 = vcmask 523264
  %v4253 = vsel %vm4251, %v4083, 0
  %4255 = vmatprep.subr.bf16.mxu0 0
  %4256 = vmatpush1.bf16.msra.mxu0 %v4211
  %4257 = vmatprep.subr.bf16.mxu0 0
  %4258 = vmatpush1.bf16.msra.mxu0 %v4212
  %4259 = vmatprep.subr.bf16.mxu0 0
  %4260 = vmatpush1.bf16.msra.mxu0 %v4213
  %4261 = vmatprep.subr.bf16.mxu0 0
  %4262 = vmatpush1.bf16.msra.mxu0 %v4214
  %4263 = vmatprep.subr.bf16.mxu0 0
  %4264 = vmatpush1.bf16.msra.mxu0 %v4215
  %4265 = vmatprep.subr.bf16.mxu0 0
  %4266 = vmatpush1.bf16.msra.mxu0 %v4216
  %4267 = vmatprep.subr.bf16.mxu0 0
  %4268 = vmatpush1.bf16.msra.mxu0 %v4217
  %4269 = vmatprep.subr.bf16.mxu0 0
  %4270 = vmatpush1.bf16.msra.mxu0 %v4218
  %4271 = vmatprep.subr.bf16.mxu0 0
  %4272 = vmatpush1.bf16.msra.mxu0 %v4219
  %4273 = vmatprep.subr.bf16.mxu0 0
  %4274 = vmatpush1.bf16.msra.mxu0 %v4220
  %4275 = vmatprep.subr.bf16.mxu0 0
  %4276 = vmatpush1.bf16.msra.mxu0 %v4221
  %4277 = vmatprep.subr.bf16.mxu0 0
  %4278 = vmatpush1.bf16.msra.mxu0 %v4222
  %4279 = vmatprep.subr.bf16.mxu0 0
  %4280 = vmatpush1.bf16.msra.mxu0 %v4223
  %4281 = vmatprep.subr.bf16.mxu0 0
  %4282 = vmatpush1.bf16.msra.mxu0 %v4224
  %4283 = vmatprep.subr.bf16.mxu0 0
  %4284 = vmatpush1.bf16.msra.mxu0 %v4225
  %4285 = vmatprep.subr.bf16.mxu0 0
  %4286 = vmatpush1.bf16.msra.mxu0 %v4226
  %4287 = vmatprep.mubr.bf16.mxu0 %v4082
  %4288 = vmatmul.mubr.bf16.gmra.mrb[0].mxu0 %v4081
  %v4289 = vpop.f32.mrb[0].mxu0
  %v4290 = vadd.f32 %v4129, %v4289
  %v4291 = vpop.f32.mrb[0].mxu0
  %v4292 = vpop.f32.mrb[0].mxu0
  %v4293 = vpop.f32.mrb[0].mxu0
  %4294 = vdwg.mxu0
  %4295 = vmatprep.subr.bf16.mxu0 0
  %4296 = vmatpush1.bf16.msra.mxu0 %v4227
  %4297 = vmatprep.subr.bf16.mxu0 0
  %4298 = vmatpush1.bf16.msra.mxu0 %v4228
  %4299 = vmatprep.subr.bf16.mxu0 0
  %4300 = vmatpush1.bf16.msra.mxu0 %v4229
  %4301 = vmatprep.subr.bf16.mxu0 0
  %4302 = vmatpush1.bf16.msra.mxu0 %v4230
  %4303 = vmatprep.subr.bf16.mxu0 0
  %4304 = vmatpush1.bf16.msra.mxu0 0
  %4305 = vmatprep.subr.bf16.mxu0 0
  %4306 = vmatpush1.bf16.msra.mxu0 0
  %4307 = vmatprep.subr.bf16.mxu0 0
  %4308 = vmatpush1.bf16.msra.mxu0 0
  %4309 = vmatprep.subr.bf16.mxu0 0
  %4310 = vmatpush1.bf16.msra.mxu0 0
  %4311 = vmatprep.subr.bf16.mxu0 0
  %4312 = vmatpush1.bf16.msra.mxu0 0
  %4313 = vmatprep.subr.bf16.mxu0 0
  %4314 = vmatpush1.bf16.msra.mxu0 0
  %4315 = vmatprep.subr.bf16.mxu0 0
  %4316 = vmatpush1.bf16.msra.mxu0 0
  %4317 = vmatprep.subr.bf16.mxu0 0
  %4318 = vmatpush1.bf16.msra.mxu0 0
  %4319 = vmatprep.subr.bf16.mxu0 0
  %4320 = vmatpush1.bf16.msra.mxu0 0
  %4321 = vmatprep.subr.bf16.mxu0 0
  %4322 = vmatpush1.bf16.msra.mxu0 0
  %4323 = vmatprep.subr.bf16.mxu0 0
  %4324 = vmatpush1.bf16.msra.mxu0 0
  %4325 = vmatprep.subr.bf16.mxu0 0
  %4326 = vmatpush1.bf16.msra.mxu0 0
  %4327 = vmatprep.mubr.bf16.mxu0 0
  %4328 = vmatmul.mubr.bf16.gmra.mrb[0].mxu0 %v4253
  %v4329 = vpop.f32.mrb[0].mxu0
  %v4330 = vadd.f32 %v4290, %v4329
  %v4331 = vpop.f32.mrb[0].mxu0
  %v4332 = vpop.f32.mrb[0].mxu0
  %v4333 = vpop.f32.mrb[0].mxu0
  %4334 = vdwg.mxu0
  %v4335 = vmax.f32 %v4330, 0.0
  %v4336 = vpack.c.bf16 %v4335, %v4335
  %v4337 = vld [vmem:[%s9] sm:$0xf]
  %v4338 = vld [vmem:[%s9 + $0x4] sm:$0xf]
  %v4339 = vld [vmem:[%s9 + $0x8] sm:$0xf]
  %v4340 = vld [vmem:[%s9 + $0xc] sm:$0xf]
  %v4341 = vld [vmem:[%s9 + $0x10] sm:$0xf]
  %v4342 = vld [vmem:[%s9 + $0x14] sm:$0xf]
  %v4343 = vld [vmem:[%s9 + $0x18] sm:$0x1]
  %v4344 = vld [vmem:[%s10] sm:$0x1]
  %v4346 = vlaneseq
  %v4347 = vshrl.u32 %v4346, 7
  %v4348 = vsub.s32 0, %v4347
  %v4349 = vrot.slane %v4344, %v4348
  %v4358 = vunpack.c.l.b16 %v4337
  %v4359 = vunpack.c.l.b16 %v4338
  %v4360 = vunpack.c.l.b16 %v4339
  %v4361 = vunpack.c.l.b16 %v4340
  %v4362 = vunpack.c.l.b16 %v4341
  %v4363 = vunpack.c.l.b16 %v4342
  %v4364 = vunpack.c.l.b16 %v4343
  %v4365 = vpack.c.b16 %v4359, %v4358
  %v4366 = vpack.c.b16 %v4361, %v4360
  %v4367 = vpack.c.b16 %v4363, %v4362
  %v4368 = vpack.c.b16 %v4364, %v4364
  %vm4372 = vcmask 408576
  %v4374 = vsel %vm4372, %v4336, 0
  %vm4376 = vcmask 1040384
  %v4378 = vsel %vm4376, %v4368, 0
  %4380 = vmatprep.subr.bf16.mxu0 0
  %4381 = vmatpush1.bf16.msra.mxu0 %v4365
  %4382 = vmatprep.subr.bf16.mxu0 0
  %4383 = vmatpush1.bf16.msra.mxu0 %v4366
  %4384 = vmatprep.subr.bf16.mxu0 0
  %4385 = vmatpush1.bf16.msra.mxu0 %v4367
  %4386 = vmatprep.subr.bf16.mxu0 0
  %4387 = vmatpush1.bf16.msra.mxu0 %v4378
  %4388 = vmatprep.subr.bf16.mxu0 0
  %4389 = vmatpush1.bf16.msra.mxu0 0
  %4390 = vmatprep.subr.bf16.mxu0 0
  %4391 = vmatpush1.bf16.msra.mxu0 0
  %4392 = vmatprep.subr.bf16.mxu0 0
  %4393 = vmatpush1.bf16.msra.mxu0 0
  %4394 = vmatprep.subr.bf16.mxu0 0
  %4395 = vmatpush1.bf16.msra.mxu0 0
  %4396 = vmatprep.subr.bf16.mxu0 0
  %4397 = vmatpush1.bf16.msra.mxu0 0
  %4398 = vmatprep.subr.bf16.mxu0 0
  %4399 = vmatpush1.bf16.msra.mxu0 0
  %4400 = vmatprep.subr.bf16.mxu0 0
  %4401 = vmatpush1.bf16.msra.mxu0 0
  %4402 = vmatprep.subr.bf16.mxu0 0
  %4403 = vmatpush1.bf16.msra.mxu0 0
  %4404 = vmatprep.subr.bf16.mxu0 0
  %4405 = vmatpush1.bf16.msra.mxu0 0
  %4406 = vmatprep.subr.bf16.mxu0 0
  %4407 = vmatpush1.bf16.msra.mxu0 0
  %4408 = vmatprep.subr.bf16.mxu0 0
  %4409 = vmatpush1.bf16.msra.mxu0 0
  %4410 = vmatprep.subr.bf16.mxu0 0
  %4411 = vmatpush1.bf16.msra.mxu0 0
  %4412 = vmatprep.mubr.bf16.mxu0 0
  %4413 = vmatmul.mubr.bf16.gmra.mrb[0].mxu0 %v4374
  %v4414 = vpop.f32.mrb[0].mxu0
  %v4415 = vadd.f32 %v4349, %v4414
  %v4416 = vpop.f32.mrb[0].mxu0
  %v4417 = vpop.f32.mrb[0].mxu0
  %v4418 = vpop.f32.mrb[0].mxu0
  %4419 = vdwg.mxu0
  %vm4420 = vcmask 80896
  %v4421 = vsel %vm4420, %v4415, -inf
  %4422 = vmax.xlane.f32.xlu0 %v4421
  %v4423 = vpop.xlane.xlu0 %4422
  %v4424 = vsub.f32 %v4415, %v4423
  %v4425 = vmul.f32 %v4424, 1.442695
  %v4426 = vpow.pop %v4425
  %v4427 = vsel %vm4420, %v4426, 0.0
  %4428 = vadd.xlane.f32.xlu0 %v4427
  %v4429 = vpop.xlane.xlu0 %4428
  %v4430 = vlog2.pop %v4429
  %v4431 = vmul.f32 %v4430, 0.6931472
  %v4432 = vsub.f32 %v4424, %v4431
  %4433 = vst.msk [vmem:[%s11] sm:$0xff] %vm4420, %v4432
  // Predicated region
  $region46: #{net_forward.1} parent=0 // pred_check
    _
  $region47: #{net_forward.1} parent=0 // pred_check_branch
    %4435 = sbr.rel (0) target = $region49
  $region48: #{net_forward.1} parent=0 // pred_region
    _
  $region49: #{net_forward.1} parent=0 // pred_fallthru
    _
  // Predicated region
  $region50: #{net_forward.1} parent=0 // pred_check
    _
  $region51: #{net_forward.1} parent=0 // pred_check_branch
    %4437 = sbr.rel (0) target = $region53
  $region52: #{net_forward.1} parent=0 // pred_region
    _
  $region53: #{net_forward.1} parent=0 // pred_fallthru
    _

</llo_original>
